<compile_context>
chip_gen: v7x
topology: tpu7x:2x2x1
jax: 0.10.0
libtpu: 0.0.40
codegen_flags: <defaults>
</compile_context>

<pallas_src>
import functools
import math

import jax
import jax.numpy as jnp
from jax.experimental import pallas as pl
from jax.experimental.pallas import tpu as pltpu

# ---- small synthetic ViT config (same structure as timm ViT, tiny dims) ----
BATCH = 2
IN_CHANS = 3
IMG = 16
PATCH = 4
EMBED_DIM = 32
NUM_HEADS = 4
HEAD_DIM = EMBED_DIM // NUM_HEADS
DEPTH = 2
MLP_HIDDEN = 4 * EMBED_DIM
NUM_PATCHES = (IMG // PATCH) ** 2
SEQ = NUM_PATCHES + 1          # +1 cls token
PATCH_DIM = IN_CHANS * PATCH * PATCH
LN_EPS = 1e-6
_SQRT1_2 = 1.0 / math.sqrt(2.0)


# ------------------------------ kernel helpers -------------------------------

def _layernorm(x, g, b):
    mean = jnp.mean(x, axis=-1, keepdims=True)
    var = jnp.mean(jnp.square(x - mean), axis=-1, keepdims=True)
    return (x - mean) * jax.lax.rsqrt(var + LN_EPS) * g + b


def _gelu(x):  # exact (erf-based) GELU, same as torch.nn.GELU()
    return 0.5 * x * (1.0 + jax.lax.erf(x * _SQRT1_2))


def _bf16(x):
    return x.astype(jnp.bfloat16)


# ------------------------------- fused kernel --------------------------------

def _vit_kernel(patches_ref, patch_w_ref, embed_bias_ref,
                ln1_g_ref, ln1_b_ref, qkv_w_ref, qkv_b_ref,
                proj_w_ref, proj_b_ref, ln2_g_ref, ln2_b_ref,
                fc1_w_ref, fc1_b_ref, fc2_w_ref, fc2_b_ref,
                norm_g_ref, norm_b_ref, out_ref, *, nb):
    """Full forward_features for `nb` batch elements, entirely VMEM-resident.

    nb == BATCH on single-TC chips (rows stacked to nb*SEQ for all dense
    matmuls); nb == 1 on v7x where the (B,) grid is split across TensorCores.
    """
    # patch embed + cls token + pos embed:
    #   patch row 0 (per batch element) is zero; embed_bias row 0 = cls+pos[0],
    #   rows 1.. = conv bias + pos[i]  -> one matmul + one add.
    if nb == 1:
        p2d = patches_ref[0]                       # (SEQ, PATCH_DIM)
    else:
        p2d = patches_ref[...]                     # (nb*SEQ, PATCH_DIM)
    h = jnp.dot(_bf16(p2d), patch_w_ref[...],
                preferred_element_type=jnp.float32) + embed_bias_ref[...]

    for d in range(DEPTH):                         # static unroll over blocks
        # ---------- x = x + proj(attn(norm1(x))) ----------
        y = _layernorm(h, ln1_g_ref[d], ln1_b_ref[d])
        qkv = jnp.dot(_bf16(y), qkv_w_ref[d],
                      preferred_element_type=jnp.float32) + qkv_b_ref[d]

        attn_rows = []
        for b in range(nb):                        # static per-batch row slices
            r0 = b * SEQ
            head_outs = []
            for n in range(NUM_HEADS):             # static lane slices
                lo = n * HEAD_DIM
                q = qkv[r0:r0 + SEQ, lo:lo + HEAD_DIM]        # scale baked in
                k = qkv[r0:r0 + SEQ, EMBED_DIM + lo:EMBED_DIM + lo + HEAD_DIM]
                v = qkv[r0:r0 + SEQ,
                        2 * EMBED_DIM + lo:2 * EMBED_DIM + lo + HEAD_DIM]
                # q @ k^T without materializing a transpose.
                s = jax.lax.dot_general(
                    _bf16(q), _bf16(k),
                    dimension_numbers=(((1,), (1,)), ((), ())),
                    preferred_element_type=jnp.float32)
                s = s - jnp.max(s, axis=-1, keepdims=True)
                p = jnp.exp(s)
                p = p * pl.reciprocal(jnp.sum(p, axis=-1, keepdims=True),
                                      approx=True)
                head_outs.append(jnp.dot(_bf16(p), _bf16(v),
                                         preferred_element_type=jnp.float32))
            # concat heads along lanes -> single fused proj matmul below
            attn_rows.append(jnp.concatenate(head_outs, axis=-1))
        attn = attn_rows[0] if nb == 1 else jnp.concatenate(attn_rows, axis=0)

        h = h + proj_b_ref[d] + jnp.dot(_bf16(attn), proj_w_ref[d],
                                        preferred_element_type=jnp.float32)

        # ---------- x = x + mlp(norm2(x)) ----------
        y = _layernorm(h, ln2_g_ref[d], ln2_b_ref[d])
        y = _gelu(jnp.dot(_bf16(y), fc1_w_ref[d],
                          preferred_element_type=jnp.float32) + fc1_b_ref[d])
        h = h + jnp.dot(_bf16(y), fc2_w_ref[d],
                        preferred_element_type=jnp.float32) + fc2_b_ref[d]

    # final norm; cls rows stripped here (no wrapper-side slice needed)
    hn = _layernorm(h, norm_g_ref[...], norm_b_ref[...]).astype(out_ref.dtype)
    for b in range(nb):
        out_ref[b] = hn[b * SEQ + 1:(b + 1) * SEQ, :]


# ------------------------------ parameters ----------------------------------

def init_params(key):
    state = {"key": key}

    def normal(shape, std=0.02):
        state["key"], sub = jax.random.split(state["key"])
        return std * jax.random.normal(sub, shape, jnp.float32)

    params = {
        "patch_w": normal((PATCH_DIM, EMBED_DIM)),
        "patch_b": jnp.zeros((EMBED_DIM,), jnp.float32),
        "cls_token": normal((1, 1, EMBED_DIM)),
        "pos_embed": normal((1, SEQ, EMBED_DIM)),
        "norm_g": jnp.ones((EMBED_DIM,), jnp.float32),
        "norm_b": jnp.zeros((EMBED_DIM,), jnp.float32),
        "blocks": [],
    }
    for _ in range(DEPTH):
        params["blocks"].append({
            "ln1_g": jnp.ones((EMBED_DIM,), jnp.float32),
            "ln1_b": jnp.zeros((EMBED_DIM,), jnp.float32),
            "qkv_w": normal((EMBED_DIM, 3 * EMBED_DIM)),
            "qkv_b": jnp.zeros((3 * EMBED_DIM,), jnp.float32),
            "proj_w": normal((EMBED_DIM, EMBED_DIM)),
            "proj_b": jnp.zeros((EMBED_DIM,), jnp.float32),
            "ln2_g": jnp.ones((EMBED_DIM,), jnp.float32),
            "ln2_b": jnp.zeros((EMBED_DIM,), jnp.float32),
            "fc1_w": normal((EMBED_DIM, MLP_HIDDEN)),
            "fc1_b": jnp.zeros((MLP_HIDDEN,), jnp.float32),
            "fc2_w": normal((MLP_HIDDEN, EMBED_DIM)),
            "fc2_b": jnp.zeros((EMBED_DIM,), jnp.float32),
        })
    return params


def batch_per_step():
    """v7x (2 TensorCores/chip): 1 batch element per grid step so the
    'parallel' grid axis spreads the batch across cores.  Single-TC chips
    (v5e/v6e): fold the whole batch into one grid step (taller matmuls)."""
    try:
        kind = jax.devices()[0].device_kind.lower()
    except Exception:
        kind = ""
    return 1 if ("v7" in kind or "7x" in kind) else BATCH


def pack_params(params, nb):
    """One-time packing (hoisted out of the per-call path): stacks per-block
    weights, bakes the attention scale into q, folds cls+pos+conv-bias into a
    single additive bias, casts matmul operands to bf16."""
    stack = lambda name: jnp.stack([blk[name] for blk in params["blocks"]])
    scale = HEAD_DIM ** -0.5

    embed_bias = params["pos_embed"].reshape(SEQ, EMBED_DIM) + jnp.concatenate(
        [params["cls_token"].reshape(1, EMBED_DIM),
         jnp.broadcast_to(params["patch_b"].reshape(1, EMBED_DIM),
                          (NUM_PATCHES, EMBED_DIM))], axis=0)
    embed_bias = jnp.tile(embed_bias, (nb, 1))                    # (nb*SEQ, D)

    qkv_w = stack("qkv_w").at[:, :, :EMBED_DIM].multiply(scale).astype(jnp.bfloat16)
    qkv_b = stack("qkv_b").at[:, :EMBED_DIM].multiply(scale).reshape(
        DEPTH, 1, 3 * EMBED_DIM)

    packed = (
        params["patch_w"].astype(jnp.bfloat16),                   # (PATCH_DIM, D)
        embed_bias,                                               # (nb*SEQ, D)
        stack("ln1_g").reshape(DEPTH, 1, EMBED_DIM),
        stack("ln1_b").reshape(DEPTH, 1, EMBED_DIM),
        qkv_w,                                                    # (DEPTH, D, 3D) bf16
        qkv_b,                                                    # (DEPTH, 1, 3D)
        stack("proj_w").astype(jnp.bfloat16),                     # (DEPTH, D, D) bf16
        stack("proj_b").reshape(DEPTH, 1, EMBED_DIM),
        stack("ln2_g").reshape(DEPTH, 1, EMBED_DIM),
        stack("ln2_b").reshape(DEPTH, 1, EMBED_DIM),
        stack("fc1_w").astype(jnp.bfloat16),                      # (DEPTH, D, 4D) bf16
        stack("fc1_b").reshape(DEPTH, 1, MLP_HIDDEN),
        stack("fc2_w").astype(jnp.bfloat16),                      # (DEPTH, 4D, D) bf16
        stack("fc2_b").reshape(DEPTH, 1, EMBED_DIM),
        params["norm_g"].reshape(1, EMBED_DIM),
        params["norm_b"].reshape(1, EMBED_DIM),
    )
    return jax.tree.map(jnp.asarray, packed)


# ------------------------------ forward pass ---------------------------------

def _const_spec(shape):
    nd = len(shape)
    if nd == 2:
        return pl.BlockSpec(shape, lambda b: (0, 0))
    return pl.BlockSpec(shape, lambda b: (0, 0, 0))


def vit_embedder_forward(packed, x, *, nb):
    B, C, H, W = x.shape
    gh, gw = H // PATCH, W // PATCH

    # Patch unfold: Conv2d(kernel=stride=PATCH) == per-patch matmul.
    # TODO(synk): the im2col gather stays as one XLA reshape/transpose feeding
    # the kernel; a strided 4-pixel gather is not expressible as a rectangular
    # BlockSpec, and at these sizes it is negligible next to the fused kernel.
    patches = x.reshape(B, C, gh, PATCH, gw, PATCH)
    patches = patches.transpose(0, 2, 4, 1, 3, 5).reshape(B, gh * gw, PATCH_DIM)
    # row 0 reserved for the cls token (zero patch; cls value folded into bias)
    patches = jnp.pad(patches, ((0, 0), (1, 0), (0, 0)))

    if nb == 1:
        # one batch element per grid step (v7x: one per TensorCore)
        patches_spec = pl.BlockSpec((1, SEQ, PATCH_DIM), lambda b: (b, 0, 0))
    else:
        # fold whole batch into a single grid step: stacked (nb*SEQ, PATCH_DIM)
        patches = patches.reshape(B * SEQ, PATCH_DIM)
        patches_spec = pl.BlockSpec((nb * SEQ, PATCH_DIM), lambda b: (b, 0))

    in_specs = [patches_spec] + [_const_spec(a.shape) for a in packed]

    out = pl.pallas_call(
        functools.partial(_vit_kernel, nb=nb),
        out_shape=jax.ShapeDtypeStruct((B, NUM_PATCHES, EMBED_DIM), jnp.float32),
        grid=(B // nb,),
        in_specs=in_specs,
        out_specs=pl.BlockSpec((nb, NUM_PATCHES, EMBED_DIM), lambda b: (b, 0, 0)),
        compiler_params=pltpu.CompilerParams(
            dimension_semantics=("parallel",)),
    )(patches, *packed)

    # cls token already dropped inside the kernel
    return out


if __name__ == "__main__":
    # TODO(synk): pretrained timm weights are not loadable here; parameters are
    # deterministic synthetic tensors with the module's shapes.
    root = jax.random.PRNGKey(0)
    pkey, xkey = jax.random.split(root)
    params = init_params(pkey)
    x = jax.random.normal(xkey, (BATCH, IN_CHANS, IMG, IMG), jnp.float32)

    nb = batch_per_step()                       # chip-aware batch folding
    packed = jax.block_until_ready(pack_params(params, nb))   # packed once

    fwd = jax.jit(functools.partial(vit_embedder_forward, nb=nb))
    out = jax.block_until_ready(fwd(packed, x))

    assert out.shape == (BATCH, NUM_PATCHES, EMBED_DIM), out.shape
    assert bool(jnp.all(jnp.isfinite(out)))
    print("KERNEL_OK")
</pallas_src>

<mosaic_0001>
module attributes {stable_mosaic.version = 11 : i64} {
  func.func @_vit_kernel(%arg0: i32, %arg1: memref<34x48xf32, #tpu.memory_space<vmem>>, %arg2: memref<48x32xbf16, #tpu.memory_space<vmem>>, %arg3: memref<34x32xf32, #tpu.memory_space<vmem>>, %arg4: memref<2x1x32xf32, #tpu.memory_space<vmem>>, %arg5: memref<2x1x32xf32, #tpu.memory_space<vmem>>, %arg6: memref<2x32x96xbf16, #tpu.memory_space<vmem>>, %arg7: memref<2x1x96xf32, #tpu.memory_space<vmem>>, %arg8: memref<2x32x32xbf16, #tpu.memory_space<vmem>>, %arg9: memref<2x1x32xf32, #tpu.memory_space<vmem>>, %arg10: memref<2x1x32xf32, #tpu.memory_space<vmem>>, %arg11: memref<2x1x32xf32, #tpu.memory_space<vmem>>, %arg12: memref<2x32x128xbf16, #tpu.memory_space<vmem>>, %arg13: memref<2x1x128xf32, #tpu.memory_space<vmem>>, %arg14: memref<2x128x32xbf16, #tpu.memory_space<vmem>>, %arg15: memref<2x1x32xf32, #tpu.memory_space<vmem>>, %arg16: memref<1x32xf32, #tpu.memory_space<vmem>>, %arg17: memref<1x32xf32, #tpu.memory_space<vmem>>, %arg18: memref<2x16x32xf32, #tpu.memory_space<vmem>>) attributes {dimension_semantics = [#tpu.dimension_semantics<parallel>], iteration_bounds = array<i64: 1>, scalar_prefetch = 0 : i64, scratch_operands = 0 : i64, tpu.core_type = #tpu.core_type<tc>, window_params = [{transform_indices = @transform_0, window_bounds = array<i64: 34, 48>}, {pipeline_mode = #tpu.pipeline_mode<synchronous>, transform_indices = @transform_1, window_bounds = array<i64: 48, 32>}, {pipeline_mode = #tpu.pipeline_mode<synchronous>, transform_indices = @transform_2, window_bounds = array<i64: 34, 32>}, {pipeline_mode = #tpu.pipeline_mode<synchronous>, transform_indices = @transform_3, window_bounds = array<i64: 2, 1, 32>}, {pipeline_mode = #tpu.pipeline_mode<synchronous>, transform_indices = @transform_4, window_bounds = array<i64: 2, 1, 32>}, {pipeline_mode = #tpu.pipeline_mode<synchronous>, transform_indices = @transform_5, window_bounds = array<i64: 2, 32, 96>}, {pipeline_mode = #tpu.pipeline_mode<synchronous>, transform_indices = @transform_6, window_bounds = array<i64: 2, 1, 96>}, {pipeline_mode = #tpu.pipeline_mode<synchronous>, transform_indices = @transform_7, window_bounds = array<i64: 2, 32, 32>}, {pipeline_mode = #tpu.pipeline_mode<synchronous>, transform_indices = @transform_8, window_bounds = array<i64: 2, 1, 32>}, {pipeline_mode = #tpu.pipeline_mode<synchronous>, transform_indices = @transform_9, window_bounds = array<i64: 2, 1, 32>}, {pipeline_mode = #tpu.pipeline_mode<synchronous>, transform_indices = @transform_10, window_bounds = array<i64: 2, 1, 32>}, {pipeline_mode = #tpu.pipeline_mode<synchronous>, transform_indices = @transform_11, window_bounds = array<i64: 2, 32, 128>}, {pipeline_mode = #tpu.pipeline_mode<synchronous>, transform_indices = @transform_12, window_bounds = array<i64: 2, 1, 128>}, {pipeline_mode = #tpu.pipeline_mode<synchronous>, transform_indices = @transform_13, window_bounds = array<i64: 2, 128, 32>}, {pipeline_mode = #tpu.pipeline_mode<synchronous>, transform_indices = @transform_14, window_bounds = array<i64: 2, 1, 32>}, {pipeline_mode = #tpu.pipeline_mode<synchronous>, transform_indices = @transform_15, window_bounds = array<i64: 1, 32>}, {pipeline_mode = #tpu.pipeline_mode<synchronous>, transform_indices = @transform_16, window_bounds = array<i64: 1, 32>}, {transform_indices = @transform_17, window_bounds = array<i64: 2, 16, 32>}]} {
    %c0 = arith.constant 0 : index
    %c0_0 = arith.constant 0 : index
    %0 = vector.load %arg1[%c0, %c0_0] : memref<34x48xf32, #tpu.memory_space<vmem>>, vector<34x48xf32>
    %1 = arith.truncf %0 : vector<34x48xf32> to vector<34x48xbf16>
    %c0_1 = arith.constant 0 : index
    %c0_2 = arith.constant 0 : index
    %2 = vector.load %arg2[%c0_1, %c0_2] : memref<48x32xbf16, #tpu.memory_space<vmem>>, vector<48x32xbf16>
    %cst = arith.constant dense<0.000000e+00> : vector<34x32xf32>
    %3 = tpu.matmul %1, %2, %cst {dimension_numbers = #tpu.dot_dimension_numbers<[1], [0], [0], [1], [0, 0, 1, 1], [], []>} : vector<34x48xbf16>, vector<48x32xbf16>, vector<34x32xf32> -> vector<34x32xf32>
    %c0_3 = arith.constant 0 : index
    %c0_4 = arith.constant 0 : index
    %4 = vector.load %arg3[%c0_3, %c0_4] : memref<34x32xf32, #tpu.memory_space<vmem>>, vector<34x32xf32>
    %5 = arith.addf %3, %4 : vector<34x32xf32>
    %c0_5 = arith.constant 0 : index
    %c0_6 = arith.constant 0 : index
    %c0_7 = arith.constant 0 : index
    %6 = vector.load %arg4[%c0_5, %c0_6, %c0_7] : memref<2x1x32xf32, #tpu.memory_space<vmem>>, vector<1x1x32xf32>
    %7 = vector.shape_cast %6 : vector<1x1x32xf32> to vector<1x32xf32>
    %c0_8 = arith.constant 0 : index
    %c0_9 = arith.constant 0 : index
    %c0_10 = arith.constant 0 : index
    %8 = vector.load %arg5[%c0_8, %c0_9, %c0_10] : memref<2x1x32xf32, #tpu.memory_space<vmem>>, vector<1x1x32xf32>
    %9 = vector.shape_cast %8 : vector<1x1x32xf32> to vector<1x32xf32>
    %cst_11 = arith.constant dense<0.000000e+00> : vector<34xf32>
    %10 = vector.multi_reduction <add>, %5, %cst_11 [1] : vector<34x32xf32> to vector<34xf32>
    %11 = vector.shape_cast %10 : vector<34xf32> to vector<34x1xf32>
    %cst_12 = arith.constant 3.200000e+01 : f32
    %12 = vector.broadcast %cst_12 : f32 to vector<34x1xf32>
    %13 = arith.divf %11, %12 : vector<34x1xf32>
    %14 = vector.broadcast %13 : vector<34x1xf32> to vector<34x32xf32>
    %15 = arith.subf %5, %14 : vector<34x32xf32>
    %16 = arith.mulf %15, %15 : vector<34x32xf32>
    %cst_13 = arith.constant dense<0.000000e+00> : vector<34xf32>
    %17 = vector.multi_reduction <add>, %16, %cst_13 [1] : vector<34x32xf32> to vector<34xf32>
    %18 = vector.shape_cast %17 : vector<34xf32> to vector<34x1xf32>
    %cst_14 = arith.constant 3.200000e+01 : f32
    %19 = vector.broadcast %cst_14 : f32 to vector<34x1xf32>
    %20 = arith.divf %18, %19 : vector<34x1xf32>
    %21 = vector.broadcast %13 : vector<34x1xf32> to vector<34x32xf32>
    %22 = arith.subf %5, %21 : vector<34x32xf32>
    %cst_15 = arith.constant 9.99999997E-7 : f32
    %23 = vector.broadcast %cst_15 : f32 to vector<34x1xf32>
    %24 = arith.addf %20, %23 : vector<34x1xf32>
    %25 = math.rsqrt %24 : vector<34x1xf32>
    %26 = vector.broadcast %25 : vector<34x1xf32> to vector<34x32xf32>
    %27 = arith.mulf %22, %26 : vector<34x32xf32>
    %28 = vector.broadcast %7 : vector<1x32xf32> to vector<34x32xf32>
    %29 = arith.mulf %27, %28 : vector<34x32xf32>
    %30 = vector.broadcast %9 : vector<1x32xf32> to vector<34x32xf32>
    %31 = arith.addf %29, %30 : vector<34x32xf32>
    %32 = arith.truncf %31 : vector<34x32xf32> to vector<34x32xbf16>
    %c0_16 = arith.constant 0 : index
    %c0_17 = arith.constant 0 : index
    %c0_18 = arith.constant 0 : index
    %33 = vector.load %arg6[%c0_16, %c0_17, %c0_18] : memref<2x32x96xbf16, #tpu.memory_space<vmem>>, vector<1x32x96xbf16>
    %34 = vector.shape_cast %33 : vector<1x32x96xbf16> to vector<32x96xbf16>
    %cst_19 = arith.constant dense<0.000000e+00> : vector<34x96xf32>
    %35 = tpu.matmul %32, %34, %cst_19 {dimension_numbers = #tpu.dot_dimension_numbers<[1], [0], [0], [1], [0, 0, 1, 1], [], []>} : vector<34x32xbf16>, vector<32x96xbf16>, vector<34x96xf32> -> vector<34x96xf32>
    %c0_20 = arith.constant 0 : index
    %c0_21 = arith.constant 0 : index
    %c0_22 = arith.constant 0 : index
    %36 = vector.load %arg7[%c0_20, %c0_21, %c0_22] : memref<2x1x96xf32, #tpu.memory_space<vmem>>, vector<1x1x96xf32>
    %37 = vector.shape_cast %36 : vector<1x1x96xf32> to vector<1x96xf32>
    %38 = vector.broadcast %37 : vector<1x96xf32> to vector<34x96xf32>
    %39 = arith.addf %35, %38 : vector<34x96xf32>
    %40 = vector.extract_strided_slice %39 {offsets = [0, 0], sizes = [17, 8], strides = [1, 1]} : vector<34x96xf32> to vector<17x8xf32>
    %41 = vector.extract_strided_slice %39 {offsets = [0, 32], sizes = [17, 8], strides = [1, 1]} : vector<34x96xf32> to vector<17x8xf32>
    %42 = vector.extract_strided_slice %39 {offsets = [0, 64], sizes = [17, 8], strides = [1, 1]} : vector<34x96xf32> to vector<17x8xf32>
    %43 = arith.truncf %40 : vector<17x8xf32> to vector<17x8xbf16>
    %44 = arith.truncf %41 : vector<17x8xf32> to vector<17x8xbf16>
    %cst_23 = arith.constant dense<0.000000e+00> : vector<17x17xf32>
    %45 = tpu.matmul %43, %44, %cst_23 {dimension_numbers = #tpu.dot_dimension_numbers<[1], [1], [0], [0], [0, 0, 1, 0], [], []>} : vector<17x8xbf16>, vector<17x8xbf16>, vector<17x17xf32> -> vector<17x17xf32>
    %cst_24 = arith.constant dense<0xFF800000> : vector<17xf32>
    %46 = vector.multi_reduction <maximumf>, %45, %cst_24 [1] : vector<17x17xf32> to vector<17xf32>
    %47 = vector.shape_cast %46 : vector<17xf32> to vector<17x1xf32>
    %48 = vector.broadcast %47 : vector<17x1xf32> to vector<17x17xf32>
    %49 = arith.subf %45, %48 : vector<17x17xf32>
    %50 = math.exp %49 : vector<17x17xf32>
    %cst_25 = arith.constant dense<0.000000e+00> : vector<17xf32>
    %51 = vector.multi_reduction <add>, %50, %cst_25 [1] : vector<17x17xf32> to vector<17xf32>
    %52 = vector.shape_cast %51 : vector<17xf32> to vector<17x1xf32>
    %53 = tpu.reciprocal %52 {approx = true} : vector<17x1xf32> -> vector<17x1xf32>
    %54 = vector.broadcast %53 : vector<17x1xf32> to vector<17x17xf32>
    %55 = arith.mulf %50, %54 : vector<17x17xf32>
    %56 = arith.truncf %55 : vector<17x17xf32> to vector<17x17xbf16>
    %57 = arith.truncf %42 : vector<17x8xf32> to vector<17x8xbf16>
    %cst_26 = arith.constant dense<0.000000e+00> : vector<17x8xf32>
    %58 = tpu.matmul %56, %57, %cst_26 {dimension_numbers = #tpu.dot_dimension_numbers<[1], [0], [0], [1], [0, 0, 1, 1], [], []>} : vector<17x17xbf16>, vector<17x8xbf16>, vector<17x8xf32> -> vector<17x8xf32>
    %59 = vector.extract_strided_slice %39 {offsets = [0, 8], sizes = [17, 8], strides = [1, 1]} : vector<34x96xf32> to vector<17x8xf32>
    %60 = vector.extract_strided_slice %39 {offsets = [0, 40], sizes = [17, 8], strides = [1, 1]} : vector<34x96xf32> to vector<17x8xf32>
    %61 = vector.extract_strided_slice %39 {offsets = [0, 72], sizes = [17, 8], strides = [1, 1]} : vector<34x96xf32> to vector<17x8xf32>
    %62 = arith.truncf %59 : vector<17x8xf32> to vector<17x8xbf16>
    %63 = arith.truncf %60 : vector<17x8xf32> to vector<17x8xbf16>
    %cst_27 = arith.constant dense<0.000000e+00> : vector<17x17xf32>
    %64 = tpu.matmul %62, %63, %cst_27 {dimension_numbers = #tpu.dot_dimension_numbers<[1], [1], [0], [0], [0, 0, 1, 0], [], []>} : vector<17x8xbf16>, vector<17x8xbf16>, vector<17x17xf32> -> vector<17x17xf32>
    %cst_28 = arith.constant dense<0xFF800000> : vector<17xf32>
    %65 = vector.multi_reduction <maximumf>, %64, %cst_28 [1] : vector<17x17xf32> to vector<17xf32>
    %66 = vector.shape_cast %65 : vector<17xf32> to vector<17x1xf32>
    %67 = vector.broadcast %66 : vector<17x1xf32> to vector<17x17xf32>
    %68 = arith.subf %64, %67 : vector<17x17xf32>
    %69 = math.exp %68 : vector<17x17xf32>
    %cst_29 = arith.constant dense<0.000000e+00> : vector<17xf32>
    %70 = vector.multi_reduction <add>, %69, %cst_29 [1] : vector<17x17xf32> to vector<17xf32>
    %71 = vector.shape_cast %70 : vector<17xf32> to vector<17x1xf32>
    %72 = tpu.reciprocal %71 {approx = true} : vector<17x1xf32> -> vector<17x1xf32>
    %73 = vector.broadcast %72 : vector<17x1xf32> to vector<17x17xf32>
    %74 = arith.mulf %69, %73 : vector<17x17xf32>
    %75 = arith.truncf %74 : vector<17x17xf32> to vector<17x17xbf16>
    %76 = arith.truncf %61 : vector<17x8xf32> to vector<17x8xbf16>
    %cst_30 = arith.constant dense<0.000000e+00> : vector<17x8xf32>
    %77 = tpu.matmul %75, %76, %cst_30 {dimension_numbers = #tpu.dot_dimension_numbers<[1], [0], [0], [1], [0, 0, 1, 1], [], []>} : vector<17x17xbf16>, vector<17x8xbf16>, vector<17x8xf32> -> vector<17x8xf32>
    %78 = vector.extract_strided_slice %39 {offsets = [0, 16], sizes = [17, 8], strides = [1, 1]} : vector<34x96xf32> to vector<17x8xf32>
    %79 = vector.extract_strided_slice %39 {offsets = [0, 48], sizes = [17, 8], strides = [1, 1]} : vector<34x96xf32> to vector<17x8xf32>
    %80 = vector.extract_strided_slice %39 {offsets = [0, 80], sizes = [17, 8], strides = [1, 1]} : vector<34x96xf32> to vector<17x8xf32>
    %81 = arith.truncf %78 : vector<17x8xf32> to vector<17x8xbf16>
    %82 = arith.truncf %79 : vector<17x8xf32> to vector<17x8xbf16>
    %cst_31 = arith.constant dense<0.000000e+00> : vector<17x17xf32>
    %83 = tpu.matmul %81, %82, %cst_31 {dimension_numbers = #tpu.dot_dimension_numbers<[1], [1], [0], [0], [0, 0, 1, 0], [], []>} : vector<17x8xbf16>, vector<17x8xbf16>, vector<17x17xf32> -> vector<17x17xf32>
    %cst_32 = arith.constant dense<0xFF800000> : vector<17xf32>
    %84 = vector.multi_reduction <maximumf>, %83, %cst_32 [1] : vector<17x17xf32> to vector<17xf32>
    %85 = vector.shape_cast %84 : vector<17xf32> to vector<17x1xf32>
    %86 = vector.broadcast %85 : vector<17x1xf32> to vector<17x17xf32>
    %87 = arith.subf %83, %86 : vector<17x17xf32>
    %88 = math.exp %87 : vector<17x17xf32>
    %cst_33 = arith.constant dense<0.000000e+00> : vector<17xf32>
    %89 = vector.multi_reduction <add>, %88, %cst_33 [1] : vector<17x17xf32> to vector<17xf32>
    %90 = vector.shape_cast %89 : vector<17xf32> to vector<17x1xf32>
    %91 = tpu.reciprocal %90 {approx = true} : vector<17x1xf32> -> vector<17x1xf32>
    %92 = vector.broadcast %91 : vector<17x1xf32> to vector<17x17xf32>
    %93 = arith.mulf %88, %92 : vector<17x17xf32>
    %94 = arith.truncf %93 : vector<17x17xf32> to vector<17x17xbf16>
    %95 = arith.truncf %80 : vector<17x8xf32> to vector<17x8xbf16>
    %cst_34 = arith.constant dense<0.000000e+00> : vector<17x8xf32>
    %96 = tpu.matmul %94, %95, %cst_34 {dimension_numbers = #tpu.dot_dimension_numbers<[1], [0], [0], [1], [0, 0, 1, 1], [], []>} : vector<17x17xbf16>, vector<17x8xbf16>, vector<17x8xf32> -> vector<17x8xf32>
    %97 = vector.extract_strided_slice %39 {offsets = [0, 24], sizes = [17, 8], strides = [1, 1]} : vector<34x96xf32> to vector<17x8xf32>
    %98 = vector.extract_strided_slice %39 {offsets = [0, 56], sizes = [17, 8], strides = [1, 1]} : vector<34x96xf32> to vector<17x8xf32>
    %99 = vector.extract_strided_slice %39 {offsets = [0, 88], sizes = [17, 8], strides = [1, 1]} : vector<34x96xf32> to vector<17x8xf32>
    %100 = arith.truncf %97 : vector<17x8xf32> to vector<17x8xbf16>
    %101 = arith.truncf %98 : vector<17x8xf32> to vector<17x8xbf16>
    %cst_35 = arith.constant dense<0.000000e+00> : vector<17x17xf32>
    %102 = tpu.matmul %100, %101, %cst_35 {dimension_numbers = #tpu.dot_dimension_numbers<[1], [1], [0], [0], [0, 0, 1, 0], [], []>} : vector<17x8xbf16>, vector<17x8xbf16>, vector<17x17xf32> -> vector<17x17xf32>
    %cst_36 = arith.constant dense<0xFF800000> : vector<17xf32>
    %103 = vector.multi_reduction <maximumf>, %102, %cst_36 [1] : vector<17x17xf32> to vector<17xf32>
    %104 = vector.shape_cast %103 : vector<17xf32> to vector<17x1xf32>
    %105 = vector.broadcast %104 : vector<17x1xf32> to vector<17x17xf32>
    %106 = arith.subf %102, %105 : vector<17x17xf32>
    %107 = math.exp %106 : vector<17x17xf32>
    %cst_37 = arith.constant dense<0.000000e+00> : vector<17xf32>
    %108 = vector.multi_reduction <add>, %107, %cst_37 [1] : vector<17x17xf32> to vector<17xf32>
    %109 = vector.shape_cast %108 : vector<17xf32> to vector<17x1xf32>
    %110 = tpu.reciprocal %109 {approx = true} : vector<17x1xf32> -> vector<17x1xf32>
    %111 = vector.broadcast %110 : vector<17x1xf32> to vector<17x17xf32>
    %112 = arith.mulf %107, %111 : vector<17x17xf32>
    %113 = arith.truncf %112 : vector<17x17xf32> to vector<17x17xbf16>
    %114 = arith.truncf %99 : vector<17x8xf32> to vector<17x8xbf16>
    %cst_38 = arith.constant dense<0.000000e+00> : vector<17x8xf32>
    %115 = tpu.matmul %113, %114, %cst_38 {dimension_numbers = #tpu.dot_dimension_numbers<[1], [0], [0], [1], [0, 0, 1, 1], [], []>} : vector<17x17xbf16>, vector<17x8xbf16>, vector<17x8xf32> -> vector<17x8xf32>
    %116 = tpu.concatenate %58, %77, %96, %115 in 1 : vector<17x8xf32>, vector<17x8xf32>, vector<17x8xf32>, vector<17x8xf32> -> vector<17x32xf32>
    %117 = vector.extract_strided_slice %39 {offsets = [17, 0], sizes = [17, 8], strides = [1, 1]} : vector<34x96xf32> to vector<17x8xf32>
    %118 = vector.extract_strided_slice %39 {offsets = [17, 32], sizes = [17, 8], strides = [1, 1]} : vector<34x96xf32> to vector<17x8xf32>
    %119 = vector.extract_strided_slice %39 {offsets = [17, 64], sizes = [17, 8], strides = [1, 1]} : vector<34x96xf32> to vector<17x8xf32>
    %120 = arith.truncf %117 : vector<17x8xf32> to vector<17x8xbf16>
    %121 = arith.truncf %118 : vector<17x8xf32> to vector<17x8xbf16>
    %cst_39 = arith.constant dense<0.000000e+00> : vector<17x17xf32>
    %122 = tpu.matmul %120, %121, %cst_39 {dimension_numbers = #tpu.dot_dimension_numbers<[1], [1], [0], [0], [0, 0, 1, 0], [], []>} : vector<17x8xbf16>, vector<17x8xbf16>, vector<17x17xf32> -> vector<17x17xf32>
    %cst_40 = arith.constant dense<0xFF800000> : vector<17xf32>
    %123 = vector.multi_reduction <maximumf>, %122, %cst_40 [1] : vector<17x17xf32> to vector<17xf32>
    %124 = vector.shape_cast %123 : vector<17xf32> to vector<17x1xf32>
    %125 = vector.broadcast %124 : vector<17x1xf32> to vector<17x17xf32>
    %126 = arith.subf %122, %125 : vector<17x17xf32>
    %127 = math.exp %126 : vector<17x17xf32>
    %cst_41 = arith.constant dense<0.000000e+00> : vector<17xf32>
    %128 = vector.multi_reduction <add>, %127, %cst_41 [1] : vector<17x17xf32> to vector<17xf32>
    %129 = vector.shape_cast %128 : vector<17xf32> to vector<17x1xf32>
    %130 = tpu.reciprocal %129 {approx = true} : vector<17x1xf32> -> vector<17x1xf32>
    %131 = vector.broadcast %130 : vector<17x1xf32> to vector<17x17xf32>
    %132 = arith.mulf %127, %131 : vector<17x17xf32>
    %133 = arith.truncf %132 : vector<17x17xf32> to vector<17x17xbf16>
    %134 = arith.truncf %119 : vector<17x8xf32> to vector<17x8xbf16>
    %cst_42 = arith.constant dense<0.000000e+00> : vector<17x8xf32>
    %135 = tpu.matmul %133, %134, %cst_42 {dimension_numbers = #tpu.dot_dimension_numbers<[1], [0], [0], [1], [0, 0, 1, 1], [], []>} : vector<17x17xbf16>, vector<17x8xbf16>, vector<17x8xf32> -> vector<17x8xf32>
    %136 = vector.extract_strided_slice %39 {offsets = [17, 8], sizes = [17, 8], strides = [1, 1]} : vector<34x96xf32> to vector<17x8xf32>
    %137 = vector.extract_strided_slice %39 {offsets = [17, 40], sizes = [17, 8], strides = [1, 1]} : vector<34x96xf32> to vector<17x8xf32>
    %138 = vector.extract_strided_slice %39 {offsets = [17, 72], sizes = [17, 8], strides = [1, 1]} : vector<34x96xf32> to vector<17x8xf32>
    %139 = arith.truncf %136 : vector<17x8xf32> to vector<17x8xbf16>
    %140 = arith.truncf %137 : vector<17x8xf32> to vector<17x8xbf16>
    %cst_43 = arith.constant dense<0.000000e+00> : vector<17x17xf32>
    %141 = tpu.matmul %139, %140, %cst_43 {dimension_numbers = #tpu.dot_dimension_numbers<[1], [1], [0], [0], [0, 0, 1, 0], [], []>} : vector<17x8xbf16>, vector<17x8xbf16>, vector<17x17xf32> -> vector<17x17xf32>
    %cst_44 = arith.constant dense<0xFF800000> : vector<17xf32>
    %142 = vector.multi_reduction <maximumf>, %141, %cst_44 [1] : vector<17x17xf32> to vector<17xf32>
    %143 = vector.shape_cast %142 : vector<17xf32> to vector<17x1xf32>
    %144 = vector.broadcast %143 : vector<17x1xf32> to vector<17x17xf32>
    %145 = arith.subf %141, %144 : vector<17x17xf32>
    %146 = math.exp %145 : vector<17x17xf32>
    %cst_45 = arith.constant dense<0.000000e+00> : vector<17xf32>
    %147 = vector.multi_reduction <add>, %146, %cst_45 [1] : vector<17x17xf32> to vector<17xf32>
    %148 = vector.shape_cast %147 : vector<17xf32> to vector<17x1xf32>
    %149 = tpu.reciprocal %148 {approx = true} : vector<17x1xf32> -> vector<17x1xf32>
    %150 = vector.broadcast %149 : vector<17x1xf32> to vector<17x17xf32>
    %151 = arith.mulf %146, %150 : vector<17x17xf32>
    %152 = arith.truncf %151 : vector<17x17xf32> to vector<17x17xbf16>
    %153 = arith.truncf %138 : vector<17x8xf32> to vector<17x8xbf16>
    %cst_46 = arith.constant dense<0.000000e+00> : vector<17x8xf32>
    %154 = tpu.matmul %152, %153, %cst_46 {dimension_numbers = #tpu.dot_dimension_numbers<[1], [0], [0], [1], [0, 0, 1, 1], [], []>} : vector<17x17xbf16>, vector<17x8xbf16>, vector<17x8xf32> -> vector<17x8xf32>
    %155 = vector.extract_strided_slice %39 {offsets = [17, 16], sizes = [17, 8], strides = [1, 1]} : vector<34x96xf32> to vector<17x8xf32>
    %156 = vector.extract_strided_slice %39 {offsets = [17, 48], sizes = [17, 8], strides = [1, 1]} : vector<34x96xf32> to vector<17x8xf32>
    %157 = vector.extract_strided_slice %39 {offsets = [17, 80], sizes = [17, 8], strides = [1, 1]} : vector<34x96xf32> to vector<17x8xf32>
    %158 = arith.truncf %155 : vector<17x8xf32> to vector<17x8xbf16>
    %159 = arith.truncf %156 : vector<17x8xf32> to vector<17x8xbf16>
    %cst_47 = arith.constant dense<0.000000e+00> : vector<17x17xf32>
    %160 = tpu.matmul %158, %159, %cst_47 {dimension_numbers = #tpu.dot_dimension_numbers<[1], [1], [0], [0], [0, 0, 1, 0], [], []>} : vector<17x8xbf16>, vector<17x8xbf16>, vector<17x17xf32> -> vector<17x17xf32>
    %cst_48 = arith.constant dense<0xFF800000> : vector<17xf32>
    %161 = vector.multi_reduction <maximumf>, %160, %cst_48 [1] : vector<17x17xf32> to vector<17xf32>
    %162 = vector.shape_cast %161 : vector<17xf32> to vector<17x1xf32>
    %163 = vector.broadcast %162 : vector<17x1xf32> to vector<17x17xf32>
    %164 = arith.subf %160, %163 : vector<17x17xf32>
    %165 = math.exp %164 : vector<17x17xf32>
    %cst_49 = arith.constant dense<0.000000e+00> : vector<17xf32>
    %166 = vector.multi_reduction <add>, %165, %cst_49 [1] : vector<17x17xf32> to vector<17xf32>
    %167 = vector.shape_cast %166 : vector<17xf32> to vector<17x1xf32>
    %168 = tpu.reciprocal %167 {approx = true} : vector<17x1xf32> -> vector<17x1xf32>
    %169 = vector.broadcast %168 : vector<17x1xf32> to vector<17x17xf32>
    %170 = arith.mulf %165, %169 : vector<17x17xf32>
    %171 = arith.truncf %170 : vector<17x17xf32> to vector<17x17xbf16>
    %172 = arith.truncf %157 : vector<17x8xf32> to vector<17x8xbf16>
    %cst_50 = arith.constant dense<0.000000e+00> : vector<17x8xf32>
    %173 = tpu.matmul %171, %172, %cst_50 {dimension_numbers = #tpu.dot_dimension_numbers<[1], [0], [0], [1], [0, 0, 1, 1], [], []>} : vector<17x17xbf16>, vector<17x8xbf16>, vector<17x8xf32> -> vector<17x8xf32>
    %174 = vector.extract_strided_slice %39 {offsets = [17, 24], sizes = [17, 8], strides = [1, 1]} : vector<34x96xf32> to vector<17x8xf32>
    %175 = vector.extract_strided_slice %39 {offsets = [17, 56], sizes = [17, 8], strides = [1, 1]} : vector<34x96xf32> to vector<17x8xf32>
    %176 = vector.extract_strided_slice %39 {offsets = [17, 88], sizes = [17, 8], strides = [1, 1]} : vector<34x96xf32> to vector<17x8xf32>
    %177 = arith.truncf %174 : vector<17x8xf32> to vector<17x8xbf16>
    %178 = arith.truncf %175 : vector<17x8xf32> to vector<17x8xbf16>
    %cst_51 = arith.constant dense<0.000000e+00> : vector<17x17xf32>
    %179 = tpu.matmul %177, %178, %cst_51 {dimension_numbers = #tpu.dot_dimension_numbers<[1], [1], [0], [0], [0, 0, 1, 0], [], []>} : vector<17x8xbf16>, vector<17x8xbf16>, vector<17x17xf32> -> vector<17x17xf32>
    %cst_52 = arith.constant dense<0xFF800000> : vector<17xf32>
    %180 = vector.multi_reduction <maximumf>, %179, %cst_52 [1] : vector<17x17xf32> to vector<17xf32>
    %181 = vector.shape_cast %180 : vector<17xf32> to vector<17x1xf32>
    %182 = vector.broadcast %181 : vector<17x1xf32> to vector<17x17xf32>
    %183 = arith.subf %179, %182 : vector<17x17xf32>
    %184 = math.exp %183 : vector<17x17xf32>
    %cst_53 = arith.constant dense<0.000000e+00> : vector<17xf32>
    %185 = vector.multi_reduction <add>, %184, %cst_53 [1] : vector<17x17xf32> to vector<17xf32>
    %186 = vector.shape_cast %185 : vector<17xf32> to vector<17x1xf32>
    %187 = tpu.reciprocal %186 {approx = true} : vector<17x1xf32> -> vector<17x1xf32>
    %188 = vector.broadcast %187 : vector<17x1xf32> to vector<17x17xf32>
    %189 = arith.mulf %184, %188 : vector<17x17xf32>
    %190 = arith.truncf %189 : vector<17x17xf32> to vector<17x17xbf16>
    %191 = arith.truncf %176 : vector<17x8xf32> to vector<17x8xbf16>
    %cst_54 = arith.constant dense<0.000000e+00> : vector<17x8xf32>
    %192 = tpu.matmul %190, %191, %cst_54 {dimension_numbers = #tpu.dot_dimension_numbers<[1], [0], [0], [1], [0, 0, 1, 1], [], []>} : vector<17x17xbf16>, vector<17x8xbf16>, vector<17x8xf32> -> vector<17x8xf32>
    %193 = tpu.concatenate %135, %154, %173, %192 in 1 : vector<17x8xf32>, vector<17x8xf32>, vector<17x8xf32>, vector<17x8xf32> -> vector<17x32xf32>
    %194 = tpu.concatenate %116, %193 in 0 : vector<17x32xf32>, vector<17x32xf32> -> vector<34x32xf32>
    %c0_55 = arith.constant 0 : index
    %c0_56 = arith.constant 0 : index
    %c0_57 = arith.constant 0 : index
    %195 = vector.load %arg9[%c0_55, %c0_56, %c0_57] : memref<2x1x32xf32, #tpu.memory_space<vmem>>, vector<1x1x32xf32>
    %196 = vector.shape_cast %195 : vector<1x1x32xf32> to vector<1x32xf32>
    %197 = vector.broadcast %196 : vector<1x32xf32> to vector<34x32xf32>
    %198 = arith.addf %5, %197 : vector<34x32xf32>
    %199 = arith.truncf %194 : vector<34x32xf32> to vector<34x32xbf16>
    %c0_58 = arith.constant 0 : index
    %c0_59 = arith.constant 0 : index
    %c0_60 = arith.constant 0 : index
    %200 = vector.load %arg8[%c0_58, %c0_59, %c0_60] : memref<2x32x32xbf16, #tpu.memory_space<vmem>>, vector<1x32x32xbf16>
    %201 = vector.shape_cast %200 : vector<1x32x32xbf16> to vector<32x32xbf16>
    %cst_61 = arith.constant dense<0.000000e+00> : vector<34x32xf32>
    %202 = tpu.matmul %199, %201, %cst_61 {dimension_numbers = #tpu.dot_dimension_numbers<[1], [0], [0], [1], [0, 0, 1, 1], [], []>} : vector<34x32xbf16>, vector<32x32xbf16>, vector<34x32xf32> -> vector<34x32xf32>
    %203 = arith.addf %198, %202 : vector<34x32xf32>
    %c0_62 = arith.constant 0 : index
    %c0_63 = arith.constant 0 : index
    %c0_64 = arith.constant 0 : index
    %204 = vector.load %arg10[%c0_62, %c0_63, %c0_64] : memref<2x1x32xf32, #tpu.memory_space<vmem>>, vector<1x1x32xf32>
    %205 = vector.shape_cast %204 : vector<1x1x32xf32> to vector<1x32xf32>
    %c0_65 = arith.constant 0 : index
    %c0_66 = arith.constant 0 : index
    %c0_67 = arith.constant 0 : index
    %206 = vector.load %arg11[%c0_65, %c0_66, %c0_67] : memref<2x1x32xf32, #tpu.memory_space<vmem>>, vector<1x1x32xf32>
    %207 = vector.shape_cast %206 : vector<1x1x32xf32> to vector<1x32xf32>
    %cst_68 = arith.constant dense<0.000000e+00> : vector<34xf32>
    %208 = vector.multi_reduction <add>, %203, %cst_68 [1] : vector<34x32xf32> to vector<34xf32>
    %209 = vector.shape_cast %208 : vector<34xf32> to vector<34x1xf32>
    %cst_69 = arith.constant 3.200000e+01 : f32
    %210 = vector.broadcast %cst_69 : f32 to vector<34x1xf32>
    %211 = arith.divf %209, %210 : vector<34x1xf32>
    %212 = vector.broadcast %211 : vector<34x1xf32> to vector<34x32xf32>
    %213 = arith.subf %203, %212 : vector<34x32xf32>
    %214 = arith.mulf %213, %213 : vector<34x32xf32>
    %cst_70 = arith.constant dense<0.000000e+00> : vector<34xf32>
    %215 = vector.multi_reduction <add>, %214, %cst_70 [1] : vector<34x32xf32> to vector<34xf32>
    %216 = vector.shape_cast %215 : vector<34xf32> to vector<34x1xf32>
    %cst_71 = arith.constant 3.200000e+01 : f32
    %217 = vector.broadcast %cst_71 : f32 to vector<34x1xf32>
    %218 = arith.divf %216, %217 : vector<34x1xf32>
    %219 = vector.broadcast %211 : vector<34x1xf32> to vector<34x32xf32>
    %220 = arith.subf %203, %219 : vector<34x32xf32>
    %cst_72 = arith.constant 9.99999997E-7 : f32
    %221 = vector.broadcast %cst_72 : f32 to vector<34x1xf32>
    %222 = arith.addf %218, %221 : vector<34x1xf32>
    %223 = math.rsqrt %222 : vector<34x1xf32>
    %224 = vector.broadcast %223 : vector<34x1xf32> to vector<34x32xf32>
    %225 = arith.mulf %220, %224 : vector<34x32xf32>
    %226 = vector.broadcast %205 : vector<1x32xf32> to vector<34x32xf32>
    %227 = arith.mulf %225, %226 : vector<34x32xf32>
    %228 = vector.broadcast %207 : vector<1x32xf32> to vector<34x32xf32>
    %229 = arith.addf %227, %228 : vector<34x32xf32>
    %230 = arith.truncf %229 : vector<34x32xf32> to vector<34x32xbf16>
    %c0_73 = arith.constant 0 : index
    %c0_74 = arith.constant 0 : index
    %c0_75 = arith.constant 0 : index
    %231 = vector.load %arg12[%c0_73, %c0_74, %c0_75] : memref<2x32x128xbf16, #tpu.memory_space<vmem>>, vector<1x32x128xbf16>
    %232 = vector.shape_cast %231 : vector<1x32x128xbf16> to vector<32x128xbf16>
    %cst_76 = arith.constant dense<0.000000e+00> : vector<34x128xf32>
    %233 = tpu.matmul %230, %232, %cst_76 {dimension_numbers = #tpu.dot_dimension_numbers<[1], [0], [0], [1], [0, 0, 1, 1], [], []>} : vector<34x32xbf16>, vector<32x128xbf16>, vector<34x128xf32> -> vector<34x128xf32>
    %c0_77 = arith.constant 0 : index
    %c0_78 = arith.constant 0 : index
    %c0_79 = arith.constant 0 : index
    %234 = vector.load %arg13[%c0_77, %c0_78, %c0_79] : memref<2x1x128xf32, #tpu.memory_space<vmem>>, vector<1x1x128xf32>
    %235 = vector.shape_cast %234 : vector<1x1x128xf32> to vector<1x128xf32>
    %236 = vector.broadcast %235 : vector<1x128xf32> to vector<34x128xf32>
    %237 = arith.addf %233, %236 : vector<34x128xf32>
    %cst_80 = arith.constant 5.000000e-01 : f32
    %238 = vector.broadcast %cst_80 : f32 to vector<34x128xf32>
    %239 = arith.mulf %238, %237 : vector<34x128xf32>
    %cst_81 = arith.constant 0.707106769 : f32
    %240 = vector.broadcast %cst_81 : f32 to vector<34x128xf32>
    %241 = arith.mulf %237, %240 : vector<34x128xf32>
    %242 = math.erf %241 : vector<34x128xf32>
    %cst_82 = arith.constant 1.000000e+00 : f32
    %243 = vector.broadcast %cst_82 : f32 to vector<34x128xf32>
    %244 = arith.addf %243, %242 : vector<34x128xf32>
    %245 = arith.mulf %239, %244 : vector<34x128xf32>
    %246 = arith.truncf %245 : vector<34x128xf32> to vector<34x128xbf16>
    %c0_83 = arith.constant 0 : index
    %c0_84 = arith.constant 0 : index
    %c0_85 = arith.constant 0 : index
    %247 = vector.load %arg14[%c0_83, %c0_84, %c0_85] : memref<2x128x32xbf16, #tpu.memory_space<vmem>>, vector<1x128x32xbf16>
    %248 = vector.shape_cast %247 : vector<1x128x32xbf16> to vector<128x32xbf16>
    %cst_86 = arith.constant dense<0.000000e+00> : vector<34x32xf32>
    %249 = tpu.matmul %246, %248, %cst_86 {dimension_numbers = #tpu.dot_dimension_numbers<[1], [0], [0], [1], [0, 0, 1, 1], [], []>} : vector<34x128xbf16>, vector<128x32xbf16>, vector<34x32xf32> -> vector<34x32xf32>
    %250 = arith.addf %203, %249 : vector<34x32xf32>
    %c0_87 = arith.constant 0 : index
    %c0_88 = arith.constant 0 : index
    %c0_89 = arith.constant 0 : index
    %251 = vector.load %arg15[%c0_87, %c0_88, %c0_89] : memref<2x1x32xf32, #tpu.memory_space<vmem>>, vector<1x1x32xf32>
    %252 = vector.shape_cast %251 : vector<1x1x32xf32> to vector<1x32xf32>
    %253 = vector.broadcast %252 : vector<1x32xf32> to vector<34x32xf32>
    %254 = arith.addf %250, %253 : vector<34x32xf32>
    %c1 = arith.constant 1 : index
    %c0_90 = arith.constant 0 : index
    %c0_91 = arith.constant 0 : index
    %255 = vector.load %arg4[%c1, %c0_90, %c0_91] : memref<2x1x32xf32, #tpu.memory_space<vmem>>, vector<1x1x32xf32>
    %256 = vector.shape_cast %255 : vector<1x1x32xf32> to vector<1x32xf32>
    %c1_92 = arith.constant 1 : index
    %c0_93 = arith.constant 0 : index
    %c0_94 = arith.constant 0 : index
    %257 = vector.load %arg5[%c1_92, %c0_93, %c0_94] : memref<2x1x32xf32, #tpu.memory_space<vmem>>, vector<1x1x32xf32>
    %258 = vector.shape_cast %257 : vector<1x1x32xf32> to vector<1x32xf32>
    %cst_95 = arith.constant dense<0.000000e+00> : vector<34xf32>
    %259 = vector.multi_reduction <add>, %254, %cst_95 [1] : vector<34x32xf32> to vector<34xf32>
    %260 = vector.shape_cast %259 : vector<34xf32> to vector<34x1xf32>
    %cst_96 = arith.constant 3.200000e+01 : f32
    %261 = vector.broadcast %cst_96 : f32 to vector<34x1xf32>
    %262 = arith.divf %260, %261 : vector<34x1xf32>
    %263 = vector.broadcast %262 : vector<34x1xf32> to vector<34x32xf32>
    %264 = arith.subf %254, %263 : vector<34x32xf32>
    %265 = arith.mulf %264, %264 : vector<34x32xf32>
    %cst_97 = arith.constant dense<0.000000e+00> : vector<34xf32>
    %266 = vector.multi_reduction <add>, %265, %cst_97 [1] : vector<34x32xf32> to vector<34xf32>
    %267 = vector.shape_cast %266 : vector<34xf32> to vector<34x1xf32>
    %cst_98 = arith.constant 3.200000e+01 : f32
    %268 = vector.broadcast %cst_98 : f32 to vector<34x1xf32>
    %269 = arith.divf %267, %268 : vector<34x1xf32>
    %270 = vector.broadcast %262 : vector<34x1xf32> to vector<34x32xf32>
    %271 = arith.subf %254, %270 : vector<34x32xf32>
    %cst_99 = arith.constant 9.99999997E-7 : f32
    %272 = vector.broadcast %cst_99 : f32 to vector<34x1xf32>
    %273 = arith.addf %269, %272 : vector<34x1xf32>
    %274 = math.rsqrt %273 : vector<34x1xf32>
    %275 = vector.broadcast %274 : vector<34x1xf32> to vector<34x32xf32>
    %276 = arith.mulf %271, %275 : vector<34x32xf32>
    %277 = vector.broadcast %256 : vector<1x32xf32> to vector<34x32xf32>
    %278 = arith.mulf %276, %277 : vector<34x32xf32>
    %279 = vector.broadcast %258 : vector<1x32xf32> to vector<34x32xf32>
    %280 = arith.addf %278, %279 : vector<34x32xf32>
    %281 = arith.truncf %280 : vector<34x32xf32> to vector<34x32xbf16>
    %c1_100 = arith.constant 1 : index
    %c0_101 = arith.constant 0 : index
    %c0_102 = arith.constant 0 : index
    %282 = vector.load %arg6[%c1_100, %c0_101, %c0_102] : memref<2x32x96xbf16, #tpu.memory_space<vmem>>, vector<1x32x96xbf16>
    %283 = vector.shape_cast %282 : vector<1x32x96xbf16> to vector<32x96xbf16>
    %cst_103 = arith.constant dense<0.000000e+00> : vector<34x96xf32>
    %284 = tpu.matmul %281, %283, %cst_103 {dimension_numbers = #tpu.dot_dimension_numbers<[1], [0], [0], [1], [0, 0, 1, 1], [], []>} : vector<34x32xbf16>, vector<32x96xbf16>, vector<34x96xf32> -> vector<34x96xf32>
    %c1_104 = arith.constant 1 : index
    %c0_105 = arith.constant 0 : index
    %c0_106 = arith.constant 0 : index
    %285 = vector.load %arg7[%c1_104, %c0_105, %c0_106] : memref<2x1x96xf32, #tpu.memory_space<vmem>>, vector<1x1x96xf32>
    %286 = vector.shape_cast %285 : vector<1x1x96xf32> to vector<1x96xf32>
    %287 = vector.broadcast %286 : vector<1x96xf32> to vector<34x96xf32>
    %288 = arith.addf %284, %287 : vector<34x96xf32>
    %289 = vector.extract_strided_slice %288 {offsets = [0, 0], sizes = [17, 8], strides = [1, 1]} : vector<34x96xf32> to vector<17x8xf32>
    %290 = vector.extract_strided_slice %288 {offsets = [0, 32], sizes = [17, 8], strides = [1, 1]} : vector<34x96xf32> to vector<17x8xf32>
    %291 = vector.extract_strided_slice %288 {offsets = [0, 64], sizes = [17, 8], strides = [1, 1]} : vector<34x96xf32> to vector<17x8xf32>
    %292 = arith.truncf %289 : vector<17x8xf32> to vector<17x8xbf16>
    %293 = arith.truncf %290 : vector<17x8xf32> to vector<17x8xbf16>
    %cst_107 = arith.constant dense<0.000000e+00> : vector<17x17xf32>
    %294 = tpu.matmul %292, %293, %cst_107 {dimension_numbers = #tpu.dot_dimension_numbers<[1], [1], [0], [0], [0, 0, 1, 0], [], []>} : vector<17x8xbf16>, vector<17x8xbf16>, vector<17x17xf32> -> vector<17x17xf32>
    %cst_108 = arith.constant dense<0xFF800000> : vector<17xf32>
    %295 = vector.multi_reduction <maximumf>, %294, %cst_108 [1] : vector<17x17xf32> to vector<17xf32>
    %296 = vector.shape_cast %295 : vector<17xf32> to vector<17x1xf32>
    %297 = vector.broadcast %296 : vector<17x1xf32> to vector<17x17xf32>
    %298 = arith.subf %294, %297 : vector<17x17xf32>
    %299 = math.exp %298 : vector<17x17xf32>
    %cst_109 = arith.constant dense<0.000000e+00> : vector<17xf32>
    %300 = vector.multi_reduction <add>, %299, %cst_109 [1] : vector<17x17xf32> to vector<17xf32>
    %301 = vector.shape_cast %300 : vector<17xf32> to vector<17x1xf32>
    %302 = tpu.reciprocal %301 {approx = true} : vector<17x1xf32> -> vector<17x1xf32>
    %303 = vector.broadcast %302 : vector<17x1xf32> to vector<17x17xf32>
    %304 = arith.mulf %299, %303 : vector<17x17xf32>
    %305 = arith.truncf %304 : vector<17x17xf32> to vector<17x17xbf16>
    %306 = arith.truncf %291 : vector<17x8xf32> to vector<17x8xbf16>
    %cst_110 = arith.constant dense<0.000000e+00> : vector<17x8xf32>
    %307 = tpu.matmul %305, %306, %cst_110 {dimension_numbers = #tpu.dot_dimension_numbers<[1], [0], [0], [1], [0, 0, 1, 1], [], []>} : vector<17x17xbf16>, vector<17x8xbf16>, vector<17x8xf32> -> vector<17x8xf32>
    %308 = vector.extract_strided_slice %288 {offsets = [0, 8], sizes = [17, 8], strides = [1, 1]} : vector<34x96xf32> to vector<17x8xf32>
    %309 = vector.extract_strided_slice %288 {offsets = [0, 40], sizes = [17, 8], strides = [1, 1]} : vector<34x96xf32> to vector<17x8xf32>
    %310 = vector.extract_strided_slice %288 {offsets = [0, 72], sizes = [17, 8], strides = [1, 1]} : vector<34x96xf32> to vector<17x8xf32>
    %311 = arith.truncf %308 : vector<17x8xf32> to vector<17x8xbf16>
    %312 = arith.truncf %309 : vector<17x8xf32> to vector<17x8xbf16>
    %cst_111 = arith.constant dense<0.000000e+00> : vector<17x17xf32>
    %313 = tpu.matmul %311, %312, %cst_111 {dimension_numbers = #tpu.dot_dimension_numbers<[1], [1], [0], [0], [0, 0, 1, 0], [], []>} : vector<17x8xbf16>, vector<17x8xbf16>, vector<17x17xf32> -> vector<17x17xf32>
    %cst_112 = arith.constant dense<0xFF800000> : vector<17xf32>
    %314 = vector.multi_reduction <maximumf>, %313, %cst_112 [1] : vector<17x17xf32> to vector<17xf32>
    %315 = vector.shape_cast %314 : vector<17xf32> to vector<17x1xf32>
    %316 = vector.broadcast %315 : vector<17x1xf32> to vector<17x17xf32>
    %317 = arith.subf %313, %316 : vector<17x17xf32>
    %318 = math.exp %317 : vector<17x17xf32>
    %cst_113 = arith.constant dense<0.000000e+00> : vector<17xf32>
    %319 = vector.multi_reduction <add>, %318, %cst_113 [1] : vector<17x17xf32> to vector<17xf32>
    %320 = vector.shape_cast %319 : vector<17xf32> to vector<17x1xf32>
    %321 = tpu.reciprocal %320 {approx = true} : vector<17x1xf32> -> vector<17x1xf32>
    %322 = vector.broadcast %321 : vector<17x1xf32> to vector<17x17xf32>
    %323 = arith.mulf %318, %322 : vector<17x17xf32>
    %324 = arith.truncf %323 : vector<17x17xf32> to vector<17x17xbf16>
    %325 = arith.truncf %310 : vector<17x8xf32> to vector<17x8xbf16>
    %cst_114 = arith.constant dense<0.000000e+00> : vector<17x8xf32>
    %326 = tpu.matmul %324, %325, %cst_114 {dimension_numbers = #tpu.dot_dimension_numbers<[1], [0], [0], [1], [0, 0, 1, 1], [], []>} : vector<17x17xbf16>, vector<17x8xbf16>, vector<17x8xf32> -> vector<17x8xf32>
    %327 = vector.extract_strided_slice %288 {offsets = [0, 16], sizes = [17, 8], strides = [1, 1]} : vector<34x96xf32> to vector<17x8xf32>
    %328 = vector.extract_strided_slice %288 {offsets = [0, 48], sizes = [17, 8], strides = [1, 1]} : vector<34x96xf32> to vector<17x8xf32>
    %329 = vector.extract_strided_slice %288 {offsets = [0, 80], sizes = [17, 8], strides = [1, 1]} : vector<34x96xf32> to vector<17x8xf32>
    %330 = arith.truncf %327 : vector<17x8xf32> to vector<17x8xbf16>
    %331 = arith.truncf %328 : vector<17x8xf32> to vector<17x8xbf16>
    %cst_115 = arith.constant dense<0.000000e+00> : vector<17x17xf32>
    %332 = tpu.matmul %330, %331, %cst_115 {dimension_numbers = #tpu.dot_dimension_numbers<[1], [1], [0], [0], [0, 0, 1, 0], [], []>} : vector<17x8xbf16>, vector<17x8xbf16>, vector<17x17xf32> -> vector<17x17xf32>
    %cst_116 = arith.constant dense<0xFF800000> : vector<17xf32>
    %333 = vector.multi_reduction <maximumf>, %332, %cst_116 [1] : vector<17x17xf32> to vector<17xf32>
    %334 = vector.shape_cast %333 : vector<17xf32> to vector<17x1xf32>
    %335 = vector.broadcast %334 : vector<17x1xf32> to vector<17x17xf32>
    %336 = arith.subf %332, %335 : vector<17x17xf32>
    %337 = math.exp %336 : vector<17x17xf32>
    %cst_117 = arith.constant dense<0.000000e+00> : vector<17xf32>
    %338 = vector.multi_reduction <add>, %337, %cst_117 [1] : vector<17x17xf32> to vector<17xf32>
    %339 = vector.shape_cast %338 : vector<17xf32> to vector<17x1xf32>
    %340 = tpu.reciprocal %339 {approx = true} : vector<17x1xf32> -> vector<17x1xf32>
    %341 = vector.broadcast %340 : vector<17x1xf32> to vector<17x17xf32>
    %342 = arith.mulf %337, %341 : vector<17x17xf32>
    %343 = arith.truncf %342 : vector<17x17xf32> to vector<17x17xbf16>
    %344 = arith.truncf %329 : vector<17x8xf32> to vector<17x8xbf16>
    %cst_118 = arith.constant dense<0.000000e+00> : vector<17x8xf32>
    %345 = tpu.matmul %343, %344, %cst_118 {dimension_numbers = #tpu.dot_dimension_numbers<[1], [0], [0], [1], [0, 0, 1, 1], [], []>} : vector<17x17xbf16>, vector<17x8xbf16>, vector<17x8xf32> -> vector<17x8xf32>
    %346 = vector.extract_strided_slice %288 {offsets = [0, 24], sizes = [17, 8], strides = [1, 1]} : vector<34x96xf32> to vector<17x8xf32>
    %347 = vector.extract_strided_slice %288 {offsets = [0, 56], sizes = [17, 8], strides = [1, 1]} : vector<34x96xf32> to vector<17x8xf32>
    %348 = vector.extract_strided_slice %288 {offsets = [0, 88], sizes = [17, 8], strides = [1, 1]} : vector<34x96xf32> to vector<17x8xf32>
    %349 = arith.truncf %346 : vector<17x8xf32> to vector<17x8xbf16>
    %350 = arith.truncf %347 : vector<17x8xf32> to vector<17x8xbf16>
    %cst_119 = arith.constant dense<0.000000e+00> : vector<17x17xf32>
    %351 = tpu.matmul %349, %350, %cst_119 {dimension_numbers = #tpu.dot_dimension_numbers<[1], [1], [0], [0], [0, 0, 1, 0], [], []>} : vector<17x8xbf16>, vector<17x8xbf16>, vector<17x17xf32> -> vector<17x17xf32>
    %cst_120 = arith.constant dense<0xFF800000> : vector<17xf32>
    %352 = vector.multi_reduction <maximumf>, %351, %cst_120 [1] : vector<17x17xf32> to vector<17xf32>
    %353 = vector.shape_cast %352 : vector<17xf32> to vector<17x1xf32>
    %354 = vector.broadcast %353 : vector<17x1xf32> to vector<17x17xf32>
    %355 = arith.subf %351, %354 : vector<17x17xf32>
    %356 = math.exp %355 : vector<17x17xf32>
    %cst_121 = arith.constant dense<0.000000e+00> : vector<17xf32>
    %357 = vector.multi_reduction <add>, %356, %cst_121 [1] : vector<17x17xf32> to vector<17xf32>
    %358 = vector.shape_cast %357 : vector<17xf32> to vector<17x1xf32>
    %359 = tpu.reciprocal %358 {approx = true} : vector<17x1xf32> -> vector<17x1xf32>
    %360 = vector.broadcast %359 : vector<17x1xf32> to vector<17x17xf32>
    %361 = arith.mulf %356, %360 : vector<17x17xf32>
    %362 = arith.truncf %361 : vector<17x17xf32> to vector<17x17xbf16>
    %363 = arith.truncf %348 : vector<17x8xf32> to vector<17x8xbf16>
    %cst_122 = arith.constant dense<0.000000e+00> : vector<17x8xf32>
    %364 = tpu.matmul %362, %363, %cst_122 {dimension_numbers = #tpu.dot_dimension_numbers<[1], [0], [0], [1], [0, 0, 1, 1], [], []>} : vector<17x17xbf16>, vector<17x8xbf16>, vector<17x8xf32> -> vector<17x8xf32>
    %365 = tpu.concatenate %307, %326, %345, %364 in 1 : vector<17x8xf32>, vector<17x8xf32>, vector<17x8xf32>, vector<17x8xf32> -> vector<17x32xf32>
    %366 = vector.extract_strided_slice %288 {offsets = [17, 0], sizes = [17, 8], strides = [1, 1]} : vector<34x96xf32> to vector<17x8xf32>
    %367 = vector.extract_strided_slice %288 {offsets = [17, 32], sizes = [17, 8], strides = [1, 1]} : vector<34x96xf32> to vector<17x8xf32>
    %368 = vector.extract_strided_slice %288 {offsets = [17, 64], sizes = [17, 8], strides = [1, 1]} : vector<34x96xf32> to vector<17x8xf32>
    %369 = arith.truncf %366 : vector<17x8xf32> to vector<17x8xbf16>
    %370 = arith.truncf %367 : vector<17x8xf32> to vector<17x8xbf16>
    %cst_123 = arith.constant dense<0.000000e+00> : vector<17x17xf32>
    %371 = tpu.matmul %369, %370, %cst_123 {dimension_numbers = #tpu.dot_dimension_numbers<[1], [1], [0], [0], [0, 0, 1, 0], [], []>} : vector<17x8xbf16>, vector<17x8xbf16>, vector<17x17xf32> -> vector<17x17xf32>
    %cst_124 = arith.constant dense<0xFF800000> : vector<17xf32>
    %372 = vector.multi_reduction <maximumf>, %371, %cst_124 [1] : vector<17x17xf32> to vector<17xf32>
    %373 = vector.shape_cast %372 : vector<17xf32> to vector<17x1xf32>
    %374 = vector.broadcast %373 : vector<17x1xf32> to vector<17x17xf32>
    %375 = arith.subf %371, %374 : vector<17x17xf32>
    %376 = math.exp %375 : vector<17x17xf32>
    %cst_125 = arith.constant dense<0.000000e+00> : vector<17xf32>
    %377 = vector.multi_reduction <add>, %376, %cst_125 [1] : vector<17x17xf32> to vector<17xf32>
    %378 = vector.shape_cast %377 : vector<17xf32> to vector<17x1xf32>
    %379 = tpu.reciprocal %378 {approx = true} : vector<17x1xf32> -> vector<17x1xf32>
    %380 = vector.broadcast %379 : vector<17x1xf32> to vector<17x17xf32>
    %381 = arith.mulf %376, %380 : vector<17x17xf32>
    %382 = arith.truncf %381 : vector<17x17xf32> to vector<17x17xbf16>
    %383 = arith.truncf %368 : vector<17x8xf32> to vector<17x8xbf16>
    %cst_126 = arith.constant dense<0.000000e+00> : vector<17x8xf32>
    %384 = tpu.matmul %382, %383, %cst_126 {dimension_numbers = #tpu.dot_dimension_numbers<[1], [0], [0], [1], [0, 0, 1, 1], [], []>} : vector<17x17xbf16>, vector<17x8xbf16>, vector<17x8xf32> -> vector<17x8xf32>
    %385 = vector.extract_strided_slice %288 {offsets = [17, 8], sizes = [17, 8], strides = [1, 1]} : vector<34x96xf32> to vector<17x8xf32>
    %386 = vector.extract_strided_slice %288 {offsets = [17, 40], sizes = [17, 8], strides = [1, 1]} : vector<34x96xf32> to vector<17x8xf32>
    %387 = vector.extract_strided_slice %288 {offsets = [17, 72], sizes = [17, 8], strides = [1, 1]} : vector<34x96xf32> to vector<17x8xf32>
    %388 = arith.truncf %385 : vector<17x8xf32> to vector<17x8xbf16>
    %389 = arith.truncf %386 : vector<17x8xf32> to vector<17x8xbf16>
    %cst_127 = arith.constant dense<0.000000e+00> : vector<17x17xf32>
    %390 = tpu.matmul %388, %389, %cst_127 {dimension_numbers = #tpu.dot_dimension_numbers<[1], [1], [0], [0], [0, 0, 1, 0], [], []>} : vector<17x8xbf16>, vector<17x8xbf16>, vector<17x17xf32> -> vector<17x17xf32>
    %cst_128 = arith.constant dense<0xFF800000> : vector<17xf32>
    %391 = vector.multi_reduction <maximumf>, %390, %cst_128 [1] : vector<17x17xf32> to vector<17xf32>
    %392 = vector.shape_cast %391 : vector<17xf32> to vector<17x1xf32>
    %393 = vector.broadcast %392 : vector<17x1xf32> to vector<17x17xf32>
    %394 = arith.subf %390, %393 : vector<17x17xf32>
    %395 = math.exp %394 : vector<17x17xf32>
    %cst_129 = arith.constant dense<0.000000e+00> : vector<17xf32>
    %396 = vector.multi_reduction <add>, %395, %cst_129 [1] : vector<17x17xf32> to vector<17xf32>
    %397 = vector.shape_cast %396 : vector<17xf32> to vector<17x1xf32>
    %398 = tpu.reciprocal %397 {approx = true} : vector<17x1xf32> -> vector<17x1xf32>
    %399 = vector.broadcast %398 : vector<17x1xf32> to vector<17x17xf32>
    %400 = arith.mulf %395, %399 : vector<17x17xf32>
    %401 = arith.truncf %400 : vector<17x17xf32> to vector<17x17xbf16>
    %402 = arith.truncf %387 : vector<17x8xf32> to vector<17x8xbf16>
    %cst_130 = arith.constant dense<0.000000e+00> : vector<17x8xf32>
    %403 = tpu.matmul %401, %402, %cst_130 {dimension_numbers = #tpu.dot_dimension_numbers<[1], [0], [0], [1], [0, 0, 1, 1], [], []>} : vector<17x17xbf16>, vector<17x8xbf16>, vector<17x8xf32> -> vector<17x8xf32>
    %404 = vector.extract_strided_slice %288 {offsets = [17, 16], sizes = [17, 8], strides = [1, 1]} : vector<34x96xf32> to vector<17x8xf32>
    %405 = vector.extract_strided_slice %288 {offsets = [17, 48], sizes = [17, 8], strides = [1, 1]} : vector<34x96xf32> to vector<17x8xf32>
    %406 = vector.extract_strided_slice %288 {offsets = [17, 80], sizes = [17, 8], strides = [1, 1]} : vector<34x96xf32> to vector<17x8xf32>
    %407 = arith.truncf %404 : vector<17x8xf32> to vector<17x8xbf16>
    %408 = arith.truncf %405 : vector<17x8xf32> to vector<17x8xbf16>
    %cst_131 = arith.constant dense<0.000000e+00> : vector<17x17xf32>
    %409 = tpu.matmul %407, %408, %cst_131 {dimension_numbers = #tpu.dot_dimension_numbers<[1], [1], [0], [0], [0, 0, 1, 0], [], []>} : vector<17x8xbf16>, vector<17x8xbf16>, vector<17x17xf32> -> vector<17x17xf32>
    %cst_132 = arith.constant dense<0xFF800000> : vector<17xf32>
    %410 = vector.multi_reduction <maximumf>, %409, %cst_132 [1] : vector<17x17xf32> to vector<17xf32>
    %411 = vector.shape_cast %410 : vector<17xf32> to vector<17x1xf32>
    %412 = vector.broadcast %411 : vector<17x1xf32> to vector<17x17xf32>
    %413 = arith.subf %409, %412 : vector<17x17xf32>
    %414 = math.exp %413 : vector<17x17xf32>
    %cst_133 = arith.constant dense<0.000000e+00> : vector<17xf32>
    %415 = vector.multi_reduction <add>, %414, %cst_133 [1] : vector<17x17xf32> to vector<17xf32>
    %416 = vector.shape_cast %415 : vector<17xf32> to vector<17x1xf32>
    %417 = tpu.reciprocal %416 {approx = true} : vector<17x1xf32> -> vector<17x1xf32>
    %418 = vector.broadcast %417 : vector<17x1xf32> to vector<17x17xf32>
    %419 = arith.mulf %414, %418 : vector<17x17xf32>
    %420 = arith.truncf %419 : vector<17x17xf32> to vector<17x17xbf16>
    %421 = arith.truncf %406 : vector<17x8xf32> to vector<17x8xbf16>
    %cst_134 = arith.constant dense<0.000000e+00> : vector<17x8xf32>
    %422 = tpu.matmul %420, %421, %cst_134 {dimension_numbers = #tpu.dot_dimension_numbers<[1], [0], [0], [1], [0, 0, 1, 1], [], []>} : vector<17x17xbf16>, vector<17x8xbf16>, vector<17x8xf32> -> vector<17x8xf32>
    %423 = vector.extract_strided_slice %288 {offsets = [17, 24], sizes = [17, 8], strides = [1, 1]} : vector<34x96xf32> to vector<17x8xf32>
    %424 = vector.extract_strided_slice %288 {offsets = [17, 56], sizes = [17, 8], strides = [1, 1]} : vector<34x96xf32> to vector<17x8xf32>
    %425 = vector.extract_strided_slice %288 {offsets = [17, 88], sizes = [17, 8], strides = [1, 1]} : vector<34x96xf32> to vector<17x8xf32>
    %426 = arith.truncf %423 : vector<17x8xf32> to vector<17x8xbf16>
    %427 = arith.truncf %424 : vector<17x8xf32> to vector<17x8xbf16>
    %cst_135 = arith.constant dense<0.000000e+00> : vector<17x17xf32>
    %428 = tpu.matmul %426, %427, %cst_135 {dimension_numbers = #tpu.dot_dimension_numbers<[1], [1], [0], [0], [0, 0, 1, 0], [], []>} : vector<17x8xbf16>, vector<17x8xbf16>, vector<17x17xf32> -> vector<17x17xf32>
    %cst_136 = arith.constant dense<0xFF800000> : vector<17xf32>
    %429 = vector.multi_reduction <maximumf>, %428, %cst_136 [1] : vector<17x17xf32> to vector<17xf32>
    %430 = vector.shape_cast %429 : vector<17xf32> to vector<17x1xf32>
    %431 = vector.broadcast %430 : vector<17x1xf32> to vector<17x17xf32>
    %432 = arith.subf %428, %431 : vector<17x17xf32>
    %433 = math.exp %432 : vector<17x17xf32>
    %cst_137 = arith.constant dense<0.000000e+00> : vector<17xf32>
    %434 = vector.multi_reduction <add>, %433, %cst_137 [1] : vector<17x17xf32> to vector<17xf32>
    %435 = vector.shape_cast %434 : vector<17xf32> to vector<17x1xf32>
    %436 = tpu.reciprocal %435 {approx = true} : vector<17x1xf32> -> vector<17x1xf32>
    %437 = vector.broadcast %436 : vector<17x1xf32> to vector<17x17xf32>
    %438 = arith.mulf %433, %437 : vector<17x17xf32>
    %439 = arith.truncf %438 : vector<17x17xf32> to vector<17x17xbf16>
    %440 = arith.truncf %425 : vector<17x8xf32> to vector<17x8xbf16>
    %cst_138 = arith.constant dense<0.000000e+00> : vector<17x8xf32>
    %441 = tpu.matmul %439, %440, %cst_138 {dimension_numbers = #tpu.dot_dimension_numbers<[1], [0], [0], [1], [0, 0, 1, 1], [], []>} : vector<17x17xbf16>, vector<17x8xbf16>, vector<17x8xf32> -> vector<17x8xf32>
    %442 = tpu.concatenate %384, %403, %422, %441 in 1 : vector<17x8xf32>, vector<17x8xf32>, vector<17x8xf32>, vector<17x8xf32> -> vector<17x32xf32>
    %443 = tpu.concatenate %365, %442 in 0 : vector<17x32xf32>, vector<17x32xf32> -> vector<34x32xf32>
    %c1_139 = arith.constant 1 : index
    %c0_140 = arith.constant 0 : index
    %c0_141 = arith.constant 0 : index
    %444 = vector.load %arg9[%c1_139, %c0_140, %c0_141] : memref<2x1x32xf32, #tpu.memory_space<vmem>>, vector<1x1x32xf32>
    %445 = vector.shape_cast %444 : vector<1x1x32xf32> to vector<1x32xf32>
    %446 = vector.broadcast %445 : vector<1x32xf32> to vector<34x32xf32>
    %447 = arith.addf %254, %446 : vector<34x32xf32>
    %448 = arith.truncf %443 : vector<34x32xf32> to vector<34x32xbf16>
    %c1_142 = arith.constant 1 : index
    %c0_143 = arith.constant 0 : index
    %c0_144 = arith.constant 0 : index
    %449 = vector.load %arg8[%c1_142, %c0_143, %c0_144] : memref<2x32x32xbf16, #tpu.memory_space<vmem>>, vector<1x32x32xbf16>
    %450 = vector.shape_cast %449 : vector<1x32x32xbf16> to vector<32x32xbf16>
    %cst_145 = arith.constant dense<0.000000e+00> : vector<34x32xf32>
    %451 = tpu.matmul %448, %450, %cst_145 {dimension_numbers = #tpu.dot_dimension_numbers<[1], [0], [0], [1], [0, 0, 1, 1], [], []>} : vector<34x32xbf16>, vector<32x32xbf16>, vector<34x32xf32> -> vector<34x32xf32>
    %452 = arith.addf %447, %451 : vector<34x32xf32>
    %c1_146 = arith.constant 1 : index
    %c0_147 = arith.constant 0 : index
    %c0_148 = arith.constant 0 : index
    %453 = vector.load %arg10[%c1_146, %c0_147, %c0_148] : memref<2x1x32xf32, #tpu.memory_space<vmem>>, vector<1x1x32xf32>
    %454 = vector.shape_cast %453 : vector<1x1x32xf32> to vector<1x32xf32>
    %c1_149 = arith.constant 1 : index
    %c0_150 = arith.constant 0 : index
    %c0_151 = arith.constant 0 : index
    %455 = vector.load %arg11[%c1_149, %c0_150, %c0_151] : memref<2x1x32xf32, #tpu.memory_space<vmem>>, vector<1x1x32xf32>
    %456 = vector.shape_cast %455 : vector<1x1x32xf32> to vector<1x32xf32>
    %cst_152 = arith.constant dense<0.000000e+00> : vector<34xf32>
    %457 = vector.multi_reduction <add>, %452, %cst_152 [1] : vector<34x32xf32> to vector<34xf32>
    %458 = vector.shape_cast %457 : vector<34xf32> to vector<34x1xf32>
    %cst_153 = arith.constant 3.200000e+01 : f32
    %459 = vector.broadcast %cst_153 : f32 to vector<34x1xf32>
    %460 = arith.divf %458, %459 : vector<34x1xf32>
    %461 = vector.broadcast %460 : vector<34x1xf32> to vector<34x32xf32>
    %462 = arith.subf %452, %461 : vector<34x32xf32>
    %463 = arith.mulf %462, %462 : vector<34x32xf32>
    %cst_154 = arith.constant dense<0.000000e+00> : vector<34xf32>
    %464 = vector.multi_reduction <add>, %463, %cst_154 [1] : vector<34x32xf32> to vector<34xf32>
    %465 = vector.shape_cast %464 : vector<34xf32> to vector<34x1xf32>
    %cst_155 = arith.constant 3.200000e+01 : f32
    %466 = vector.broadcast %cst_155 : f32 to vector<34x1xf32>
    %467 = arith.divf %465, %466 : vector<34x1xf32>
    %468 = vector.broadcast %460 : vector<34x1xf32> to vector<34x32xf32>
    %469 = arith.subf %452, %468 : vector<34x32xf32>
    %cst_156 = arith.constant 9.99999997E-7 : f32
    %470 = vector.broadcast %cst_156 : f32 to vector<34x1xf32>
    %471 = arith.addf %467, %470 : vector<34x1xf32>
    %472 = math.rsqrt %471 : vector<34x1xf32>
    %473 = vector.broadcast %472 : vector<34x1xf32> to vector<34x32xf32>
    %474 = arith.mulf %469, %473 : vector<34x32xf32>
    %475 = vector.broadcast %454 : vector<1x32xf32> to vector<34x32xf32>
    %476 = arith.mulf %474, %475 : vector<34x32xf32>
    %477 = vector.broadcast %456 : vector<1x32xf32> to vector<34x32xf32>
    %478 = arith.addf %476, %477 : vector<34x32xf32>
    %479 = arith.truncf %478 : vector<34x32xf32> to vector<34x32xbf16>
    %c1_157 = arith.constant 1 : index
    %c0_158 = arith.constant 0 : index
    %c0_159 = arith.constant 0 : index
    %480 = vector.load %arg12[%c1_157, %c0_158, %c0_159] : memref<2x32x128xbf16, #tpu.memory_space<vmem>>, vector<1x32x128xbf16>
    %481 = vector.shape_cast %480 : vector<1x32x128xbf16> to vector<32x128xbf16>
    %cst_160 = arith.constant dense<0.000000e+00> : vector<34x128xf32>
    %482 = tpu.matmul %479, %481, %cst_160 {dimension_numbers = #tpu.dot_dimension_numbers<[1], [0], [0], [1], [0, 0, 1, 1], [], []>} : vector<34x32xbf16>, vector<32x128xbf16>, vector<34x128xf32> -> vector<34x128xf32>
    %c1_161 = arith.constant 1 : index
    %c0_162 = arith.constant 0 : index
    %c0_163 = arith.constant 0 : index
    %483 = vector.load %arg13[%c1_161, %c0_162, %c0_163] : memref<2x1x128xf32, #tpu.memory_space<vmem>>, vector<1x1x128xf32>
    %484 = vector.shape_cast %483 : vector<1x1x128xf32> to vector<1x128xf32>
    %485 = vector.broadcast %484 : vector<1x128xf32> to vector<34x128xf32>
    %486 = arith.addf %482, %485 : vector<34x128xf32>
    %cst_164 = arith.constant 5.000000e-01 : f32
    %487 = vector.broadcast %cst_164 : f32 to vector<34x128xf32>
    %488 = arith.mulf %487, %486 : vector<34x128xf32>
    %cst_165 = arith.constant 0.707106769 : f32
    %489 = vector.broadcast %cst_165 : f32 to vector<34x128xf32>
    %490 = arith.mulf %486, %489 : vector<34x128xf32>
    %491 = math.erf %490 : vector<34x128xf32>
    %cst_166 = arith.constant 1.000000e+00 : f32
    %492 = vector.broadcast %cst_166 : f32 to vector<34x128xf32>
    %493 = arith.addf %492, %491 : vector<34x128xf32>
    %494 = arith.mulf %488, %493 : vector<34x128xf32>
    %495 = arith.truncf %494 : vector<34x128xf32> to vector<34x128xbf16>
    %c1_167 = arith.constant 1 : index
    %c0_168 = arith.constant 0 : index
    %c0_169 = arith.constant 0 : index
    %496 = vector.load %arg14[%c1_167, %c0_168, %c0_169] : memref<2x128x32xbf16, #tpu.memory_space<vmem>>, vector<1x128x32xbf16>
    %497 = vector.shape_cast %496 : vector<1x128x32xbf16> to vector<128x32xbf16>
    %cst_170 = arith.constant dense<0.000000e+00> : vector<34x32xf32>
    %498 = tpu.matmul %495, %497, %cst_170 {dimension_numbers = #tpu.dot_dimension_numbers<[1], [0], [0], [1], [0, 0, 1, 1], [], []>} : vector<34x128xbf16>, vector<128x32xbf16>, vector<34x32xf32> -> vector<34x32xf32>
    %499 = arith.addf %452, %498 : vector<34x32xf32>
    %c1_171 = arith.constant 1 : index
    %c0_172 = arith.constant 0 : index
    %c0_173 = arith.constant 0 : index
    %500 = vector.load %arg15[%c1_171, %c0_172, %c0_173] : memref<2x1x32xf32, #tpu.memory_space<vmem>>, vector<1x1x32xf32>
    %501 = vector.shape_cast %500 : vector<1x1x32xf32> to vector<1x32xf32>
    %502 = vector.broadcast %501 : vector<1x32xf32> to vector<34x32xf32>
    %503 = arith.addf %499, %502 : vector<34x32xf32>
    %c0_174 = arith.constant 0 : index
    %c0_175 = arith.constant 0 : index
    %504 = vector.load %arg16[%c0_174, %c0_175] : memref<1x32xf32, #tpu.memory_space<vmem>>, vector<1x32xf32>
    %c0_176 = arith.constant 0 : index
    %c0_177 = arith.constant 0 : index
    %505 = vector.load %arg17[%c0_176, %c0_177] : memref<1x32xf32, #tpu.memory_space<vmem>>, vector<1x32xf32>
    %cst_178 = arith.constant dense<0.000000e+00> : vector<34xf32>
    %506 = vector.multi_reduction <add>, %503, %cst_178 [1] : vector<34x32xf32> to vector<34xf32>
    %507 = vector.shape_cast %506 : vector<34xf32> to vector<34x1xf32>
    %cst_179 = arith.constant 3.200000e+01 : f32
    %508 = vector.broadcast %cst_179 : f32 to vector<34x1xf32>
    %509 = arith.divf %507, %508 : vector<34x1xf32>
    %510 = vector.broadcast %509 : vector<34x1xf32> to vector<34x32xf32>
    %511 = arith.subf %503, %510 : vector<34x32xf32>
    %512 = arith.mulf %511, %511 : vector<34x32xf32>
    %cst_180 = arith.constant dense<0.000000e+00> : vector<34xf32>
    %513 = vector.multi_reduction <add>, %512, %cst_180 [1] : vector<34x32xf32> to vector<34xf32>
    %514 = vector.shape_cast %513 : vector<34xf32> to vector<34x1xf32>
    %cst_181 = arith.constant 3.200000e+01 : f32
    %515 = vector.broadcast %cst_181 : f32 to vector<34x1xf32>
    %516 = arith.divf %514, %515 : vector<34x1xf32>
    %517 = vector.broadcast %509 : vector<34x1xf32> to vector<34x32xf32>
    %518 = arith.subf %503, %517 : vector<34x32xf32>
    %cst_182 = arith.constant 9.99999997E-7 : f32
    %519 = vector.broadcast %cst_182 : f32 to vector<34x1xf32>
    %520 = arith.addf %516, %519 : vector<34x1xf32>
    %521 = math.rsqrt %520 : vector<34x1xf32>
    %522 = vector.broadcast %521 : vector<34x1xf32> to vector<34x32xf32>
    %523 = arith.mulf %518, %522 : vector<34x32xf32>
    %524 = vector.broadcast %504 : vector<1x32xf32> to vector<34x32xf32>
    %525 = arith.mulf %523, %524 : vector<34x32xf32>
    %526 = vector.broadcast %505 : vector<1x32xf32> to vector<34x32xf32>
    %527 = arith.addf %525, %526 : vector<34x32xf32>
    %528 = vector.extract_strided_slice %527 {offsets = [1, 0], sizes = [16, 32], strides = [1, 1]} : vector<34x32xf32> to vector<16x32xf32>
    %c0_183 = arith.constant 0 : index
    %c0_184 = arith.constant 0 : index
    %c0_185 = arith.constant 0 : index
    %529 = vector.load %arg18[%c0_183, %c0_184, %c0_185] : memref<2x16x32xf32, #tpu.memory_space<vmem>>, vector<1x16x32xf32>
    %530 = vector.shape_cast %529 : vector<1x16x32xf32> to vector<16x32xf32>
    %531 = vector.shape_cast %528 : vector<16x32xf32> to vector<1x16x32xf32>
    tpu.vector_store %arg18[%c0_183, %c0_184, %c0_185], %531 {strides = array<i32>} : memref<2x16x32xf32, #tpu.memory_space<vmem>>, vector<1x16x32xf32>,
    %532 = vector.extract_strided_slice %527 {offsets = [18, 0], sizes = [16, 32], strides = [1, 1]} : vector<34x32xf32> to vector<16x32xf32>
    %c1_186 = arith.constant 1 : index
    %c0_187 = arith.constant 0 : index
    %c0_188 = arith.constant 0 : index
    %533 = vector.load %arg18[%c1_186, %c0_187, %c0_188] : memref<2x16x32xf32, #tpu.memory_space<vmem>>, vector<1x16x32xf32>
    %534 = vector.shape_cast %533 : vector<1x16x32xf32> to vector<16x32xf32>
    %535 = vector.shape_cast %532 : vector<16x32xf32> to vector<1x16x32xf32>
    tpu.vector_store %arg18[%c1_186, %c0_187, %c0_188], %535 {strides = array<i32>} : memref<2x16x32xf32, #tpu.memory_space<vmem>>, vector<1x16x32xf32>,
    return
  }
  func.func @transform_0(%arg0: i32) -> (i32, i32) {
    %c0_i32 = arith.constant 0 : i32
    %c0_i32_0 = arith.constant 0 : i32
    return %arg0, %c0_i32 : i32, i32
  }
  func.func @transform_1(%arg0: i32) -> (i32, i32) {
    %c0_i32 = arith.constant 0 : i32
    %c0_i32_0 = arith.constant 0 : i32
    %c0_i32_1 = arith.constant 0 : i32
    return %c0_i32, %c0_i32_0 : i32, i32
  }
  func.func @transform_2(%arg0: i32) -> (i32, i32) {
    %c0_i32 = arith.constant 0 : i32
    %c0_i32_0 = arith.constant 0 : i32
    %c0_i32_1 = arith.constant 0 : i32
    return %c0_i32, %c0_i32_0 : i32, i32
  }
  func.func @transform_3(%arg0: i32) -> (i32, i32, i32) {
    %c0_i32 = arith.constant 0 : i32
    %c0_i32_0 = arith.constant 0 : i32
    %c0_i32_1 = arith.constant 0 : i32
    %c0_i32_2 = arith.constant 0 : i32
    return %c0_i32, %c0_i32_0, %c0_i32_1 : i32, i32, i32
  }
  func.func @transform_4(%arg0: i32) -> (i32, i32, i32) {
    %c0_i32 = arith.constant 0 : i32
    %c0_i32_0 = arith.constant 0 : i32
    %c0_i32_1 = arith.constant 0 : i32
    %c0_i32_2 = arith.constant 0 : i32
    return %c0_i32, %c0_i32_0, %c0_i32_1 : i32, i32, i32
  }
  func.func @transform_5(%arg0: i32) -> (i32, i32, i32) {
    %c0_i32 = arith.constant 0 : i32
    %c0_i32_0 = arith.constant 0 : i32
    %c0_i32_1 = arith.constant 0 : i32
    %c0_i32_2 = arith.constant 0 : i32
    return %c0_i32, %c0_i32_0, %c0_i32_1 : i32, i32, i32
  }
  func.func @transform_6(%arg0: i32) -> (i32, i32, i32) {
    %c0_i32 = arith.constant 0 : i32
    %c0_i32_0 = arith.constant 0 : i32
    %c0_i32_1 = arith.constant 0 : i32
    %c0_i32_2 = arith.constant 0 : i32
    return %c0_i32, %c0_i32_0, %c0_i32_1 : i32, i32, i32
  }
  func.func @transform_7(%arg0: i32) -> (i32, i32, i32) {
    %c0_i32 = arith.constant 0 : i32
    %c0_i32_0 = arith.constant 0 : i32
    %c0_i32_1 = arith.constant 0 : i32
    %c0_i32_2 = arith.constant 0 : i32
    return %c0_i32, %c0_i32_0, %c0_i32_1 : i32, i32, i32
  }
  func.func @transform_8(%arg0: i32) -> (i32, i32, i32) {
    %c0_i32 = arith.constant 0 : i32
    %c0_i32_0 = arith.constant 0 : i32
    %c0_i32_1 = arith.constant 0 : i32
    %c0_i32_2 = arith.constant 0 : i32
    return %c0_i32, %c0_i32_0, %c0_i32_1 : i32, i32, i32
  }
  func.func @transform_9(%arg0: i32) -> (i32, i32, i32) {
    %c0_i32 = arith.constant 0 : i32
    %c0_i32_0 = arith.constant 0 : i32
    %c0_i32_1 = arith.constant 0 : i32
    %c0_i32_2 = arith.constant 0 : i32
    return %c0_i32, %c0_i32_0, %c0_i32_1 : i32, i32, i32
  }
  func.func @transform_10(%arg0: i32) -> (i32, i32, i32) {
    %c0_i32 = arith.constant 0 : i32
    %c0_i32_0 = arith.constant 0 : i32
    %c0_i32_1 = arith.constant 0 : i32
    %c0_i32_2 = arith.constant 0 : i32
    return %c0_i32, %c0_i32_0, %c0_i32_1 : i32, i32, i32
  }
  func.func @transform_11(%arg0: i32) -> (i32, i32, i32) {
    %c0_i32 = arith.constant 0 : i32
    %c0_i32_0 = arith.constant 0 : i32
    %c0_i32_1 = arith.constant 0 : i32
    %c0_i32_2 = arith.constant 0 : i32
    return %c0_i32, %c0_i32_0, %c0_i32_1 : i32, i32, i32
  }
  func.func @transform_12(%arg0: i32) -> (i32, i32, i32) {
    %c0_i32 = arith.constant 0 : i32
    %c0_i32_0 = arith.constant 0 : i32
    %c0_i32_1 = arith.constant 0 : i32
    %c0_i32_2 = arith.constant 0 : i32
    return %c0_i32, %c0_i32_0, %c0_i32_1 : i32, i32, i32
  }
  func.func @transform_13(%arg0: i32) -> (i32, i32, i32) {
    %c0_i32 = arith.constant 0 : i32
    %c0_i32_0 = arith.constant 0 : i32
    %c0_i32_1 = arith.constant 0 : i32
    %c0_i32_2 = arith.constant 0 : i32
    return %c0_i32, %c0_i32_0, %c0_i32_1 : i32, i32, i32
  }
  func.func @transform_14(%arg0: i32) -> (i32, i32, i32) {
    %c0_i32 = arith.constant 0 : i32
    %c0_i32_0 = arith.constant 0 : i32
    %c0_i32_1 = arith.constant 0 : i32
    %c0_i32_2 = arith.constant 0 : i32
    return %c0_i32, %c0_i32_0, %c0_i32_1 : i32, i32, i32
  }
  func.func @transform_15(%arg0: i32) -> (i32, i32) {
    %c0_i32 = arith.constant 0 : i32
    %c0_i32_0 = arith.constant 0 : i32
    %c0_i32_1 = arith.constant 0 : i32
    return %c0_i32, %c0_i32_0 : i32, i32
  }
  func.func @transform_16(%arg0: i32) -> (i32, i32) {
    %c0_i32 = arith.constant 0 : i32
    %c0_i32_0 = arith.constant 0 : i32
    %c0_i32_1 = arith.constant 0 : i32
    return %c0_i32, %c0_i32_0 : i32, i32
  }
  func.func @transform_17(%arg0: i32) -> (i32, i32, i32) {
    %c0_i32 = arith.constant 0 : i32
    %c0_i32_0 = arith.constant 0 : i32
    %c0_i32_1 = arith.constant 0 : i32
    return %arg0, %c0_i32, %c0_i32_0 : i32, i32, i32
  }
}

</mosaic_0001>

<llo_original>
// kernel: vit_embedder_forward.1
$region0: #{vit_embedder_forward.1}
  #allocation0 [shape = 'u32[]', space=smem, size = 0x4, offset = 0x4, fixed_abs, tag = 'smem constant byte address 0x4 - core index']
  #allocation1 [shape = 'u32[144,128]{1,0:T(1,128)}', space=vmem, size = 0x12000, scoped, tag = 'internal scratch']
  %s0 = inlined_call_operand.vmem [shape: f32[34,48], index: 0, kind: input, shape index: {}]
  %s1 = inlined_call_operand.vmem [shape: bf16[48,32], index: 1, kind: input, shape index: {}]
  %s2 = inlined_call_operand.vmem [shape: f32[34,32], index: 2, kind: input, shape index: {}]
  %s3 = inlined_call_operand.vmem [shape: f32[2,1,32], index: 3, kind: input, shape index: {}]
  %s4 = inlined_call_operand.vmem [shape: f32[2,1,32], index: 4, kind: input, shape index: {}]
  %s5 = inlined_call_operand.vmem [shape: bf16[2,32,96], index: 5, kind: input, shape index: {}]
  %s6 = inlined_call_operand.vmem [shape: f32[2,1,96], index: 6, kind: input, shape index: {}]
  %s7 = inlined_call_operand.vmem [shape: bf16[2,32,32], index: 7, kind: input, shape index: {}]
  %s8 = inlined_call_operand.vmem [shape: f32[2,1,32], index: 8, kind: input, shape index: {}]
  %s9 = inlined_call_operand.vmem [shape: f32[2,1,32], index: 9, kind: input, shape index: {}]
  %s10 = inlined_call_operand.vmem [shape: f32[2,1,32], index: 10, kind: input, shape index: {}]
  %s11 = inlined_call_operand.vmem [shape: bf16[2,32,128], index: 11, kind: input, shape index: {}]
  %s12 = inlined_call_operand.vmem [shape: f32[2,1,128], index: 12, kind: input, shape index: {}]
  %s13 = inlined_call_operand.vmem [shape: bf16[2,128,32], index: 13, kind: input, shape index: {}]
  %s14 = inlined_call_operand.vmem [shape: f32[2,1,32], index: 14, kind: input, shape index: {}]
  %s15 = inlined_call_operand.vmem [shape: f32[1,32], index: 15, kind: input, shape index: {}]
  %s16 = inlined_call_operand.vmem [shape: f32[1,32], index: 16, kind: input, shape index: {}]
  %s17 = inlined_call_operand.hbm [shape: f32[2,16,32], index: 17, kind: output, shape index: {}]
  %s18 = sld [smem:[#allocation0]]
  $region78: #{vit_embedder_forward.1} parent=0
    _
  %s20 = ssub.s32 1, %s18
  %s21 = scalar_select 0, %s20, %s18
  $region1: #{vit_embedder_forward.1} parent=0
    #allocation2 [shape = 'u8[16384]{0}', space=vmem, size = 0x4000, scoped, tag = 'output window, operand 0, single buffered']
    #allocation3 [shape = 's32[1]{0}', space=sflag, size = 0x4, scoped, tag = 'scoped memory for vit_embedder_forward.1']
    %22 = vsyncpa [#allocation3], 0
    // Predicated region
    $region2: #{vit_embedder_forward.1} parent=1 // pred_check
      _
    $region3: #{vit_embedder_forward.1} parent=1 // pred_check_branch
      %24 = sbr.rel (0) target = $region5
    $region4: #{vit_embedder_forward.1} parent=1 // pred_region
      _
    $region5: #{vit_embedder_forward.1} parent=1 // pred_fallthru
      _
    // Predicated region
    $region6: #{vit_embedder_forward.1} parent=1 // pred_check
      _
    $region7: #{vit_embedder_forward.1} parent=1 // pred_check_branch
      %26 = sbr.rel (0) target = $region9
    $region8: #{vit_embedder_forward.1} parent=1 // pred_region
      _
    $region9: #{vit_embedder_forward.1} parent=1 // pred_fallthru
      _
    // Predicated region
    $region10: #{vit_embedder_forward.1} parent=1 // pred_check
      _
    $region11: #{vit_embedder_forward.1} parent=1 // pred_check_branch
      %28 = sbr.rel (0) target = $region13
    $region12: #{vit_embedder_forward.1} parent=1 // pred_region
      _
    $region13: #{vit_embedder_forward.1} parent=1 // pred_fallthru
      _
    // Predicated region
    $region14: #{vit_embedder_forward.1} parent=1 // pred_check
      _
    $region15: #{vit_embedder_forward.1} parent=1 // pred_check_branch
      %30 = sbr.rel (0) target = $region17
    $region16: #{vit_embedder_forward.1} parent=1 // pred_region
      _
    $region17: #{vit_embedder_forward.1} parent=1 // pred_fallthru
      _
    // Predicated region
    $region18: #{vit_embedder_forward.1} parent=1 // pred_check
      _
    $region19: #{vit_embedder_forward.1} parent=1 // pred_check_branch
      %32 = sbr.rel (0) target = $region21
    $region20: #{vit_embedder_forward.1} parent=1 // pred_region
      _
    $region21: #{vit_embedder_forward.1} parent=1 // pred_fallthru
      _
    // Predicated region
    $region22: #{vit_embedder_forward.1} parent=1 // pred_check
      _
    $region23: #{vit_embedder_forward.1} parent=1 // pred_check_branch
      %34 = sbr.rel (0) target = $region25
    $region24: #{vit_embedder_forward.1} parent=1 // pred_region
      _
    $region25: #{vit_embedder_forward.1} parent=1 // pred_fallthru
      _
    // Predicated region
    $region26: #{vit_embedder_forward.1} parent=1 // pred_check
      _
    $region27: #{vit_embedder_forward.1} parent=1 // pred_check_branch
      %36 = sbr.rel (0) target = $region29
    $region28: #{vit_embedder_forward.1} parent=1 // pred_region
      _
    $region29: #{vit_embedder_forward.1} parent=1 // pred_fallthru
      _
    // Predicated region
    $region30: #{vit_embedder_forward.1} parent=1 // pred_check
      _
    $region31: #{vit_embedder_forward.1} parent=1 // pred_check_branch
      %38 = sbr.rel (0) target = $region33
    $region32: #{vit_embedder_forward.1} parent=1 // pred_region
      _
    $region33: #{vit_embedder_forward.1} parent=1 // pred_fallthru
      _
    // Predicated region
    $region34: #{vit_embedder_forward.1} parent=1 // pred_check
      _
    $region35: #{vit_embedder_forward.1} parent=1 // pred_check_branch
      %40 = sbr.rel (0) target = $region37
    $region36: #{vit_embedder_forward.1} parent=1 // pred_region
      _
    $region37: #{vit_embedder_forward.1} parent=1 // pred_fallthru
      _
    // Predicated region
    $region38: #{vit_embedder_forward.1} parent=1 // pred_check
      _
    $region39: #{vit_embedder_forward.1} parent=1 // pred_check_branch
      %42 = sbr.rel (0) target = $region41
    $region40: #{vit_embedder_forward.1} parent=1 // pred_region
      _
    $region41: #{vit_embedder_forward.1} parent=1 // pred_fallthru
      _
    // Predicated region
    $region42: #{vit_embedder_forward.1} parent=1 // pred_check
      _
    $region43: #{vit_embedder_forward.1} parent=1 // pred_check_branch
      %44 = sbr.rel (0) target = $region45
    $region44: #{vit_embedder_forward.1} parent=1 // pred_region
      _
    $region45: #{vit_embedder_forward.1} parent=1 // pred_fallthru
      _
    // Predicated region
    $region46: #{vit_embedder_forward.1} parent=1 // pred_check
      _
    $region47: #{vit_embedder_forward.1} parent=1 // pred_check_branch
      %46 = sbr.rel (0) target = $region49
    $region48: #{vit_embedder_forward.1} parent=1 // pred_region
      _
    $region49: #{vit_embedder_forward.1} parent=1 // pred_fallthru
      _
    // Predicated region
    $region50: #{vit_embedder_forward.1} parent=1 // pred_check
      _
    $region51: #{vit_embedder_forward.1} parent=1 // pred_check_branch
      %48 = sbr.rel (0) target = $region53
    $region52: #{vit_embedder_forward.1} parent=1 // pred_region
      _
    $region53: #{vit_embedder_forward.1} parent=1 // pred_fallthru
      _
    // Predicated region
    $region54: #{vit_embedder_forward.1} parent=1 // pred_check
      _
    $region55: #{vit_embedder_forward.1} parent=1 // pred_check_branch
      %50 = sbr.rel (0) target = $region57
    $region56: #{vit_embedder_forward.1} parent=1 // pred_region
      _
    $region57: #{vit_embedder_forward.1} parent=1 // pred_fallthru
      _
    // Predicated region
    $region58: #{vit_embedder_forward.1} parent=1 // pred_check
      _
    $region59: #{vit_embedder_forward.1} parent=1 // pred_check_branch
      %52 = sbr.rel (0) target = $region61
    $region60: #{vit_embedder_forward.1} parent=1 // pred_region
      _
    $region61: #{vit_embedder_forward.1} parent=1 // pred_fallthru
      _
    // Predicated region
    $region62: #{vit_embedder_forward.1} parent=1 // pred_check
      _
    $region63: #{vit_embedder_forward.1} parent=1 // pred_check_branch
      %54 = sbr.rel (0) target = $region65
    $region64: #{vit_embedder_forward.1} parent=1 // pred_region
      _
    $region65: #{vit_embedder_forward.1} parent=1 // pred_fallthru
      _
    // Predicated region
    $region66: #{vit_embedder_forward.1} parent=1 // pred_check
      _
    $region67: #{vit_embedder_forward.1} parent=1 // pred_check_branch
      %56 = sbr.rel (0) target = $region69
    $region68: #{vit_embedder_forward.1} parent=1 // pred_region
      _
    $region69: #{vit_embedder_forward.1} parent=1 // pred_fallthru
      _
    %v58 = vld [vmem:[%s0] sm:$0xff]
    %v59 = vld [vmem:[%s0 + $0x8] sm:$0xff]
    %v60 = vld [vmem:[%s0 + $0x10] sm:$0xff]
    %v61 = vld [vmem:[%s0 + $0x18] sm:$0xff]
    %v62 = vld [vmem:[%s0 + $0x20] sm:$0x3]
    %v63 = vpack.c.bf16 %v59, %v58
    %v64 = vpack.c.bf16 %v61, %v60
    %v65 = vpack.c.bf16 %v62, %v62
    %v66 = vld [vmem:[%s1] sm:$0xf]
    %v67 = vld [vmem:[%s1 + $0x4] sm:$0xf]
    %v68 = vld [vmem:[%s1 + $0x8] sm:$0xf]
    %v69 = vld [vmem:[%s1 + $0xc] sm:$0xf]
    %v70 = vld [vmem:[%s1 + $0x10] sm:$0xf]
    %v71 = vld [vmem:[%s1 + $0x14] sm:$0xf]
    %v72 = vld [vmem:[%s2] sm:$0xff]
    %v73 = vld [vmem:[%s2 + $0x8] sm:$0xff]
    %v74 = vld [vmem:[%s2 + $0x10] sm:$0xff]
    %v75 = vld [vmem:[%s2 + $0x18] sm:$0xff]
    %v76 = vld [vmem:[%s2 + $0x20] sm:$0x3]
    %v83 = vunpack.c.l.b16 %v66
    %v84 = vunpack.c.l.b16 %v67
    %v85 = vunpack.c.l.b16 %v68
    %v86 = vunpack.c.l.b16 %v69
    %v87 = vunpack.c.l.b16 %v70
    %v88 = vunpack.c.l.b16 %v71
    %v89 = vpack.c.b16 %v84, %v83
    %v90 = vpack.c.b16 %v86, %v85
    %v91 = vpack.c.b16 %v88, %v87
    %vm95 = vcmask 392192
    %v97 = vsel %vm95, %v63, 0
    %v100 = vsel %vm95, %v64, 0
    %v103 = vsel %vm95, %v65, 0
    %105 = vmatprep.subr.bf16.mxu0 0
    %106 = vmatpush1.bf16.msra.mxu0 %v89
    %107 = vmatprep.subr.bf16.mxu0 0
    %108 = vmatpush1.bf16.msra.mxu0 %v90
    %109 = vmatprep.subr.bf16.mxu0 0
    %110 = vmatpush1.bf16.msra.mxu0 %v91
    %111 = vmatprep.subr.bf16.mxu0 0
    %112 = vmatpush1.bf16.msra.mxu0 0
    %113 = vmatprep.subr.bf16.mxu0 0
    %114 = vmatpush1.bf16.msra.mxu0 0
    %115 = vmatprep.subr.bf16.mxu0 0
    %116 = vmatpush1.bf16.msra.mxu0 0
    %117 = vmatprep.subr.bf16.mxu0 0
    %118 = vmatpush1.bf16.msra.mxu0 0
    %119 = vmatprep.subr.bf16.mxu0 0
    %120 = vmatpush1.bf16.msra.mxu0 0
    %121 = vmatprep.subr.bf16.mxu0 0
    %122 = vmatpush1.bf16.msra.mxu0 0
    %123 = vmatprep.subr.bf16.mxu0 0
    %124 = vmatpush1.bf16.msra.mxu0 0
    %125 = vmatprep.subr.bf16.mxu0 0
    %126 = vmatpush1.bf16.msra.mxu0 0
    %127 = vmatprep.subr.bf16.mxu0 0
    %128 = vmatpush1.bf16.msra.mxu0 0
    %129 = vmatprep.subr.bf16.mxu0 0
    %130 = vmatpush1.bf16.msra.mxu0 0
    %131 = vmatprep.subr.bf16.mxu0 0
    %132 = vmatpush1.bf16.msra.mxu0 0
    %133 = vmatprep.subr.bf16.mxu0 0
    %134 = vmatpush1.bf16.msra.mxu0 0
    %135 = vmatprep.subr.bf16.mxu0 0
    %136 = vmatpush1.bf16.msra.mxu0 0
    %137 = vmatprep.mubr.bf16.mxu0 0
    %138 = vmatmul.mubr.bf16.gmra.mrb[0].mxu0 %v97
    %v139 = vpop.f32.mrb[0].mxu0
    %v140 = vadd.f32 %v72, %v139
    %v141 = vpop.f32.mrb[0].mxu0
    %v142 = vpop.f32.mrb[0].mxu0
    %v143 = vadd.f32 %v73, %v142
    %v144 = vpop.f32.mrb[0].mxu0
    %145 = vmatprep.mubr.bf16.mxu0 0
    %146 = vmatmul.mubr.bf16.gmra.mrb[0].mxu0 %v100
    %v147 = vpop.f32.mrb[0].mxu0
    %v148 = vadd.f32 %v74, %v147
    %v149 = vpop.f32.mrb[0].mxu0
    %v150 = vpop.f32.mrb[0].mxu0
    %v151 = vadd.f32 %v75, %v150
    %v152 = vpop.f32.mrb[0].mxu0
    %153 = vmatprep.mubr.bf16.mxu0 0
    %154 = vmatmul.mubr.bf16.gmra.mrb[0].mxu0 %v103
    %v155 = vpop.f32.mrb[0].mxu0
    %v156 = vadd.f32 %v76, %v155
    %v157 = vpop.f32.mrb[0].mxu0
    %v158 = vpop.f32.mrb[0].mxu0
    %v159 = vpop.f32.mrb[0].mxu0
    %160 = vdwg.mxu0
    %v161 = vld [vmem:[%s3] sm:$0x1]
    %v162 = vld [vmem:[%s4] sm:$0x1]
    %vm163 = vcmask 261120
    %v164 = vsel %vm163, %v140, 0.0
    %165 = vadd.xlane.f32.xlu0 %v164
    %v166 = vpop.xlane.xlu0 %165
    %v167 = vsel %vm163, %v143, 0.0
    %168 = vadd.xlane.f32.xlu0 %v167
    %v169 = vpop.xlane.xlu0 %168
    %v170 = vsel %vm163, %v148, 0.0
    %171 = vadd.xlane.f32.xlu0 %v170
    %v172 = vpop.xlane.xlu0 %171
    %v173 = vsel %vm163, %v151, 0.0
    %174 = vadd.xlane.f32.xlu0 %v173
    %v175 = vpop.xlane.xlu0 %174
    %vm176 = vcmask 254976
    %v177 = vsel %vm176, %v156, 0.0
    %178 = vadd.xlane.f32.xlu0 %v177
    %v179 = vpop.xlane.xlu0 %178
    %v180 = vrcp.pop 32.0
    %v181 = vmul.f32 %v166, %v180
    %v182 = vmul.f32 %v169, %v180
    %v183 = vmul.f32 %v172, %v180
    %v184 = vmul.f32 %v175, %v180
    %v185 = vmul.f32 %v179, %v180
    %v186 = vsub.f32 %v140, %v181
    %v187 = vsub.f32 %v143, %v182
    %v188 = vsub.f32 %v148, %v183
    %v189 = vsub.f32 %v151, %v184
    %v190 = vsub.f32 %v156, %v185
    %v191 = vmul.f32 %v186, %v186
    %v192 = vmul.f32 %v187, %v187
    %v193 = vmul.f32 %v188, %v188
    %v194 = vmul.f32 %v189, %v189
    %v195 = vmul.f32 %v190, %v190
    %v196 = vsel %vm163, %v191, 0.0
    %197 = vadd.xlane.f32.xlu0 %v196
    %v198 = vpop.xlane.xlu0 %197
    %v199 = vsel %vm163, %v192, 0.0
    %200 = vadd.xlane.f32.xlu0 %v199
    %v201 = vpop.xlane.xlu0 %200
    %v202 = vsel %vm163, %v193, 0.0
    %203 = vadd.xlane.f32.xlu0 %v202
    %v204 = vpop.xlane.xlu0 %203
    %v205 = vsel %vm163, %v194, 0.0
    %206 = vadd.xlane.f32.xlu0 %v205
    %v207 = vpop.xlane.xlu0 %206
    %v208 = vsel %vm176, %v195, 0.0
    %209 = vadd.xlane.f32.xlu0 %v208
    %v210 = vpop.xlane.xlu0 %209
    %v211 = vmul.f32 %v198, %v180
    %v212 = vmul.f32 %v201, %v180
    %v213 = vmul.f32 %v204, %v180
    %v214 = vmul.f32 %v207, %v180
    %v215 = vmul.f32 %v210, %v180
    %v216 = vadd.f32 %v211, 1e-06
    %v217 = vadd.f32 %v212, 1e-06
    %v218 = vadd.f32 %v213, 1e-06
    %v219 = vadd.f32 %v214, 1e-06
    %v220 = vadd.f32 %v215, 1e-06
    %v221 = vrsqrt.pop %v216
    %v222 = vrsqrt.pop %v217
    %v223 = vrsqrt.pop %v218
    %v224 = vrsqrt.pop %v219
    %v225 = vrsqrt.pop %v220
    %v226 = vmul.f32 %v186, %v221
    %v227 = vmul.f32 %v187, %v222
    %v228 = vmul.f32 %v188, %v223
    %v229 = vmul.f32 %v189, %v224
    %v230 = vmul.f32 %v190, %v225
    %v232 = vlaneseq
    %v233 = vshrl.u32 %v232, 7
    %v234 = vsub.s32 0, %v233
    %v235 = vrot.slane %v161, %v234
    %v237 = vmul.f32 %v226, %v235
    %v238 = vmul.f32 %v227, %v235
    %v239 = vmul.f32 %v228, %v235
    %v240 = vmul.f32 %v229, %v235
    %v241 = vmul.f32 %v230, %v235
    %v243 = vlaneseq
    %v244 = vshrl.u32 %v243, 7
    %v245 = vsub.s32 0, %v244
    %v246 = vrot.slane %v162, %v245
    %v248 = vadd.f32 %v237, %v246
    %v249 = vadd.f32 %v238, %v246
    %v250 = vadd.f32 %v239, %v246
    %v251 = vadd.f32 %v240, %v246
    %v252 = vadd.f32 %v241, %v246
    %v253 = vpack.c.bf16 %v249, %v248
    %v254 = vpack.c.bf16 %v251, %v250
    %v255 = vpack.c.bf16 %v252, %v252
    %v256 = vld [vmem:[%s5] sm:$0xf]
    %v257 = vld [vmem:[%s5 + $0x4] sm:$0xf]
    %v258 = vld [vmem:[%s5 + $0x8] sm:$0xf]
    %v259 = vld [vmem:[%s5 + $0xc] sm:$0xf]
    %v260 = vld [vmem:[%s6] sm:$0x1]
    %v262 = vlaneseq
    %v263 = vshrl.u32 %v262, 7
    %v264 = vsub.s32 0, %v263
    %v265 = vrot.slane %v260, %v264
    %v271 = vunpack.c.l.b16 %v256
    %v272 = vunpack.c.l.b16 %v257
    %v273 = vunpack.c.l.b16 %v258
    %v274 = vunpack.c.l.b16 %v259
    %v275 = vpack.c.b16 %v272, %v271
    %v276 = vpack.c.b16 %v274, %v273
    %v280 = vsel %vm163, %v253, 0
    %v283 = vsel %vm163, %v254, 0
    %v286 = vsel %vm163, %v255, 0
    %288 = vmatprep.subr.bf16.mxu0 0
    %289 = vmatpush1.bf16.msra.mxu0 %v275
    %290 = vmatprep.subr.bf16.mxu0 0
    %291 = vmatpush1.bf16.msra.mxu0 %v276
    %292 = vmatprep.subr.bf16.mxu0 0
    %293 = vmatpush1.bf16.msra.mxu0 0
    %294 = vmatprep.subr.bf16.mxu0 0
    %295 = vmatpush1.bf16.msra.mxu0 0
    %296 = vmatprep.subr.bf16.mxu0 0
    %297 = vmatpush1.bf16.msra.mxu0 0
    %298 = vmatprep.subr.bf16.mxu0 0
    %299 = vmatpush1.bf16.msra.mxu0 0
    %300 = vmatprep.subr.bf16.mxu0 0
    %301 = vmatpush1.bf16.msra.mxu0 0
    %302 = vmatprep.subr.bf16.mxu0 0
    %303 = vmatpush1.bf16.msra.mxu0 0
    %304 = vmatprep.subr.bf16.mxu0 0
    %305 = vmatpush1.bf16.msra.mxu0 0
    %306 = vmatprep.subr.bf16.mxu0 0
    %307 = vmatpush1.bf16.msra.mxu0 0
    %308 = vmatprep.subr.bf16.mxu0 0
    %309 = vmatpush1.bf16.msra.mxu0 0
    %310 = vmatprep.subr.bf16.mxu0 0
    %311 = vmatpush1.bf16.msra.mxu0 0
    %312 = vmatprep.subr.bf16.mxu0 0
    %313 = vmatpush1.bf16.msra.mxu0 0
    %314 = vmatprep.subr.bf16.mxu0 0
    %315 = vmatpush1.bf16.msra.mxu0 0
    %316 = vmatprep.subr.bf16.mxu0 0
    %317 = vmatpush1.bf16.msra.mxu0 0
    %318 = vmatprep.subr.bf16.mxu0 0
    %319 = vmatpush1.bf16.msra.mxu0 0
    %320 = vmatprep.mubr.bf16.mxu0 0
    %321 = vmatmul.mubr.bf16.gmra.mrb[0].mxu0 %v280
    %v322 = vpop.f32.mrb[0].mxu0
    %v323 = vadd.f32 %v265, %v322
    %v324 = vpop.f32.mrb[0].mxu0
    %v325 = vpop.f32.mrb[0].mxu0
    %v326 = vadd.f32 %v265, %v325
    %v327 = vpop.f32.mrb[0].mxu0
    %328 = vmatprep.mubr.bf16.mxu0 0
    %329 = vmatmul.mubr.bf16.gmra.mrb[0].mxu0 %v283
    %v330 = vpop.f32.mrb[0].mxu0
    %v331 = vadd.f32 %v265, %v330
    %v332 = vpop.f32.mrb[0].mxu0
    %v333 = vpop.f32.mrb[0].mxu0
    %v334 = vadd.f32 %v265, %v333
    %v335 = vpop.f32.mrb[0].mxu0
    %336 = vmatprep.mubr.bf16.mxu0 0
    %337 = vmatmul.mubr.bf16.gmra.mrb[0].mxu0 %v286
    %v338 = vpop.f32.mrb[0].mxu0
    %v339 = vadd.f32 %v265, %v338
    %v340 = vpop.f32.mrb[0].mxu0
    %v341 = vpop.f32.mrb[0].mxu0
    %v342 = vpop.f32.mrb[0].mxu0
    %343 = vdwg.mxu0
    %v344 = vpack.c.bf16 %v326, %v323
    %v345 = vpack.c.bf16 %v331, %v331
    %348 = vrot.lane.b32.xlu0 %v344, 96
    %v349 = vpop.permute.xlu0 %348
    %350 = vrot.lane.b32.xlu0 %v345, 96
    %v351 = vpop.permute.xlu0 %350
    %vm352 = vcmask 64512
    %v354 = vsel %vm352, %v344, 0
    %v357 = vsel %vm352, %v345, 0
    %v360 = vsel %vm352, %v349, 0
    %v363 = vsel %vm352, %v351, 0
    %365 = vmatprep.subr.bf16.mxu0 0
    %366 = vmatpush1.bf16.xpose.msra.mxu0 %v360
    %367 = vmatprep.subr.bf16.mxu0 0
    %368 = vmatpush1.bf16.xpose.msra.mxu0 %v363
    %369 = vmatprep.subr.bf16.mxu0 0
    %370 = vmatpush1.bf16.xpose.msra.mxu0 0
    %371 = vmatprep.subr.bf16.mxu0 0
    %372 = vmatpush1.bf16.xpose.msra.mxu0 0
    %373 = vmatprep.subr.bf16.mxu0 0
    %374 = vmatpush1.bf16.xpose.msra.mxu0 0
    %375 = vmatprep.subr.bf16.mxu0 0
    %376 = vmatpush1.bf16.xpose.msra.mxu0 0
    %377 = vmatprep.subr.bf16.mxu0 0
    %378 = vmatpush1.bf16.xpose.msra.mxu0 0
    %379 = vmatprep.subr.bf16.mxu0 0
    %380 = vmatpush1.bf16.xpose.msra.mxu0 0
    %381 = vmatprep.subr.bf16.mxu0 0
    %382 = vmatpush1.bf16.xpose.msra.mxu0 0
    %383 = vmatprep.subr.bf16.mxu0 0
    %384 = vmatpush1.bf16.xpose.msra.mxu0 0
    %385 = vmatprep.subr.bf16.mxu0 0
    %386 = vmatpush1.bf16.xpose.msra.mxu0 0
    %387 = vmatprep.subr.bf16.mxu0 0
    %388 = vmatpush1.bf16.xpose.msra.mxu0 0
    %389 = vmatprep.subr.bf16.mxu0 0
    %390 = vmatpush1.bf16.xpose.msra.mxu0 0
    %391 = vmatprep.subr.bf16.mxu0 0
    %392 = vmatpush1.bf16.xpose.msra.mxu0 0
    %393 = vmatprep.subr.bf16.mxu0 0
    %394 = vmatpush1.bf16.xpose.msra.mxu0 0
    %395 = vmatprep.subr.bf16.mxu0 0
    %396 = vmatpush1.bf16.xpose.msra.mxu0 0
    %397 = vmatprep.mubr.bf16.mxu0 0
    %398 = vmatmul.mubr.bf16.gmra.mrb[0].mxu0 %v354
    %v399 = vpop.f32.mrb[0].mxu0
    %v400 = vadd.f32 0.0, %v399
    %v401 = vpop.f32.mrb[0].mxu0
    %v402 = vpop.f32.mrb[0].mxu0
    %v403 = vadd.f32 0.0, %v402
    %v404 = vpop.f32.mrb[0].mxu0
    %405 = vmatprep.mubr.bf16.mxu0 0
    %406 = vmatmul.mubr.bf16.gmra.mrb[0].mxu0 %v357
    %v407 = vpop.f32.mrb[0].mxu0
    %v408 = vadd.f32 0.0, %v407
    %v409 = vpop.f32.mrb[0].mxu0
    %v410 = vpop.f32.mrb[0].mxu0
    %v411 = vpop.f32.mrb[0].mxu0
    %412 = vdwg.mxu0
    %vm413 = vcmask 138240
    %v414 = vsel %vm413, %v400, -inf
    %415 = vmax.xlane.f32.xlu0 %v414
    %v416 = vpop.xlane.xlu0 %415
    %v417 = vsel %vm413, %v403, -inf
    %418 = vmax.xlane.f32.xlu0 %v417
    %v419 = vpop.xlane.xlu0 %418
    %vm420 = vcmask 131072
    %v421 = vsel %vm420, %v408, -inf
    %422 = vmax.xlane.f32.xlu0 %v421
    %v423 = vpop.xlane.xlu0 %422
    %v424 = vsub.f32 %v400, %v416
    %v425 = vsub.f32 %v403, %v419
    %v426 = vsub.f32 %v408, %v423
    %v427 = vmul.f32 %v424, 1.442695
    %v428 = vpow.pop %v427
    %v429 = vmul.f32 %v425, 1.442695
    %v430 = vpow.pop %v429
    %v431 = vmul.f32 %v426, 1.442695
    %v432 = vpow.pop %v431
    %v433 = vsel %vm413, %v428, 0.0
    %434 = vadd.xlane.f32.xlu0 %v433
    %v435 = vpop.xlane.xlu0 %434
    %v436 = vsel %vm413, %v430, 0.0
    %437 = vadd.xlane.f32.xlu0 %v436
    %v438 = vpop.xlane.xlu0 %437
    %v439 = vsel %vm420, %v432, 0.0
    %440 = vadd.xlane.f32.xlu0 %v439
    %v441 = vpop.xlane.xlu0 %440
    %v442 = vrcp.pop %v435
    %v443 = vrcp.pop %v438
    %v444 = vrcp.pop %v441
    %v445 = vmul.f32 %v428, %v442
    %v446 = vmul.f32 %v430, %v443
    %v447 = vmul.f32 %v432, %v444
    %v448 = vpack.c.bf16 %v446, %v445
    %v449 = vpack.c.bf16 %v447, %v447
    %450 = vrot.lane.b32.xlu0 %v344, 64
    %v451 = vpop.permute.xlu0 %450
    %452 = vrot.lane.b32.xlu0 %v345, 64
    %v453 = vpop.permute.xlu0 %452
    %v456 = vsel %vm413, %v448, 0
    %v459 = vsel %vm413, %v449, 0
    %vm461 = vcmask 1040384
    %v462 = vsel 0, 4294967295, 65535
    %v463 = vsel %vm461, %v462, 0
    %v465 = vand.u32 %v453, %v463
    %467 = vmatprep.subr.bf16.mxu0 0
    %468 = vmatpush1.bf16.msra.mxu0 %v451
    %469 = vmatprep.subr.bf16.mxu0 0
    %470 = vmatpush1.bf16.msra.mxu0 %v465
    %471 = vmatprep.subr.bf16.mxu0 0
    %472 = vmatpush1.bf16.msra.mxu0 0
    %473 = vmatprep.subr.bf16.mxu0 0
    %474 = vmatpush1.bf16.msra.mxu0 0
    %475 = vmatprep.subr.bf16.mxu0 0
    %476 = vmatpush1.bf16.msra.mxu0 0
    %477 = vmatprep.subr.bf16.mxu0 0
    %478 = vmatpush1.bf16.msra.mxu0 0
    %479 = vmatprep.subr.bf16.mxu0 0
    %480 = vmatpush1.bf16.msra.mxu0 0
    %481 = vmatprep.subr.bf16.mxu0 0
    %482 = vmatpush1.bf16.msra.mxu0 0
    %483 = vmatprep.subr.bf16.mxu0 0
    %484 = vmatpush1.bf16.msra.mxu0 0
    %485 = vmatprep.subr.bf16.mxu0 0
    %486 = vmatpush1.bf16.msra.mxu0 0
    %487 = vmatprep.subr.bf16.mxu0 0
    %488 = vmatpush1.bf16.msra.mxu0 0
    %489 = vmatprep.subr.bf16.mxu0 0
    %490 = vmatpush1.bf16.msra.mxu0 0
    %491 = vmatprep.subr.bf16.mxu0 0
    %492 = vmatpush1.bf16.msra.mxu0 0
    %493 = vmatprep.subr.bf16.mxu0 0
    %494 = vmatpush1.bf16.msra.mxu0 0
    %495 = vmatprep.subr.bf16.mxu0 0
    %496 = vmatpush1.bf16.msra.mxu0 0
    %497 = vmatprep.subr.bf16.mxu0 0
    %498 = vmatpush1.bf16.msra.mxu0 0
    %499 = vmatprep.mubr.bf16.mxu0 0
    %500 = vmatmul.mubr.bf16.gmra.mrb[0].mxu0 %v456
    %v501 = vpop.f32.mrb[0].mxu0
    %v502 = vadd.f32 0.0, %v501
    %v503 = vpop.f32.mrb[0].mxu0
    %v504 = vpop.f32.mrb[0].mxu0
    %v505 = vadd.f32 0.0, %v504
    %v506 = vpop.f32.mrb[0].mxu0
    %507 = vmatprep.mubr.bf16.mxu0 0
    %508 = vmatmul.mubr.bf16.gmra.mrb[0].mxu0 %v459
    %v509 = vpop.f32.mrb[0].mxu0
    %v510 = vadd.f32 0.0, %v509
    %v511 = vpop.f32.mrb[0].mxu0
    %v512 = vpop.f32.mrb[0].mxu0
    %v513 = vpop.f32.mrb[0].mxu0
    %514 = vdwg.mxu0
    %515 = vrot.lane.b32.xlu0 %v344, 120
    %v516 = vpop.permute.xlu0 %515
    %517 = vrot.lane.b32.xlu0 %v345, 120
    %v518 = vpop.permute.xlu0 %517
    %519 = vrot.lane.b32.xlu0 %v344, 88
    %v520 = vpop.permute.xlu0 %519
    %521 = vrot.lane.b32.xlu0 %v345, 88
    %v522 = vpop.permute.xlu0 %521
    %v524 = vsel %vm352, %v516, 0
    %v527 = vsel %vm352, %v518, 0
    %v530 = vsel %vm352, %v520, 0
    %v533 = vsel %vm352, %v522, 0
    %535 = vmatprep.subr.bf16.mxu0 0
    %536 = vmatpush1.bf16.xpose.msra.mxu0 %v530
    %537 = vmatprep.subr.bf16.mxu0 0
    %538 = vmatpush1.bf16.xpose.msra.mxu0 %v533
    %539 = vmatprep.subr.bf16.mxu0 0
    %540 = vmatpush1.bf16.xpose.msra.mxu0 0
    %541 = vmatprep.subr.bf16.mxu0 0
    %542 = vmatpush1.bf16.xpose.msra.mxu0 0
    %543 = vmatprep.subr.bf16.mxu0 0
    %544 = vmatpush1.bf16.xpose.msra.mxu0 0
    %545 = vmatprep.subr.bf16.mxu0 0
    %546 = vmatpush1.bf16.xpose.msra.mxu0 0
    %547 = vmatprep.subr.bf16.mxu0 0
    %548 = vmatpush1.bf16.xpose.msra.mxu0 0
    %549 = vmatprep.subr.bf16.mxu0 0
    %550 = vmatpush1.bf16.xpose.msra.mxu0 0
    %551 = vmatprep.subr.bf16.mxu0 0
    %552 = vmatpush1.bf16.xpose.msra.mxu0 0
    %553 = vmatprep.subr.bf16.mxu0 0
    %554 = vmatpush1.bf16.xpose.msra.mxu0 0
    %555 = vmatprep.subr.bf16.mxu0 0
    %556 = vmatpush1.bf16.xpose.msra.mxu0 0
    %557 = vmatprep.subr.bf16.mxu0 0
    %558 = vmatpush1.bf16.xpose.msra.mxu0 0
    %559 = vmatprep.subr.bf16.mxu0 0
    %560 = vmatpush1.bf16.xpose.msra.mxu0 0
    %561 = vmatprep.subr.bf16.mxu0 0
    %562 = vmatpush1.bf16.xpose.msra.mxu0 0
    %563 = vmatprep.subr.bf16.mxu0 0
    %564 = vmatpush1.bf16.xpose.msra.mxu0 0
    %565 = vmatprep.subr.bf16.mxu0 0
    %566 = vmatpush1.bf16.xpose.msra.mxu0 0
    %567 = vmatprep.mubr.bf16.mxu0 0
    %568 = vmatmul.mubr.bf16.gmra.mrb[0].mxu0 %v524
    %v569 = vpop.f32.mrb[0].mxu0
    %v570 = vadd.f32 0.0, %v569
    %v571 = vpop.f32.mrb[0].mxu0
    %v572 = vpop.f32.mrb[0].mxu0
    %v573 = vadd.f32 0.0, %v572
    %v574 = vpop.f32.mrb[0].mxu0
    %575 = vmatprep.mubr.bf16.mxu0 0
    %576 = vmatmul.mubr.bf16.gmra.mrb[0].mxu0 %v527
    %v577 = vpop.f32.mrb[0].mxu0
    %v578 = vadd.f32 0.0, %v577
    %v579 = vpop.f32.mrb[0].mxu0
    %v580 = vpop.f32.mrb[0].mxu0
    %v581 = vpop.f32.mrb[0].mxu0
    %582 = vdwg.mxu0
    %v583 = vsel %vm413, %v570, -inf
    %584 = vmax.xlane.f32.xlu0 %v583
    %v585 = vpop.xlane.xlu0 %584
    %v586 = vsel %vm413, %v573, -inf
    %587 = vmax.xlane.f32.xlu0 %v586
    %v588 = vpop.xlane.xlu0 %587
    %v589 = vsel %vm420, %v578, -inf
    %590 = vmax.xlane.f32.xlu0 %v589
    %v591 = vpop.xlane.xlu0 %590
    %v592 = vsub.f32 %v570, %v585
    %v593 = vsub.f32 %v573, %v588
    %v594 = vsub.f32 %v578, %v591
    %v595 = vmul.f32 %v592, 1.442695
    %v596 = vpow.pop %v595
    %v597 = vmul.f32 %v593, 1.442695
    %v598 = vpow.pop %v597
    %v599 = vmul.f32 %v594, 1.442695
    %v600 = vpow.pop %v599
    %v601 = vsel %vm413, %v596, 0.0
    %602 = vadd.xlane.f32.xlu0 %v601
    %v603 = vpop.xlane.xlu0 %602
    %v604 = vsel %vm413, %v598, 0.0
    %605 = vadd.xlane.f32.xlu0 %v604
    %v606 = vpop.xlane.xlu0 %605
    %v607 = vsel %vm420, %v600, 0.0
    %608 = vadd.xlane.f32.xlu0 %v607
    %v609 = vpop.xlane.xlu0 %608
    %v610 = vrcp.pop %v603
    %v611 = vrcp.pop %v606
    %v612 = vrcp.pop %v609
    %v613 = vmul.f32 %v596, %v610
    %v614 = vmul.f32 %v598, %v611
    %v615 = vmul.f32 %v600, %v612
    %v616 = vpack.c.bf16 %v614, %v613
    %v617 = vpack.c.bf16 %v615, %v615
    %618 = vrot.lane.b32.xlu0 %v344, 56
    %v619 = vpop.permute.xlu0 %618
    %620 = vrot.lane.b32.xlu0 %v345, 56
    %v621 = vpop.permute.xlu0 %620
    %v624 = vsel %vm413, %v616, 0
    %v627 = vsel %vm413, %v617, 0
    %v630 = vand.u32 %v621, %v463
    %632 = vmatprep.subr.bf16.mxu0 0
    %633 = vmatpush1.bf16.msra.mxu0 %v619
    %634 = vmatprep.subr.bf16.mxu0 0
    %635 = vmatpush1.bf16.msra.mxu0 %v630
    %636 = vmatprep.subr.bf16.mxu0 0
    %637 = vmatpush1.bf16.msra.mxu0 0
    %638 = vmatprep.subr.bf16.mxu0 0
    %639 = vmatpush1.bf16.msra.mxu0 0
    %640 = vmatprep.subr.bf16.mxu0 0
    %641 = vmatpush1.bf16.msra.mxu0 0
    %642 = vmatprep.subr.bf16.mxu0 0
    %643 = vmatpush1.bf16.msra.mxu0 0
    %644 = vmatprep.subr.bf16.mxu0 0
    %645 = vmatpush1.bf16.msra.mxu0 0
    %646 = vmatprep.subr.bf16.mxu0 0
    %647 = vmatpush1.bf16.msra.mxu0 0
    %648 = vmatprep.subr.bf16.mxu0 0
    %649 = vmatpush1.bf16.msra.mxu0 0
    %650 = vmatprep.subr.bf16.mxu0 0
    %651 = vmatpush1.bf16.msra.mxu0 0
    %652 = vmatprep.subr.bf16.mxu0 0
    %653 = vmatpush1.bf16.msra.mxu0 0
    %654 = vmatprep.subr.bf16.mxu0 0
    %655 = vmatpush1.bf16.msra.mxu0 0
    %656 = vmatprep.subr.bf16.mxu0 0
    %657 = vmatpush1.bf16.msra.mxu0 0
    %658 = vmatprep.subr.bf16.mxu0 0
    %659 = vmatpush1.bf16.msra.mxu0 0
    %660 = vmatprep.subr.bf16.mxu0 0
    %661 = vmatpush1.bf16.msra.mxu0 0
    %662 = vmatprep.subr.bf16.mxu0 0
    %663 = vmatpush1.bf16.msra.mxu0 0
    %664 = vmatprep.mubr.bf16.mxu0 0
    %665 = vmatmul.mubr.bf16.gmra.mrb[0].mxu0 %v624
    %v666 = vpop.f32.mrb[0].mxu0
    %v667 = vadd.f32 0.0, %v666
    %v668 = vpop.f32.mrb[0].mxu0
    %v669 = vpop.f32.mrb[0].mxu0
    %v670 = vadd.f32 0.0, %v669
    %v671 = vpop.f32.mrb[0].mxu0
    %672 = vmatprep.mubr.bf16.mxu0 0
    %673 = vmatmul.mubr.bf16.gmra.mrb[0].mxu0 %v627
    %v674 = vpop.f32.mrb[0].mxu0
    %v675 = vadd.f32 0.0, %v674
    %v676 = vpop.f32.mrb[0].mxu0
    %v677 = vpop.f32.mrb[0].mxu0
    %v678 = vpop.f32.mrb[0].mxu0
    %679 = vdwg.mxu0
    %680 = vrot.lane.b32.xlu0 %v344, 112
    %v681 = vpop.permute.xlu0 %680
    %682 = vrot.lane.b32.xlu0 %v345, 112
    %v683 = vpop.permute.xlu0 %682
    %684 = vrot.lane.b32.xlu0 %v344, 80
    %v685 = vpop.permute.xlu0 %684
    %686 = vrot.lane.b32.xlu0 %v345, 80
    %v687 = vpop.permute.xlu0 %686
    %v689 = vsel %vm352, %v681, 0
    %v692 = vsel %vm352, %v683, 0
    %v695 = vsel %vm352, %v685, 0
    %v698 = vsel %vm352, %v687, 0
    %700 = vmatprep.subr.bf16.mxu0 0
    %701 = vmatpush1.bf16.xpose.msra.mxu0 %v695
    %702 = vmatprep.subr.bf16.mxu0 0
    %703 = vmatpush1.bf16.xpose.msra.mxu0 %v698
    %704 = vmatprep.subr.bf16.mxu0 0
    %705 = vmatpush1.bf16.xpose.msra.mxu0 0
    %706 = vmatprep.subr.bf16.mxu0 0
    %707 = vmatpush1.bf16.xpose.msra.mxu0 0
    %708 = vmatprep.subr.bf16.mxu0 0
    %709 = vmatpush1.bf16.xpose.msra.mxu0 0
    %710 = vmatprep.subr.bf16.mxu0 0
    %711 = vmatpush1.bf16.xpose.msra.mxu0 0
    %712 = vmatprep.subr.bf16.mxu0 0
    %713 = vmatpush1.bf16.xpose.msra.mxu0 0
    %714 = vmatprep.subr.bf16.mxu0 0
    %715 = vmatpush1.bf16.xpose.msra.mxu0 0
    %716 = vmatprep.subr.bf16.mxu0 0
    %717 = vmatpush1.bf16.xpose.msra.mxu0 0
    %718 = vmatprep.subr.bf16.mxu0 0
    %719 = vmatpush1.bf16.xpose.msra.mxu0 0
    %720 = vmatprep.subr.bf16.mxu0 0
    %721 = vmatpush1.bf16.xpose.msra.mxu0 0
    %722 = vmatprep.subr.bf16.mxu0 0
    %723 = vmatpush1.bf16.xpose.msra.mxu0 0
    %724 = vmatprep.subr.bf16.mxu0 0
    %725 = vmatpush1.bf16.xpose.msra.mxu0 0
    %726 = vmatprep.subr.bf16.mxu0 0
    %727 = vmatpush1.bf16.xpose.msra.mxu0 0
    %728 = vmatprep.subr.bf16.mxu0 0
    %729 = vmatpush1.bf16.xpose.msra.mxu0 0
    %730 = vmatprep.subr.bf16.mxu0 0
    %731 = vmatpush1.bf16.xpose.msra.mxu0 0
    %732 = vmatprep.mubr.bf16.mxu0 0
    %733 = vmatmul.mubr.bf16.gmra.mrb[0].mxu0 %v689
    %v734 = vpop.f32.mrb[0].mxu0
    %v735 = vadd.f32 0.0, %v734
    %v736 = vpop.f32.mrb[0].mxu0
    %v737 = vpop.f32.mrb[0].mxu0
    %v738 = vadd.f32 0.0, %v737
    %v739 = vpop.f32.mrb[0].mxu0
    %740 = vmatprep.mubr.bf16.mxu0 0
    %741 = vmatmul.mubr.bf16.gmra.mrb[0].mxu0 %v692
    %v742 = vpop.f32.mrb[0].mxu0
    %v743 = vadd.f32 0.0, %v742
    %v744 = vpop.f32.mrb[0].mxu0
    %v745 = vpop.f32.mrb[0].mxu0
    %v746 = vpop.f32.mrb[0].mxu0
    %747 = vdwg.mxu0
    %v748 = vsel %vm413, %v735, -inf
    %749 = vmax.xlane.f32.xlu0 %v748
    %v750 = vpop.xlane.xlu0 %749
    %v751 = vsel %vm413, %v738, -inf
    %752 = vmax.xlane.f32.xlu0 %v751
    %v753 = vpop.xlane.xlu0 %752
    %v754 = vsel %vm420, %v743, -inf
    %755 = vmax.xlane.f32.xlu0 %v754
    %v756 = vpop.xlane.xlu0 %755
    %v757 = vsub.f32 %v735, %v750
    %v758 = vsub.f32 %v738, %v753
    %v759 = vsub.f32 %v743, %v756
    %v760 = vmul.f32 %v757, 1.442695
    %v761 = vpow.pop %v760
    %v762 = vmul.f32 %v758, 1.442695
    %v763 = vpow.pop %v762
    %v764 = vmul.f32 %v759, 1.442695
    %v765 = vpow.pop %v764
    %v766 = vsel %vm413, %v761, 0.0
    %767 = vadd.xlane.f32.xlu0 %v766
    %v768 = vpop.xlane.xlu0 %767
    %v769 = vsel %vm413, %v763, 0.0
    %770 = vadd.xlane.f32.xlu0 %v769
    %v771 = vpop.xlane.xlu0 %770
    %v772 = vsel %vm420, %v765, 0.0
    %773 = vadd.xlane.f32.xlu0 %v772
    %v774 = vpop.xlane.xlu0 %773
    %v775 = vrcp.pop %v768
    %v776 = vrcp.pop %v771
    %v777 = vrcp.pop %v774
    %v778 = vmul.f32 %v761, %v775
    %v779 = vmul.f32 %v763, %v776
    %v780 = vmul.f32 %v765, %v777
    %v781 = vpack.c.bf16 %v779, %v778
    %v782 = vpack.c.bf16 %v780, %v780
    %783 = vrot.lane.b32.xlu0 %v344, 48
    %v784 = vpop.permute.xlu0 %783
    %785 = vrot.lane.b32.xlu0 %v345, 48
    %v786 = vpop.permute.xlu0 %785
    %v789 = vsel %vm413, %v781, 0
    %v792 = vsel %vm413, %v782, 0
    %v795 = vand.u32 %v786, %v463
    %797 = vmatprep.subr.bf16.mxu0 0
    %798 = vmatpush1.bf16.msra.mxu0 %v784
    %799 = vmatprep.subr.bf16.mxu0 0
    %800 = vmatpush1.bf16.msra.mxu0 %v795
    %801 = vmatprep.subr.bf16.mxu0 0
    %802 = vmatpush1.bf16.msra.mxu0 0
    %803 = vmatprep.subr.bf16.mxu0 0
    %804 = vmatpush1.bf16.msra.mxu0 0
    %805 = vmatprep.subr.bf16.mxu0 0
    %806 = vmatpush1.bf16.msra.mxu0 0
    %807 = vmatprep.subr.bf16.mxu0 0
    %808 = vmatpush1.bf16.msra.mxu0 0
    %809 = vmatprep.subr.bf16.mxu0 0
    %810 = vmatpush1.bf16.msra.mxu0 0
    %811 = vmatprep.subr.bf16.mxu0 0
    %812 = vmatpush1.bf16.msra.mxu0 0
    %813 = vmatprep.subr.bf16.mxu0 0
    %814 = vmatpush1.bf16.msra.mxu0 0
    %815 = vmatprep.subr.bf16.mxu0 0
    %816 = vmatpush1.bf16.msra.mxu0 0
    %817 = vmatprep.subr.bf16.mxu0 0
    %818 = vmatpush1.bf16.msra.mxu0 0
    %819 = vmatprep.subr.bf16.mxu0 0
    %820 = vmatpush1.bf16.msra.mxu0 0
    %821 = vmatprep.subr.bf16.mxu0 0
    %822 = vmatpush1.bf16.msra.mxu0 0
    %823 = vmatprep.subr.bf16.mxu0 0
    %824 = vmatpush1.bf16.msra.mxu0 0
    %825 = vmatprep.subr.bf16.mxu0 0
    %826 = vmatpush1.bf16.msra.mxu0 0
    %827 = vmatprep.subr.bf16.mxu0 0
    %828 = vmatpush1.bf16.msra.mxu0 0
    %829 = vmatprep.mubr.bf16.mxu0 0
    %830 = vmatmul.mubr.bf16.gmra.mrb[0].mxu0 %v789
    %v831 = vpop.f32.mrb[0].mxu0
    %v832 = vadd.f32 0.0, %v831
    %v833 = vpop.f32.mrb[0].mxu0
    %v834 = vpop.f32.mrb[0].mxu0
    %v835 = vadd.f32 0.0, %v834
    %v836 = vpop.f32.mrb[0].mxu0
    %837 = vmatprep.mubr.bf16.mxu0 0
    %838 = vmatmul.mubr.bf16.gmra.mrb[0].mxu0 %v792
    %v839 = vpop.f32.mrb[0].mxu0
    %v840 = vadd.f32 0.0, %v839
    %v841 = vpop.f32.mrb[0].mxu0
    %v842 = vpop.f32.mrb[0].mxu0
    %v843 = vpop.f32.mrb[0].mxu0
    %844 = vdwg.mxu0
    %845 = vrot.lane.b32.xlu0 %v344, 104
    %v846 = vpop.permute.xlu0 %845
    %847 = vrot.lane.b32.xlu0 %v345, 104
    %v848 = vpop.permute.xlu0 %847
    %849 = vrot.lane.b32.xlu0 %v344, 72
    %v850 = vpop.permute.xlu0 %849
    %851 = vrot.lane.b32.xlu0 %v345, 72
    %v852 = vpop.permute.xlu0 %851
    %v854 = vsel %vm352, %v846, 0
    %v857 = vsel %vm352, %v848, 0
    %v860 = vsel %vm352, %v850, 0
    %v863 = vsel %vm352, %v852, 0
    %865 = vmatprep.subr.bf16.mxu0 0
    %866 = vmatpush1.bf16.xpose.msra.mxu0 %v860
    %867 = vmatprep.subr.bf16.mxu0 0
    %868 = vmatpush1.bf16.xpose.msra.mxu0 %v863
    %869 = vmatprep.subr.bf16.mxu0 0
    %870 = vmatpush1.bf16.xpose.msra.mxu0 0
    %871 = vmatprep.subr.bf16.mxu0 0
    %872 = vmatpush1.bf16.xpose.msra.mxu0 0
    %873 = vmatprep.subr.bf16.mxu0 0
    %874 = vmatpush1.bf16.xpose.msra.mxu0 0
    %875 = vmatprep.subr.bf16.mxu0 0
    %876 = vmatpush1.bf16.xpose.msra.mxu0 0
    %877 = vmatprep.subr.bf16.mxu0 0
    %878 = vmatpush1.bf16.xpose.msra.mxu0 0
    %879 = vmatprep.subr.bf16.mxu0 0
    %880 = vmatpush1.bf16.xpose.msra.mxu0 0
    %881 = vmatprep.subr.bf16.mxu0 0
    %882 = vmatpush1.bf16.xpose.msra.mxu0 0
    %883 = vmatprep.subr.bf16.mxu0 0
    %884 = vmatpush1.bf16.xpose.msra.mxu0 0
    %885 = vmatprep.subr.bf16.mxu0 0
    %886 = vmatpush1.bf16.xpose.msra.mxu0 0
    %887 = vmatprep.subr.bf16.mxu0 0
    %888 = vmatpush1.bf16.xpose.msra.mxu0 0
    %889 = vmatprep.subr.bf16.mxu0 0
    %890 = vmatpush1.bf16.xpose.msra.mxu0 0
    %891 = vmatprep.subr.bf16.mxu0 0
    %892 = vmatpush1.bf16.xpose.msra.mxu0 0
    %893 = vmatprep.subr.bf16.mxu0 0
    %894 = vmatpush1.bf16.xpose.msra.mxu0 0
    %895 = vmatprep.subr.bf16.mxu0 0
    %896 = vmatpush1.bf16.xpose.msra.mxu0 0
    %897 = vmatprep.mubr.bf16.mxu0 0
    %898 = vmatmul.mubr.bf16.gmra.mrb[0].mxu0 %v854
    %v899 = vpop.f32.mrb[0].mxu0
    %v900 = vadd.f32 0.0, %v899
    %v901 = vpop.f32.mrb[0].mxu0
    %v902 = vpop.f32.mrb[0].mxu0
    %v903 = vadd.f32 0.0, %v902
    %v904 = vpop.f32.mrb[0].mxu0
    %905 = vmatprep.mubr.bf16.mxu0 0
    %906 = vmatmul.mubr.bf16.gmra.mrb[0].mxu0 %v857
    %v907 = vpop.f32.mrb[0].mxu0
    %v908 = vadd.f32 0.0, %v907
    %v909 = vpop.f32.mrb[0].mxu0
    %v910 = vpop.f32.mrb[0].mxu0
    %v911 = vpop.f32.mrb[0].mxu0
    %912 = vdwg.mxu0
    %v913 = vsel %vm413, %v900, -inf
    %914 = vmax.xlane.f32.xlu0 %v913
    %v915 = vpop.xlane.xlu0 %914
    %v916 = vsel %vm413, %v903, -inf
    %917 = vmax.xlane.f32.xlu0 %v916
    %v918 = vpop.xlane.xlu0 %917
    %v919 = vsel %vm420, %v908, -inf
    %920 = vmax.xlane.f32.xlu0 %v919
    %v921 = vpop.xlane.xlu0 %920
    %v922 = vsub.f32 %v900, %v915
    %v923 = vsub.f32 %v903, %v918
    %v924 = vsub.f32 %v908, %v921
    %v925 = vmul.f32 %v922, 1.442695
    %v926 = vpow.pop %v925
    %v927 = vmul.f32 %v923, 1.442695
    %v928 = vpow.pop %v927
    %v929 = vmul.f32 %v924, 1.442695
    %v930 = vpow.pop %v929
    %v931 = vsel %vm413, %v926, 0.0
    %932 = vadd.xlane.f32.xlu0 %v931
    %v933 = vpop.xlane.xlu0 %932
    %v934 = vsel %vm413, %v928, 0.0
    %935 = vadd.xlane.f32.xlu0 %v934
    %v936 = vpop.xlane.xlu0 %935
    %v937 = vsel %vm420, %v930, 0.0
    %938 = vadd.xlane.f32.xlu0 %v937
    %v939 = vpop.xlane.xlu0 %938
    %v940 = vrcp.pop %v933
    %v941 = vrcp.pop %v936
    %v942 = vrcp.pop %v939
    %v943 = vmul.f32 %v926, %v940
    %v944 = vmul.f32 %v928, %v941
    %v945 = vmul.f32 %v930, %v942
    %v946 = vpack.c.bf16 %v944, %v943
    %v947 = vpack.c.bf16 %v945, %v945
    %948 = vrot.lane.b32.xlu0 %v344, 40
    %v949 = vpop.permute.xlu0 %948
    %950 = vrot.lane.b32.xlu0 %v345, 40
    %v951 = vpop.permute.xlu0 %950
    %v954 = vsel %vm413, %v946, 0
    %v957 = vsel %vm413, %v947, 0
    %v960 = vand.u32 %v951, %v463
    %962 = vmatprep.subr.bf16.mxu0 0
    %963 = vmatpush1.bf16.msra.mxu0 %v949
    %964 = vmatprep.subr.bf16.mxu0 0
    %965 = vmatpush1.bf16.msra.mxu0 %v960
    %966 = vmatprep.subr.bf16.mxu0 0
    %967 = vmatpush1.bf16.msra.mxu0 0
    %968 = vmatprep.subr.bf16.mxu0 0
    %969 = vmatpush1.bf16.msra.mxu0 0
    %970 = vmatprep.subr.bf16.mxu0 0
    %971 = vmatpush1.bf16.msra.mxu0 0
    %972 = vmatprep.subr.bf16.mxu0 0
    %973 = vmatpush1.bf16.msra.mxu0 0
    %974 = vmatprep.subr.bf16.mxu0 0
    %975 = vmatpush1.bf16.msra.mxu0 0
    %976 = vmatprep.subr.bf16.mxu0 0
    %977 = vmatpush1.bf16.msra.mxu0 0
    %978 = vmatprep.subr.bf16.mxu0 0
    %979 = vmatpush1.bf16.msra.mxu0 0
    %980 = vmatprep.subr.bf16.mxu0 0
    %981 = vmatpush1.bf16.msra.mxu0 0
    %982 = vmatprep.subr.bf16.mxu0 0
    %983 = vmatpush1.bf16.msra.mxu0 0
    %984 = vmatprep.subr.bf16.mxu0 0
    %985 = vmatpush1.bf16.msra.mxu0 0
    %986 = vmatprep.subr.bf16.mxu0 0
    %987 = vmatpush1.bf16.msra.mxu0 0
    %988 = vmatprep.subr.bf16.mxu0 0
    %989 = vmatpush1.bf16.msra.mxu0 0
    %990 = vmatprep.subr.bf16.mxu0 0
    %991 = vmatpush1.bf16.msra.mxu0 0
    %992 = vmatprep.subr.bf16.mxu0 0
    %993 = vmatpush1.bf16.msra.mxu0 0
    %994 = vmatprep.mubr.bf16.mxu0 0
    %995 = vmatmul.mubr.bf16.gmra.mrb[0].mxu0 %v954
    %v996 = vpop.f32.mrb[0].mxu0
    %v997 = vadd.f32 0.0, %v996
    %v998 = vpop.f32.mrb[0].mxu0
    %v999 = vpop.f32.mrb[0].mxu0
    %v1000 = vadd.f32 0.0, %v999
    %v1001 = vpop.f32.mrb[0].mxu0
    %1002 = vmatprep.mubr.bf16.mxu0 0
    %1003 = vmatmul.mubr.bf16.gmra.mrb[0].mxu0 %v957
    %v1004 = vpop.f32.mrb[0].mxu0
    %v1005 = vadd.f32 0.0, %v1004
    %v1006 = vpop.f32.mrb[0].mxu0
    %v1007 = vpop.f32.mrb[0].mxu0
    %v1008 = vpop.f32.mrb[0].mxu0
    %1009 = vdwg.mxu0
    %1013 = vrot.lane.b32.xlu0 %v667, 8
    %v1014 = vpop.permute.xlu0 %1013
    %1015 = vrot.lane.b32.xlu0 %v670, 8
    %v1016 = vpop.permute.xlu0 %1015
    %1017 = vrot.lane.b32.xlu0 %v675, 8
    %v1018 = vpop.permute.xlu0 %1017
    %1025 = vrot.lane.b32.xlu0 %v832, 16
    %v1026 = vpop.permute.xlu0 %1025
    %1027 = vrot.lane.b32.xlu0 %v835, 16
    %v1028 = vpop.permute.xlu0 %1027
    %1029 = vrot.lane.b32.xlu0 %v840, 16
    %v1030 = vpop.permute.xlu0 %1029
    %1037 = vrot.lane.b32.xlu0 %v997, 24
    %v1038 = vpop.permute.xlu0 %1037
    %1039 = vrot.lane.b32.xlu0 %v1000, 24
    %v1040 = vpop.permute.xlu0 %1039
    %1041 = vrot.lane.b32.xlu0 %v1005, 24
    %v1042 = vpop.permute.xlu0 %1041
    %v1046 = vsel %vm352, %v502, %v1014
    %v1047 = vsel %vm352, %v505, %v1016
    %v1048 = vsel %vm352, %v510, %v1018
    %vm1049 = vcmask 130048
    %v1050 = vsel %vm1049, %v1046, %v1026
    %v1051 = vsel %vm1049, %v1047, %v1028
    %v1052 = vsel %vm1049, %v1048, %v1030
    %vm1053 = vcmask 195584
    %v1054 = vsel %vm1053, %v1050, %v1038
    %v1055 = vsel %vm1053, %v1051, %v1040
    %v1056 = vsel %vm1053, %v1052, %v1042
    %v1057 = vpack.c.bf16 %v334, %v331
    %v1058 = vpack.c.bf16 %v339, %v339
    %vm1059 = vsmask.f32 7424
    %v1061 = vshrl.u32 %v1057, 16
    %v1063 = vshll.u32 %v1057, 16
    %v1065 = vrot.slane %v1063, 1
    %v1066 = vor.u32 %v1061, %v1065
    %v1068 = vshll.u32 %v1058, 16
    %v1070 = vrot.slane %v1068, 1
    %v1071 = vsel %vm1059, %v1066, %v1070
    %v1072 = vshrl.u32 %v1058, 16
    %1074 = vrot.lane.b32.xlu0 %v1071, 96
    %v1075 = vpop.permute.xlu0 %1074
    %1076 = vrot.lane.b32.xlu0 %v1072, 96
    %v1077 = vpop.permute.xlu0 %1076
    %v1079 = vsel %vm352, %v1071, 0
    %v1082 = vsel %vm352, %v1072, 0
    %v1085 = vsel %vm352, %v1075, 0
    %v1088 = vsel %vm352, %v1077, 0
    %1090 = vmatprep.subr.bf16.mxu0 0
    %1091 = vmatpush1.bf16.xpose.msra.mxu0 %v1085
    %1092 = vmatprep.subr.bf16.mxu0 0
    %1093 = vmatpush1.bf16.xpose.msra.mxu0 %v1088
    %1094 = vmatprep.subr.bf16.mxu0 0
    %1095 = vmatpush1.bf16.xpose.msra.mxu0 0
    %1096 = vmatprep.subr.bf16.mxu0 0
    %1097 = vmatpush1.bf16.xpose.msra.mxu0 0
    %1098 = vmatprep.subr.bf16.mxu0 0
    %1099 = vmatpush1.bf16.xpose.msra.mxu0 0
    %1100 = vmatprep.subr.bf16.mxu0 0
    %1101 = vmatpush1.bf16.xpose.msra.mxu0 0
    %1102 = vmatprep.subr.bf16.mxu0 0
    %1103 = vmatpush1.bf16.xpose.msra.mxu0 0
    %1104 = vmatprep.subr.bf16.mxu0 0
    %1105 = vmatpush1.bf16.xpose.msra.mxu0 0
    %1106 = vmatprep.subr.bf16.mxu0 0
    %1107 = vmatpush1.bf16.xpose.msra.mxu0 0
    %1108 = vmatprep.subr.bf16.mxu0 0
    %1109 = vmatpush1.bf16.xpose.msra.mxu0 0
    %1110 = vmatprep.subr.bf16.mxu0 0
    %1111 = vmatpush1.bf16.xpose.msra.mxu0 0
    %1112 = vmatprep.subr.bf16.mxu0 0
    %1113 = vmatpush1.bf16.xpose.msra.mxu0 0
    %1114 = vmatprep.subr.bf16.mxu0 0
    %1115 = vmatpush1.bf16.xpose.msra.mxu0 0
    %1116 = vmatprep.subr.bf16.mxu0 0
    %1117 = vmatpush1.bf16.xpose.msra.mxu0 0
    %1118 = vmatprep.subr.bf16.mxu0 0
    %1119 = vmatpush1.bf16.xpose.msra.mxu0 0
    %1120 = vmatprep.subr.bf16.mxu0 0
    %1121 = vmatpush1.bf16.xpose.msra.mxu0 0
    %1122 = vmatprep.mubr.bf16.mxu0 0
    %1123 = vmatmul.mubr.bf16.gmra.mrb[0].mxu0 %v1079
    %v1124 = vpop.f32.mrb[0].mxu0
    %v1125 = vadd.f32 0.0, %v1124
    %v1126 = vpop.f32.mrb[0].mxu0
    %v1127 = vpop.f32.mrb[0].mxu0
    %v1128 = vadd.f32 0.0, %v1127
    %v1129 = vpop.f32.mrb[0].mxu0
    %1130 = vmatprep.mubr.bf16.mxu0 0
    %1131 = vmatmul.mubr.bf16.gmra.mrb[0].mxu0 %v1082
    %v1132 = vpop.f32.mrb[0].mxu0
    %v1133 = vadd.f32 0.0, %v1132
    %v1134 = vpop.f32.mrb[0].mxu0
    %v1135 = vpop.f32.mrb[0].mxu0
    %v1136 = vpop.f32.mrb[0].mxu0
    %1137 = vdwg.mxu0
    %v1138 = vsel %vm413, %v1125, -inf
    %1139 = vmax.xlane.f32.xlu0 %v1138
    %v1140 = vpop.xlane.xlu0 %1139
    %v1141 = vsel %vm413, %v1128, -inf
    %1142 = vmax.xlane.f32.xlu0 %v1141
    %v1143 = vpop.xlane.xlu0 %1142
    %v1144 = vsel %vm420, %v1133, -inf
    %1145 = vmax.xlane.f32.xlu0 %v1144
    %v1146 = vpop.xlane.xlu0 %1145
    %v1147 = vsub.f32 %v1125, %v1140
    %v1148 = vsub.f32 %v1128, %v1143
    %v1149 = vsub.f32 %v1133, %v1146
    %v1150 = vmul.f32 %v1147, 1.442695
    %v1151 = vpow.pop %v1150
    %v1152 = vmul.f32 %v1148, 1.442695
    %v1153 = vpow.pop %v1152
    %v1154 = vmul.f32 %v1149, 1.442695
    %v1155 = vpow.pop %v1154
    %v1156 = vsel %vm413, %v1151, 0.0
    %1157 = vadd.xlane.f32.xlu0 %v1156
    %v1158 = vpop.xlane.xlu0 %1157
    %v1159 = vsel %vm413, %v1153, 0.0
    %1160 = vadd.xlane.f32.xlu0 %v1159
    %v1161 = vpop.xlane.xlu0 %1160
    %v1162 = vsel %vm420, %v1155, 0.0
    %1163 = vadd.xlane.f32.xlu0 %v1162
    %v1164 = vpop.xlane.xlu0 %1163
    %v1165 = vrcp.pop %v1158
    %v1166 = vrcp.pop %v1161
    %v1167 = vrcp.pop %v1164
    %v1168 = vmul.f32 %v1151, %v1165
    %v1169 = vmul.f32 %v1153, %v1166
    %v1170 = vmul.f32 %v1155, %v1167
    %v1171 = vpack.c.bf16 %v1169, %v1168
    %v1172 = vpack.c.bf16 %v1170, %v1170
    %1173 = vrot.lane.b32.xlu0 %v1071, 64
    %v1174 = vpop.permute.xlu0 %1173
    %1175 = vrot.lane.b32.xlu0 %v1072, 64
    %v1176 = vpop.permute.xlu0 %1175
    %v1179 = vsel %vm413, %v1171, 0
    %v1182 = vsel %vm413, %v1172, 0
    %v1185 = vand.u32 %v1176, %v463
    %1187 = vmatprep.subr.bf16.mxu0 0
    %1188 = vmatpush1.bf16.msra.mxu0 %v1174
    %1189 = vmatprep.subr.bf16.mxu0 0
    %1190 = vmatpush1.bf16.msra.mxu0 %v1185
    %1191 = vmatprep.subr.bf16.mxu0 0
    %1192 = vmatpush1.bf16.msra.mxu0 0
    %1193 = vmatprep.subr.bf16.mxu0 0
    %1194 = vmatpush1.bf16.msra.mxu0 0
    %1195 = vmatprep.subr.bf16.mxu0 0
    %1196 = vmatpush1.bf16.msra.mxu0 0
    %1197 = vmatprep.subr.bf16.mxu0 0
    %1198 = vmatpush1.bf16.msra.mxu0 0
    %1199 = vmatprep.subr.bf16.mxu0 0
    %1200 = vmatpush1.bf16.msra.mxu0 0
    %1201 = vmatprep.subr.bf16.mxu0 0
    %1202 = vmatpush1.bf16.msra.mxu0 0
    %1203 = vmatprep.subr.bf16.mxu0 0
    %1204 = vmatpush1.bf16.msra.mxu0 0
    %1205 = vmatprep.subr.bf16.mxu0 0
    %1206 = vmatpush1.bf16.msra.mxu0 0
    %1207 = vmatprep.subr.bf16.mxu0 0
    %1208 = vmatpush1.bf16.msra.mxu0 0
    %1209 = vmatprep.subr.bf16.mxu0 0
    %1210 = vmatpush1.bf16.msra.mxu0 0
    %1211 = vmatprep.subr.bf16.mxu0 0
    %1212 = vmatpush1.bf16.msra.mxu0 0
    %1213 = vmatprep.subr.bf16.mxu0 0
    %1214 = vmatpush1.bf16.msra.mxu0 0
    %1215 = vmatprep.subr.bf16.mxu0 0
    %1216 = vmatpush1.bf16.msra.mxu0 0
    %1217 = vmatprep.subr.bf16.mxu0 0
    %1218 = vmatpush1.bf16.msra.mxu0 0
    %1219 = vmatprep.mubr.bf16.mxu0 0
    %1220 = vmatmul.mubr.bf16.gmra.mrb[0].mxu0 %v1179
    %v1221 = vpop.f32.mrb[0].mxu0
    %v1222 = vadd.f32 0.0, %v1221
    %v1223 = vpop.f32.mrb[0].mxu0
    %v1224 = vpop.f32.mrb[0].mxu0
    %v1225 = vadd.f32 0.0, %v1224
    %v1226 = vpop.f32.mrb[0].mxu0
    %1227 = vmatprep.mubr.bf16.mxu0 0
    %1228 = vmatmul.mubr.bf16.gmra.mrb[0].mxu0 %v1182
    %v1229 = vpop.f32.mrb[0].mxu0
    %v1230 = vadd.f32 0.0, %v1229
    %v1231 = vpop.f32.mrb[0].mxu0
    %v1232 = vpop.f32.mrb[0].mxu0
    %v1233 = vpop.f32.mrb[0].mxu0
    %1234 = vdwg.mxu0
    %1235 = vrot.lane.b32.xlu0 %v1071, 120
    %v1236 = vpop.permute.xlu0 %1235
    %1237 = vrot.lane.b32.xlu0 %v1072, 120
    %v1238 = vpop.permute.xlu0 %1237
    %1239 = vrot.lane.b32.xlu0 %v1071, 88
    %v1240 = vpop.permute.xlu0 %1239
    %1241 = vrot.lane.b32.xlu0 %v1072, 88
    %v1242 = vpop.permute.xlu0 %1241
    %v1244 = vsel %vm352, %v1236, 0
    %v1247 = vsel %vm352, %v1238, 0
    %v1250 = vsel %vm352, %v1240, 0
    %v1253 = vsel %vm352, %v1242, 0
    %1255 = vmatprep.subr.bf16.mxu0 0
    %1256 = vmatpush1.bf16.xpose.msra.mxu0 %v1250
    %1257 = vmatprep.subr.bf16.mxu0 0
    %1258 = vmatpush1.bf16.xpose.msra.mxu0 %v1253
    %1259 = vmatprep.subr.bf16.mxu0 0
    %1260 = vmatpush1.bf16.xpose.msra.mxu0 0
    %1261 = vmatprep.subr.bf16.mxu0 0
    %1262 = vmatpush1.bf16.xpose.msra.mxu0 0
    %1263 = vmatprep.subr.bf16.mxu0 0
    %1264 = vmatpush1.bf16.xpose.msra.mxu0 0
    %1265 = vmatprep.subr.bf16.mxu0 0
    %1266 = vmatpush1.bf16.xpose.msra.mxu0 0
    %1267 = vmatprep.subr.bf16.mxu0 0
    %1268 = vmatpush1.bf16.xpose.msra.mxu0 0
    %1269 = vmatprep.subr.bf16.mxu0 0
    %1270 = vmatpush1.bf16.xpose.msra.mxu0 0
    %1271 = vmatprep.subr.bf16.mxu0 0
    %1272 = vmatpush1.bf16.xpose.msra.mxu0 0
    %1273 = vmatprep.subr.bf16.mxu0 0
    %1274 = vmatpush1.bf16.xpose.msra.mxu0 0
    %1275 = vmatprep.subr.bf16.mxu0 0
    %1276 = vmatpush1.bf16.xpose.msra.mxu0 0
    %1277 = vmatprep.subr.bf16.mxu0 0
    %1278 = vmatpush1.bf16.xpose.msra.mxu0 0
    %1279 = vmatprep.subr.bf16.mxu0 0
    %1280 = vmatpush1.bf16.xpose.msra.mxu0 0
    %1281 = vmatprep.subr.bf16.mxu0 0
    %1282 = vmatpush1.bf16.xpose.msra.mxu0 0
    %1283 = vmatprep.subr.bf16.mxu0 0
    %1284 = vmatpush1.bf16.xpose.msra.mxu0 0
    %1285 = vmatprep.subr.bf16.mxu0 0
    %1286 = vmatpush1.bf16.xpose.msra.mxu0 0
    %1287 = vmatprep.mubr.bf16.mxu0 0
    %1288 = vmatmul.mubr.bf16.gmra.mrb[0].mxu0 %v1244
    %v1289 = vpop.f32.mrb[0].mxu0
    %v1290 = vadd.f32 0.0, %v1289
    %v1291 = vpop.f32.mrb[0].mxu0
    %v1292 = vpop.f32.mrb[0].mxu0
    %v1293 = vadd.f32 0.0, %v1292
    %v1294 = vpop.f32.mrb[0].mxu0
    %1295 = vmatprep.mubr.bf16.mxu0 0
    %1296 = vmatmul.mubr.bf16.gmra.mrb[0].mxu0 %v1247
    %v1297 = vpop.f32.mrb[0].mxu0
    %v1298 = vadd.f32 0.0, %v1297
    %v1299 = vpop.f32.mrb[0].mxu0
    %v1300 = vpop.f32.mrb[0].mxu0
    %v1301 = vpop.f32.mrb[0].mxu0
    %1302 = vdwg.mxu0
    %v1303 = vsel %vm413, %v1290, -inf
    %1304 = vmax.xlane.f32.xlu0 %v1303
    %v1305 = vpop.xlane.xlu0 %1304
    %v1306 = vsel %vm413, %v1293, -inf
    %1307 = vmax.xlane.f32.xlu0 %v1306
    %v1308 = vpop.xlane.xlu0 %1307
    %v1309 = vsel %vm420, %v1298, -inf
    %1310 = vmax.xlane.f32.xlu0 %v1309
    %v1311 = vpop.xlane.xlu0 %1310
    %v1312 = vsub.f32 %v1290, %v1305
    %v1313 = vsub.f32 %v1293, %v1308
    %v1314 = vsub.f32 %v1298, %v1311
    %v1315 = vmul.f32 %v1312, 1.442695
    %v1316 = vpow.pop %v1315
    %v1317 = vmul.f32 %v1313, 1.442695
    %v1318 = vpow.pop %v1317
    %v1319 = vmul.f32 %v1314, 1.442695
    %v1320 = vpow.pop %v1319
    %v1321 = vsel %vm413, %v1316, 0.0
    %1322 = vadd.xlane.f32.xlu0 %v1321
    %v1323 = vpop.xlane.xlu0 %1322
    %v1324 = vsel %vm413, %v1318, 0.0
    %1325 = vadd.xlane.f32.xlu0 %v1324
    %v1326 = vpop.xlane.xlu0 %1325
    %v1327 = vsel %vm420, %v1320, 0.0
    %1328 = vadd.xlane.f32.xlu0 %v1327
    %v1329 = vpop.xlane.xlu0 %1328
    %v1330 = vrcp.pop %v1323
    %v1331 = vrcp.pop %v1326
    %v1332 = vrcp.pop %v1329
    %v1333 = vmul.f32 %v1316, %v1330
    %v1334 = vmul.f32 %v1318, %v1331
    %v1335 = vmul.f32 %v1320, %v1332
    %v1336 = vpack.c.bf16 %v1334, %v1333
    %v1337 = vpack.c.bf16 %v1335, %v1335
    %1338 = vrot.lane.b32.xlu0 %v1071, 56
    %v1339 = vpop.permute.xlu0 %1338
    %1340 = vrot.lane.b32.xlu0 %v1072, 56
    %v1341 = vpop.permute.xlu0 %1340
    %v1344 = vsel %vm413, %v1336, 0
    %v1347 = vsel %vm413, %v1337, 0
    %v1350 = vand.u32 %v1341, %v463
    %1352 = vmatprep.subr.bf16.mxu0 0
    %1353 = vmatpush1.bf16.msra.mxu0 %v1339
    %1354 = vmatprep.subr.bf16.mxu0 0
    %1355 = vmatpush1.bf16.msra.mxu0 %v1350
    %1356 = vmatprep.subr.bf16.mxu0 0
    %1357 = vmatpush1.bf16.msra.mxu0 0
    %1358 = vmatprep.subr.bf16.mxu0 0
    %1359 = vmatpush1.bf16.msra.mxu0 0
    %1360 = vmatprep.subr.bf16.mxu0 0
    %1361 = vmatpush1.bf16.msra.mxu0 0
    %1362 = vmatprep.subr.bf16.mxu0 0
    %1363 = vmatpush1.bf16.msra.mxu0 0
    %1364 = vmatprep.subr.bf16.mxu0 0
    %1365 = vmatpush1.bf16.msra.mxu0 0
    %1366 = vmatprep.subr.bf16.mxu0 0
    %1367 = vmatpush1.bf16.msra.mxu0 0
    %1368 = vmatprep.subr.bf16.mxu0 0
    %1369 = vmatpush1.bf16.msra.mxu0 0
    %1370 = vmatprep.subr.bf16.mxu0 0
    %1371 = vmatpush1.bf16.msra.mxu0 0
    %1372 = vmatprep.subr.bf16.mxu0 0
    %1373 = vmatpush1.bf16.msra.mxu0 0
    %1374 = vmatprep.subr.bf16.mxu0 0
    %1375 = vmatpush1.bf16.msra.mxu0 0
    %1376 = vmatprep.subr.bf16.mxu0 0
    %1377 = vmatpush1.bf16.msra.mxu0 0
    %1378 = vmatprep.subr.bf16.mxu0 0
    %1379 = vmatpush1.bf16.msra.mxu0 0
    %1380 = vmatprep.subr.bf16.mxu0 0
    %1381 = vmatpush1.bf16.msra.mxu0 0
    %1382 = vmatprep.subr.bf16.mxu0 0
    %1383 = vmatpush1.bf16.msra.mxu0 0
    %1384 = vmatprep.mubr.bf16.mxu0 0
    %1385 = vmatmul.mubr.bf16.gmra.mrb[0].mxu0 %v1344
    %v1386 = vpop.f32.mrb[0].mxu0
    %v1387 = vadd.f32 0.0, %v1386
    %v1388 = vpop.f32.mrb[0].mxu0
    %v1389 = vpop.f32.mrb[0].mxu0
    %v1390 = vadd.f32 0.0, %v1389
    %v1391 = vpop.f32.mrb[0].mxu0
    %1392 = vmatprep.mubr.bf16.mxu0 0
    %1393 = vmatmul.mubr.bf16.gmra.mrb[0].mxu0 %v1347
    %v1394 = vpop.f32.mrb[0].mxu0
    %v1395 = vadd.f32 0.0, %v1394
    %v1396 = vpop.f32.mrb[0].mxu0
    %v1397 = vpop.f32.mrb[0].mxu0
    %v1398 = vpop.f32.mrb[0].mxu0
    %1399 = vdwg.mxu0
    %1400 = vrot.lane.b32.xlu0 %v1071, 112
    %v1401 = vpop.permute.xlu0 %1400
    %1402 = vrot.lane.b32.xlu0 %v1072, 112
    %v1403 = vpop.permute.xlu0 %1402
    %1404 = vrot.lane.b32.xlu0 %v1071, 80
    %v1405 = vpop.permute.xlu0 %1404
    %1406 = vrot.lane.b32.xlu0 %v1072, 80
    %v1407 = vpop.permute.xlu0 %1406
    %v1409 = vsel %vm352, %v1401, 0
    %v1412 = vsel %vm352, %v1403, 0
    %v1415 = vsel %vm352, %v1405, 0
    %v1418 = vsel %vm352, %v1407, 0
    %1420 = vmatprep.subr.bf16.mxu0 0
    %1421 = vmatpush1.bf16.xpose.msra.mxu0 %v1415
    %1422 = vmatprep.subr.bf16.mxu0 0
    %1423 = vmatpush1.bf16.xpose.msra.mxu0 %v1418
    %1424 = vmatprep.subr.bf16.mxu0 0
    %1425 = vmatpush1.bf16.xpose.msra.mxu0 0
    %1426 = vmatprep.subr.bf16.mxu0 0
    %1427 = vmatpush1.bf16.xpose.msra.mxu0 0
    %1428 = vmatprep.subr.bf16.mxu0 0
    %1429 = vmatpush1.bf16.xpose.msra.mxu0 0
    %1430 = vmatprep.subr.bf16.mxu0 0
    %1431 = vmatpush1.bf16.xpose.msra.mxu0 0
    %1432 = vmatprep.subr.bf16.mxu0 0
    %1433 = vmatpush1.bf16.xpose.msra.mxu0 0
    %1434 = vmatprep.subr.bf16.mxu0 0
    %1435 = vmatpush1.bf16.xpose.msra.mxu0 0
    %1436 = vmatprep.subr.bf16.mxu0 0
    %1437 = vmatpush1.bf16.xpose.msra.mxu0 0
    %1438 = vmatprep.subr.bf16.mxu0 0
    %1439 = vmatpush1.bf16.xpose.msra.mxu0 0
    %1440 = vmatprep.subr.bf16.mxu0 0
    %1441 = vmatpush1.bf16.xpose.msra.mxu0 0
    %1442 = vmatprep.subr.bf16.mxu0 0
    %1443 = vmatpush1.bf16.xpose.msra.mxu0 0
    %1444 = vmatprep.subr.bf16.mxu0 0
    %1445 = vmatpush1.bf16.xpose.msra.mxu0 0
    %1446 = vmatprep.subr.bf16.mxu0 0
    %1447 = vmatpush1.bf16.xpose.msra.mxu0 0
    %1448 = vmatprep.subr.bf16.mxu0 0
    %1449 = vmatpush1.bf16.xpose.msra.mxu0 0
    %1450 = vmatprep.subr.bf16.mxu0 0
    %1451 = vmatpush1.bf16.xpose.msra.mxu0 0
    %1452 = vmatprep.mubr.bf16.mxu0 0
    %1453 = vmatmul.mubr.bf16.gmra.mrb[0].mxu0 %v1409
    %v1454 = vpop.f32.mrb[0].mxu0
    %v1455 = vadd.f32 0.0, %v1454
    %v1456 = vpop.f32.mrb[0].mxu0
    %v1457 = vpop.f32.mrb[0].mxu0
    %v1458 = vadd.f32 0.0, %v1457
    %v1459 = vpop.f32.mrb[0].mxu0
    %1460 = vmatprep.mubr.bf16.mxu0 0
    %1461 = vmatmul.mubr.bf16.gmra.mrb[0].mxu0 %v1412
    %v1462 = vpop.f32.mrb[0].mxu0
    %v1463 = vadd.f32 0.0, %v1462
    %v1464 = vpop.f32.mrb[0].mxu0
    %v1465 = vpop.f32.mrb[0].mxu0
    %v1466 = vpop.f32.mrb[0].mxu0
    %1467 = vdwg.mxu0
    %v1468 = vsel %vm413, %v1455, -inf
    %1469 = vmax.xlane.f32.xlu0 %v1468
    %v1470 = vpop.xlane.xlu0 %1469
    %v1471 = vsel %vm413, %v1458, -inf
    %1472 = vmax.xlane.f32.xlu0 %v1471
    %v1473 = vpop.xlane.xlu0 %1472
    %v1474 = vsel %vm420, %v1463, -inf
    %1475 = vmax.xlane.f32.xlu0 %v1474
    %v1476 = vpop.xlane.xlu0 %1475
    %v1477 = vsub.f32 %v1455, %v1470
    %v1478 = vsub.f32 %v1458, %v1473
    %v1479 = vsub.f32 %v1463, %v1476
    %v1480 = vmul.f32 %v1477, 1.442695
    %v1481 = vpow.pop %v1480
    %v1482 = vmul.f32 %v1478, 1.442695
    %v1483 = vpow.pop %v1482
    %v1484 = vmul.f32 %v1479, 1.442695
    %v1485 = vpow.pop %v1484
    %v1486 = vsel %vm413, %v1481, 0.0
    %1487 = vadd.xlane.f32.xlu0 %v1486
    %v1488 = vpop.xlane.xlu0 %1487
    %v1489 = vsel %vm413, %v1483, 0.0
    %1490 = vadd.xlane.f32.xlu0 %v1489
    %v1491 = vpop.xlane.xlu0 %1490
    %v1492 = vsel %vm420, %v1485, 0.0
    %1493 = vadd.xlane.f32.xlu0 %v1492
    %v1494 = vpop.xlane.xlu0 %1493
    %v1495 = vrcp.pop %v1488
    %v1496 = vrcp.pop %v1491
    %v1497 = vrcp.pop %v1494
    %v1498 = vmul.f32 %v1481, %v1495
    %v1499 = vmul.f32 %v1483, %v1496
    %v1500 = vmul.f32 %v1485, %v1497
    %v1501 = vpack.c.bf16 %v1499, %v1498
    %v1502 = vpack.c.bf16 %v1500, %v1500
    %1503 = vrot.lane.b32.xlu0 %v1071, 48
    %v1504 = vpop.permute.xlu0 %1503
    %1505 = vrot.lane.b32.xlu0 %v1072, 48
    %v1506 = vpop.permute.xlu0 %1505
    %v1509 = vsel %vm413, %v1501, 0
    %v1512 = vsel %vm413, %v1502, 0
    %v1515 = vand.u32 %v1506, %v463
    %1517 = vmatprep.subr.bf16.mxu0 0
    %1518 = vmatpush1.bf16.msra.mxu0 %v1504
    %1519 = vmatprep.subr.bf16.mxu0 0
    %1520 = vmatpush1.bf16.msra.mxu0 %v1515
    %1521 = vmatprep.subr.bf16.mxu0 0
    %1522 = vmatpush1.bf16.msra.mxu0 0
    %1523 = vmatprep.subr.bf16.mxu0 0
    %1524 = vmatpush1.bf16.msra.mxu0 0
    %1525 = vmatprep.subr.bf16.mxu0 0
    %1526 = vmatpush1.bf16.msra.mxu0 0
    %1527 = vmatprep.subr.bf16.mxu0 0
    %1528 = vmatpush1.bf16.msra.mxu0 0
    %1529 = vmatprep.subr.bf16.mxu0 0
    %1530 = vmatpush1.bf16.msra.mxu0 0
    %1531 = vmatprep.subr.bf16.mxu0 0
    %1532 = vmatpush1.bf16.msra.mxu0 0
    %1533 = vmatprep.subr.bf16.mxu0 0
    %1534 = vmatpush1.bf16.msra.mxu0 0
    %1535 = vmatprep.subr.bf16.mxu0 0
    %1536 = vmatpush1.bf16.msra.mxu0 0
    %1537 = vmatprep.subr.bf16.mxu0 0
    %1538 = vmatpush1.bf16.msra.mxu0 0
    %1539 = vmatprep.subr.bf16.mxu0 0
    %1540 = vmatpush1.bf16.msra.mxu0 0
    %1541 = vmatprep.subr.bf16.mxu0 0
    %1542 = vmatpush1.bf16.msra.mxu0 0
    %1543 = vmatprep.subr.bf16.mxu0 0
    %1544 = vmatpush1.bf16.msra.mxu0 0
    %1545 = vmatprep.subr.bf16.mxu0 0
    %1546 = vmatpush1.bf16.msra.mxu0 0
    %1547 = vmatprep.subr.bf16.mxu0 0
    %1548 = vmatpush1.bf16.msra.mxu0 0
    %1549 = vmatprep.mubr.bf16.mxu0 0
    %1550 = vmatmul.mubr.bf16.gmra.mrb[0].mxu0 %v1509
    %v1551 = vpop.f32.mrb[0].mxu0
    %v1552 = vadd.f32 0.0, %v1551
    %v1553 = vpop.f32.mrb[0].mxu0
    %v1554 = vpop.f32.mrb[0].mxu0
    %v1555 = vadd.f32 0.0, %v1554
    %v1556 = vpop.f32.mrb[0].mxu0
    %1557 = vmatprep.mubr.bf16.mxu0 0
    %1558 = vmatmul.mubr.bf16.gmra.mrb[0].mxu0 %v1512
    %v1559 = vpop.f32.mrb[0].mxu0
    %v1560 = vadd.f32 0.0, %v1559
    %v1561 = vpop.f32.mrb[0].mxu0
    %v1562 = vpop.f32.mrb[0].mxu0
    %v1563 = vpop.f32.mrb[0].mxu0
    %1564 = vdwg.mxu0
    %1565 = vrot.lane.b32.xlu0 %v1071, 104
    %v1566 = vpop.permute.xlu0 %1565
    %1567 = vrot.lane.b32.xlu0 %v1072, 104
    %v1568 = vpop.permute.xlu0 %1567
    %1569 = vrot.lane.b32.xlu0 %v1071, 72
    %v1570 = vpop.permute.xlu0 %1569
    %1571 = vrot.lane.b32.xlu0 %v1072, 72
    %v1572 = vpop.permute.xlu0 %1571
    %v1574 = vsel %vm352, %v1566, 0
    %v1577 = vsel %vm352, %v1568, 0
    %v1580 = vsel %vm352, %v1570, 0
    %v1583 = vsel %vm352, %v1572, 0
    %1585 = vmatprep.subr.bf16.mxu0 0
    %1586 = vmatpush1.bf16.xpose.msra.mxu0 %v1580
    %1587 = vmatprep.subr.bf16.mxu0 0
    %1588 = vmatpush1.bf16.xpose.msra.mxu0 %v1583
    %1589 = vmatprep.subr.bf16.mxu0 0
    %1590 = vmatpush1.bf16.xpose.msra.mxu0 0
    %1591 = vmatprep.subr.bf16.mxu0 0
    %1592 = vmatpush1.bf16.xpose.msra.mxu0 0
    %1593 = vmatprep.subr.bf16.mxu0 0
    %1594 = vmatpush1.bf16.xpose.msra.mxu0 0
    %1595 = vmatprep.subr.bf16.mxu0 0
    %1596 = vmatpush1.bf16.xpose.msra.mxu0 0
    %1597 = vmatprep.subr.bf16.mxu0 0
    %1598 = vmatpush1.bf16.xpose.msra.mxu0 0
    %1599 = vmatprep.subr.bf16.mxu0 0
    %1600 = vmatpush1.bf16.xpose.msra.mxu0 0
    %1601 = vmatprep.subr.bf16.mxu0 0
    %1602 = vmatpush1.bf16.xpose.msra.mxu0 0
    %1603 = vmatprep.subr.bf16.mxu0 0
    %1604 = vmatpush1.bf16.xpose.msra.mxu0 0
    %1605 = vmatprep.subr.bf16.mxu0 0
    %1606 = vmatpush1.bf16.xpose.msra.mxu0 0
    %1607 = vmatprep.subr.bf16.mxu0 0
    %1608 = vmatpush1.bf16.xpose.msra.mxu0 0
    %1609 = vmatprep.subr.bf16.mxu0 0
    %1610 = vmatpush1.bf16.xpose.msra.mxu0 0
    %1611 = vmatprep.subr.bf16.mxu0 0
    %1612 = vmatpush1.bf16.xpose.msra.mxu0 0
    %1613 = vmatprep.subr.bf16.mxu0 0
    %1614 = vmatpush1.bf16.xpose.msra.mxu0 0
    %1615 = vmatprep.subr.bf16.mxu0 0
    %1616 = vmatpush1.bf16.xpose.msra.mxu0 0
    %1617 = vmatprep.mubr.bf16.mxu0 0
    %1618 = vmatmul.mubr.bf16.gmra.mrb[0].mxu0 %v1574
    %v1619 = vpop.f32.mrb[0].mxu0
    %v1620 = vadd.f32 0.0, %v1619
    %v1621 = vpop.f32.mrb[0].mxu0
    %v1622 = vpop.f32.mrb[0].mxu0
    %v1623 = vadd.f32 0.0, %v1622
    %v1624 = vpop.f32.mrb[0].mxu0
    %1625 = vmatprep.mubr.bf16.mxu0 0
    %1626 = vmatmul.mubr.bf16.gmra.mrb[0].mxu0 %v1577
    %v1627 = vpop.f32.mrb[0].mxu0
    %v1628 = vadd.f32 0.0, %v1627
    %v1629 = vpop.f32.mrb[0].mxu0
    %v1630 = vpop.f32.mrb[0].mxu0
    %v1631 = vpop.f32.mrb[0].mxu0
    %1632 = vdwg.mxu0
    %v1633 = vsel %vm413, %v1620, -inf
    %1634 = vmax.xlane.f32.xlu0 %v1633
    %v1635 = vpop.xlane.xlu0 %1634
    %v1636 = vsel %vm413, %v1623, -inf
    %1637 = vmax.xlane.f32.xlu0 %v1636
    %v1638 = vpop.xlane.xlu0 %1637
    %v1639 = vsel %vm420, %v1628, -inf
    %1640 = vmax.xlane.f32.xlu0 %v1639
    %v1641 = vpop.xlane.xlu0 %1640
    %v1642 = vsub.f32 %v1620, %v1635
    %v1643 = vsub.f32 %v1623, %v1638
    %v1644 = vsub.f32 %v1628, %v1641
    %v1645 = vmul.f32 %v1642, 1.442695
    %v1646 = vpow.pop %v1645
    %v1647 = vmul.f32 %v1643, 1.442695
    %v1648 = vpow.pop %v1647
    %v1649 = vmul.f32 %v1644, 1.442695
    %v1650 = vpow.pop %v1649
    %v1651 = vsel %vm413, %v1646, 0.0
    %1652 = vadd.xlane.f32.xlu0 %v1651
    %v1653 = vpop.xlane.xlu0 %1652
    %v1654 = vsel %vm413, %v1648, 0.0
    %1655 = vadd.xlane.f32.xlu0 %v1654
    %v1656 = vpop.xlane.xlu0 %1655
    %v1657 = vsel %vm420, %v1650, 0.0
    %1658 = vadd.xlane.f32.xlu0 %v1657
    %v1659 = vpop.xlane.xlu0 %1658
    %v1660 = vrcp.pop %v1653
    %v1661 = vrcp.pop %v1656
    %v1662 = vrcp.pop %v1659
    %v1663 = vmul.f32 %v1646, %v1660
    %v1664 = vmul.f32 %v1648, %v1661
    %v1665 = vmul.f32 %v1650, %v1662
    %v1666 = vpack.c.bf16 %v1664, %v1663
    %v1667 = vpack.c.bf16 %v1665, %v1665
    %1668 = vrot.lane.b32.xlu0 %v1071, 40
    %v1669 = vpop.permute.xlu0 %1668
    %1670 = vrot.lane.b32.xlu0 %v1072, 40
    %v1671 = vpop.permute.xlu0 %1670
    %v1674 = vsel %vm413, %v1666, 0
    %v1677 = vsel %vm413, %v1667, 0
    %v1680 = vand.u32 %v1671, %v463
    %1682 = vmatprep.subr.bf16.mxu0 0
    %1683 = vmatpush1.bf16.msra.mxu0 %v1669
    %1684 = vmatprep.subr.bf16.mxu0 0
    %1685 = vmatpush1.bf16.msra.mxu0 %v1680
    %1686 = vmatprep.subr.bf16.mxu0 0
    %1687 = vmatpush1.bf16.msra.mxu0 0
    %1688 = vmatprep.subr.bf16.mxu0 0
    %1689 = vmatpush1.bf16.msra.mxu0 0
    %1690 = vmatprep.subr.bf16.mxu0 0
    %1691 = vmatpush1.bf16.msra.mxu0 0
    %1692 = vmatprep.subr.bf16.mxu0 0
    %1693 = vmatpush1.bf16.msra.mxu0 0
    %1694 = vmatprep.subr.bf16.mxu0 0
    %1695 = vmatpush1.bf16.msra.mxu0 0
    %1696 = vmatprep.subr.bf16.mxu0 0
    %1697 = vmatpush1.bf16.msra.mxu0 0
    %1698 = vmatprep.subr.bf16.mxu0 0
    %1699 = vmatpush1.bf16.msra.mxu0 0
    %1700 = vmatprep.subr.bf16.mxu0 0
    %1701 = vmatpush1.bf16.msra.mxu0 0
    %1702 = vmatprep.subr.bf16.mxu0 0
    %1703 = vmatpush1.bf16.msra.mxu0 0
    %1704 = vmatprep.subr.bf16.mxu0 0
    %1705 = vmatpush1.bf16.msra.mxu0 0
    %1706 = vmatprep.subr.bf16.mxu0 0
    %1707 = vmatpush1.bf16.msra.mxu0 0
    %1708 = vmatprep.subr.bf16.mxu0 0
    %1709 = vmatpush1.bf16.msra.mxu0 0
    %1710 = vmatprep.subr.bf16.mxu0 0
    %1711 = vmatpush1.bf16.msra.mxu0 0
    %1712 = vmatprep.subr.bf16.mxu0 0
    %1713 = vmatpush1.bf16.msra.mxu0 0
    %1714 = vmatprep.mubr.bf16.mxu0 0
    %1715 = vmatmul.mubr.bf16.gmra.mrb[0].mxu0 %v1674
    %v1716 = vpop.f32.mrb[0].mxu0
    %v1717 = vadd.f32 0.0, %v1716
    %v1718 = vpop.f32.mrb[0].mxu0
    %v1719 = vpop.f32.mrb[0].mxu0
    %v1720 = vadd.f32 0.0, %v1719
    %v1721 = vpop.f32.mrb[0].mxu0
    %1722 = vmatprep.mubr.bf16.mxu0 0
    %1723 = vmatmul.mubr.bf16.gmra.mrb[0].mxu0 %v1677
    %v1724 = vpop.f32.mrb[0].mxu0
    %v1725 = vadd.f32 0.0, %v1724
    %v1726 = vpop.f32.mrb[0].mxu0
    %v1727 = vpop.f32.mrb[0].mxu0
    %v1728 = vpop.f32.mrb[0].mxu0
    %1729 = vdwg.mxu0
    %1733 = vrot.lane.b32.xlu0 %v1387, 8
    %v1734 = vpop.permute.xlu0 %1733
    %1735 = vrot.lane.b32.xlu0 %v1390, 8
    %v1736 = vpop.permute.xlu0 %1735
    %1737 = vrot.lane.b32.xlu0 %v1395, 8
    %v1738 = vpop.permute.xlu0 %1737
    %1745 = vrot.lane.b32.xlu0 %v1552, 16
    %v1746 = vpop.permute.xlu0 %1745
    %1747 = vrot.lane.b32.xlu0 %v1555, 16
    %v1748 = vpop.permute.xlu0 %1747
    %1749 = vrot.lane.b32.xlu0 %v1560, 16
    %v1750 = vpop.permute.xlu0 %1749
    %1757 = vrot.lane.b32.xlu0 %v1717, 24
    %v1758 = vpop.permute.xlu0 %1757
    %1759 = vrot.lane.b32.xlu0 %v1720, 24
    %v1760 = vpop.permute.xlu0 %1759
    %1761 = vrot.lane.b32.xlu0 %v1725, 24
    %v1762 = vpop.permute.xlu0 %1761
    %v1766 = vsel %vm352, %v1222, %v1734
    %v1767 = vsel %vm352, %v1225, %v1736
    %v1768 = vsel %vm352, %v1230, %v1738
    %v1769 = vsel %vm1049, %v1766, %v1746
    %v1770 = vsel %vm1049, %v1767, %v1748
    %v1771 = vsel %vm1049, %v1768, %v1750
    %v1772 = vsel %vm1053, %v1769, %v1758
    %v1773 = vsel %vm1053, %v1770, %v1760
    %v1774 = vsel %vm1053, %v1771, %v1762
    %v1778 = vrot.slane %v1772, 7
    %v1779 = vrot.slane %v1773, 7
    %v1780 = vsel %vm461, %v1778, %v1779
    %v1781 = vrot.slane %v1774, 7
    %v1782 = vsel %vm461, %v1779, %v1781
    %v1786 = vsel %vm461, %v1056, %v1778
    %v1787 = vld [vmem:[%s8] sm:$0x1]
    %v1789 = vlaneseq
    %v1790 = vshrl.u32 %v1789, 7
    %v1791 = vsub.s32 0, %v1790
    %v1792 = vrot.slane %v1787, %v1791
    %v1794 = vadd.f32 %v140, %v1792
    %v1795 = vadd.f32 %v143, %v1792
    %v1796 = vadd.f32 %v148, %v1792
    %v1797 = vadd.f32 %v151, %v1792
    %v1798 = vadd.f32 %v156, %v1792
    %v1799 = vpack.c.bf16 %v1055, %v1054
    %v1800 = vpack.c.bf16 %v1780, %v1786
    %v1801 = vpack.c.bf16 %v1782, %v1782
    %v1802 = vld [vmem:[%s7] sm:$0xf]
    %v1803 = vld [vmem:[%s7 + $0x4] sm:$0xf]
    %v1804 = vld [vmem:[%s7 + $0x8] sm:$0xf]
    %v1805 = vld [vmem:[%s7 + $0xc] sm:$0xf]
    %v1810 = vunpack.c.l.b16 %v1802
    %v1811 = vunpack.c.l.b16 %v1803
    %v1812 = vunpack.c.l.b16 %v1804
    %v1813 = vunpack.c.l.b16 %v1805
    %v1814 = vpack.c.b16 %v1811, %v1810
    %v1815 = vpack.c.b16 %v1813, %v1812
    %v1819 = vsel %vm163, %v1799, 0
    %v1822 = vsel %vm163, %v1800, 0
    %v1825 = vsel %vm163, %v1801, 0
    %1827 = vmatprep.subr.bf16.mxu0 0
    %1828 = vmatpush1.bf16.msra.mxu0 %v1814
    %1829 = vmatprep.subr.bf16.mxu0 0
    %1830 = vmatpush1.bf16.msra.mxu0 %v1815
    %1831 = vmatprep.subr.bf16.mxu0 0
    %1832 = vmatpush1.bf16.msra.mxu0 0
    %1833 = vmatprep.subr.bf16.mxu0 0
    %1834 = vmatpush1.bf16.msra.mxu0 0
    %1835 = vmatprep.subr.bf16.mxu0 0
    %1836 = vmatpush1.bf16.msra.mxu0 0
    %1837 = vmatprep.subr.bf16.mxu0 0
    %1838 = vmatpush1.bf16.msra.mxu0 0
    %1839 = vmatprep.subr.bf16.mxu0 0
    %1840 = vmatpush1.bf16.msra.mxu0 0
    %1841 = vmatprep.subr.bf16.mxu0 0
    %1842 = vmatpush1.bf16.msra.mxu0 0
    %1843 = vmatprep.subr.bf16.mxu0 0
    %1844 = vmatpush1.bf16.msra.mxu0 0
    %1845 = vmatprep.subr.bf16.mxu0 0
    %1846 = vmatpush1.bf16.msra.mxu0 0
    %1847 = vmatprep.subr.bf16.mxu0 0
    %1848 = vmatpush1.bf16.msra.mxu0 0
    %1849 = vmatprep.subr.bf16.mxu0 0
    %1850 = vmatpush1.bf16.msra.mxu0 0
    %1851 = vmatprep.subr.bf16.mxu0 0
    %1852 = vmatpush1.bf16.msra.mxu0 0
    %1853 = vmatprep.subr.bf16.mxu0 0
    %1854 = vmatpush1.bf16.msra.mxu0 0
    %1855 = vmatprep.subr.bf16.mxu0 0
    %1856 = vmatpush1.bf16.msra.mxu0 0
    %1857 = vmatprep.subr.bf16.mxu0 0
    %1858 = vmatpush1.bf16.msra.mxu0 0
    %1859 = vmatprep.mubr.bf16.mxu0 0
    %1860 = vmatmul.mubr.bf16.gmra.mrb[0].mxu0 %v1819
    %v1861 = vpop.f32.mrb[0].mxu0
    %v1862 = vadd.f32 0.0, %v1861
    %v1863 = vpop.f32.mrb[0].mxu0
    %v1864 = vpop.f32.mrb[0].mxu0
    %v1865 = vadd.f32 0.0, %v1864
    %v1866 = vpop.f32.mrb[0].mxu0
    %1867 = vmatprep.mubr.bf16.mxu0 0
    %1868 = vmatmul.mubr.bf16.gmra.mrb[0].mxu0 %v1822
    %v1869 = vpop.f32.mrb[0].mxu0
    %v1870 = vadd.f32 0.0, %v1869
    %v1871 = vpop.f32.mrb[0].mxu0
    %v1872 = vpop.f32.mrb[0].mxu0
    %v1873 = vadd.f32 0.0, %v1872
    %v1874 = vpop.f32.mrb[0].mxu0
    %1875 = vmatprep.mubr.bf16.mxu0 0
    %1876 = vmatmul.mubr.bf16.gmra.mrb[0].mxu0 %v1825
    %v1877 = vpop.f32.mrb[0].mxu0
    %v1878 = vadd.f32 0.0, %v1877
    %v1879 = vpop.f32.mrb[0].mxu0
    %v1880 = vpop.f32.mrb[0].mxu0
    %v1881 = vpop.f32.mrb[0].mxu0
    %1882 = vdwg.mxu0
    %v1883 = vadd.f32 %v1794, %v1862
    %v1884 = vadd.f32 %v1795, %v1865
    %v1885 = vadd.f32 %v1796, %v1870
    %v1886 = vadd.f32 %v1797, %v1873
    %v1887 = vadd.f32 %v1798, %v1878
    %v1888 = vld [vmem:[%s9] sm:$0x1]
    %v1889 = vld [vmem:[%s10] sm:$0x1]
    %v1890 = vsel %vm163, %v1883, 0.0
    %1891 = vadd.xlane.f32.xlu0 %v1890
    %v1892 = vpop.xlane.xlu0 %1891
    %v1893 = vsel %vm163, %v1884, 0.0
    %1894 = vadd.xlane.f32.xlu0 %v1893
    %v1895 = vpop.xlane.xlu0 %1894
    %v1896 = vsel %vm163, %v1885, 0.0
    %1897 = vadd.xlane.f32.xlu0 %v1896
    %v1898 = vpop.xlane.xlu0 %1897
    %v1899 = vsel %vm163, %v1886, 0.0
    %1900 = vadd.xlane.f32.xlu0 %v1899
    %v1901 = vpop.xlane.xlu0 %1900
    %v1902 = vsel %vm176, %v1887, 0.0
    %1903 = vadd.xlane.f32.xlu0 %v1902
    %v1904 = vpop.xlane.xlu0 %1903
    %v1905 = vmul.f32 %v1892, %v180
    %v1906 = vmul.f32 %v1895, %v180
    %v1907 = vmul.f32 %v1898, %v180
    %v1908 = vmul.f32 %v1901, %v180
    %v1909 = vmul.f32 %v1904, %v180
    %v1910 = vsub.f32 %v1883, %v1905
    %v1911 = vsub.f32 %v1884, %v1906
    %v1912 = vsub.f32 %v1885, %v1907
    %v1913 = vsub.f32 %v1886, %v1908
    %v1914 = vsub.f32 %v1887, %v1909
    %v1915 = vmul.f32 %v1910, %v1910
    %v1916 = vmul.f32 %v1911, %v1911
    %v1917 = vmul.f32 %v1912, %v1912
    %v1918 = vmul.f32 %v1913, %v1913
    %v1919 = vmul.f32 %v1914, %v1914
    %v1920 = vsel %vm163, %v1915, 0.0
    %1921 = vadd.xlane.f32.xlu0 %v1920
    %v1922 = vpop.xlane.xlu0 %1921
    %v1923 = vsel %vm163, %v1916, 0.0
    %1924 = vadd.xlane.f32.xlu0 %v1923
    %v1925 = vpop.xlane.xlu0 %1924
    %v1926 = vsel %vm163, %v1917, 0.0
    %1927 = vadd.xlane.f32.xlu0 %v1926
    %v1928 = vpop.xlane.xlu0 %1927
    %v1929 = vsel %vm163, %v1918, 0.0
    %1930 = vadd.xlane.f32.xlu0 %v1929
    %v1931 = vpop.xlane.xlu0 %1930
    %v1932 = vsel %vm176, %v1919, 0.0
    %1933 = vadd.xlane.f32.xlu0 %v1932
    %v1934 = vpop.xlane.xlu0 %1933
    %v1935 = vmul.f32 %v1922, %v180
    %v1936 = vmul.f32 %v1925, %v180
    %v1937 = vmul.f32 %v1928, %v180
    %v1938 = vmul.f32 %v1931, %v180
    %v1939 = vmul.f32 %v1934, %v180
    %v1940 = vadd.f32 %v1935, 1e-06
    %v1941 = vadd.f32 %v1936, 1e-06
    %v1942 = vadd.f32 %v1937, 1e-06
    %v1943 = vadd.f32 %v1938, 1e-06
    %v1944 = vadd.f32 %v1939, 1e-06
    %v1945 = vrsqrt.pop %v1940
    %v1946 = vrsqrt.pop %v1941
    %v1947 = vrsqrt.pop %v1942
    %v1948 = vrsqrt.pop %v1943
    %v1949 = vrsqrt.pop %v1944
    %v1950 = vmul.f32 %v1910, %v1945
    %v1951 = vmul.f32 %v1911, %v1946
    %v1952 = vmul.f32 %v1912, %v1947
    %v1953 = vmul.f32 %v1913, %v1948
    %v1954 = vmul.f32 %v1914, %v1949
    %v1956 = vlaneseq
    %v1957 = vshrl.u32 %v1956, 7
    %v1958 = vsub.s32 0, %v1957
    %v1959 = vrot.slane %v1888, %v1958
    %v1961 = vmul.f32 %v1950, %v1959
    %v1962 = vmul.f32 %v1951, %v1959
    %v1963 = vmul.f32 %v1952, %v1959
    %v1964 = vmul.f32 %v1953, %v1959
    %v1965 = vmul.f32 %v1954, %v1959
    %v1967 = vlaneseq
    %v1968 = vshrl.u32 %v1967, 7
    %v1969 = vsub.s32 0, %v1968
    %v1970 = vrot.slane %v1889, %v1969
    %v1972 = vadd.f32 %v1961, %v1970
    %v1973 = vadd.f32 %v1962, %v1970
    %v1974 = vadd.f32 %v1963, %v1970
    %v1975 = vadd.f32 %v1964, %v1970
    %v1976 = vadd.f32 %v1965, %v1970
    %v1977 = vpack.c.bf16 %v1973, %v1972
    %v1978 = vpack.c.bf16 %v1975, %v1974
    %v1979 = vpack.c.bf16 %v1976, %v1976
    %v1980 = vld [vmem:[%s11] sm:$0xf]
    %v1981 = vld [vmem:[%s11 + $0x4] sm:$0xf]
    %v1982 = vld [vmem:[%s11 + $0x8] sm:$0xf]
    %v1983 = vld [vmem:[%s11 + $0xc] sm:$0xf]
    %v1984 = vld [vmem:[%s12] sm:$0x1]
    %v1986 = vlaneseq
    %v1987 = vshrl.u32 %v1986, 7
    %v1988 = vsub.s32 0, %v1987
    %v1989 = vrot.slane %v1984, %v1988
    %v1995 = vunpack.c.l.b16 %v1980
    %v1996 = vunpack.c.l.b16 %v1981
    %v1997 = vunpack.c.l.b16 %v1982
    %v1998 = vunpack.c.l.b16 %v1983
    %v1999 = vpack.c.b16 %v1996, %v1995
    %v2000 = vpack.c.b16 %v1998, %v1997
    %v2004 = vsel %vm163, %v1977, 0
    %v2007 = vsel %vm163, %v1978, 0
    %v2010 = vsel %vm163, %v1979, 0
    %2012 = vmatprep.subr.bf16.mxu0 0
    %2013 = vmatpush1.bf16.msra.mxu0 %v1999
    %2014 = vmatprep.subr.bf16.mxu0 0
    %2015 = vmatpush1.bf16.msra.mxu0 %v2000
    %2016 = vmatprep.subr.bf16.mxu0 0
    %2017 = vmatpush1.bf16.msra.mxu0 0
    %2018 = vmatprep.subr.bf16.mxu0 0
    %2019 = vmatpush1.bf16.msra.mxu0 0
    %2020 = vmatprep.subr.bf16.mxu0 0
    %2021 = vmatpush1.bf16.msra.mxu0 0
    %2022 = vmatprep.subr.bf16.mxu0 0
    %2023 = vmatpush1.bf16.msra.mxu0 0
    %2024 = vmatprep.subr.bf16.mxu0 0
    %2025 = vmatpush1.bf16.msra.mxu0 0
    %2026 = vmatprep.subr.bf16.mxu0 0
    %2027 = vmatpush1.bf16.msra.mxu0 0
    %2028 = vmatprep.subr.bf16.mxu0 0
    %2029 = vmatpush1.bf16.msra.mxu0 0
    %2030 = vmatprep.subr.bf16.mxu0 0
    %2031 = vmatpush1.bf16.msra.mxu0 0
    %2032 = vmatprep.subr.bf16.mxu0 0
    %2033 = vmatpush1.bf16.msra.mxu0 0
    %2034 = vmatprep.subr.bf16.mxu0 0
    %2035 = vmatpush1.bf16.msra.mxu0 0
    %2036 = vmatprep.subr.bf16.mxu0 0
    %2037 = vmatpush1.bf16.msra.mxu0 0
    %2038 = vmatprep.subr.bf16.mxu0 0
    %2039 = vmatpush1.bf16.msra.mxu0 0
    %2040 = vmatprep.subr.bf16.mxu0 0
    %2041 = vmatpush1.bf16.msra.mxu0 0
    %2042 = vmatprep.subr.bf16.mxu0 0
    %2043 = vmatpush1.bf16.msra.mxu0 0
    %2044 = vmatprep.mubr.bf16.mxu0 0
    %2045 = vmatmul.mubr.bf16.gmra.mrb[0].mxu0 %v2004
    %v2046 = vpop.f32.mrb[0].mxu0
    %v2047 = vadd.f32 %v1989, %v2046
    %v2048 = vpop.f32.mrb[0].mxu0
    %v2049 = vpop.f32.mrb[0].mxu0
    %v2050 = vadd.f32 %v1989, %v2049
    %v2051 = vpop.f32.mrb[0].mxu0
    %2052 = vmatprep.mubr.bf16.mxu0 0
    %2053 = vmatmul.mubr.bf16.gmra.mrb[0].mxu0 %v2007
    %v2054 = vpop.f32.mrb[0].mxu0
    %v2055 = vadd.f32 %v1989, %v2054
    %v2056 = vpop.f32.mrb[0].mxu0
    %v2057 = vpop.f32.mrb[0].mxu0
    %v2058 = vadd.f32 %v1989, %v2057
    %v2059 = vpop.f32.mrb[0].mxu0
    %2060 = vmatprep.mubr.bf16.mxu0 0
    %2061 = vmatmul.mubr.bf16.gmra.mrb[0].mxu0 %v2010
    %v2062 = vpop.f32.mrb[0].mxu0
    %v2063 = vadd.f32 %v1989, %v2062
    %v2064 = vpop.f32.mrb[0].mxu0
    %v2065 = vpop.f32.mrb[0].mxu0
    %v2066 = vpop.f32.mrb[0].mxu0
    %2067 = vdwg.mxu0
    %v2068 = vmul.f32 %v2047, 0.5
    %v2069 = vmul.f32 %v2050, 0.5
    %v2070 = vmul.f32 %v2055, 0.5
    %v2071 = vmul.f32 %v2058, 0.5
    %v2072 = vmul.f32 %v2063, 0.5
    %v2073 = vmul.f32 %v2047, 0.70710677
    %v2074 = vmul.f32 %v2050, 0.70710677
    %v2075 = vmul.f32 %v2055, 0.70710677
    %v2076 = vmul.f32 %v2058, 0.70710677
    %v2077 = vmul.f32 %v2063, 0.70710677
    %v2078 = verf.f32.pop %v2073
    %v2079 = verf.f32.pop %v2074
    %v2080 = verf.f32.pop %v2075
    %v2081 = verf.f32.pop %v2076
    %v2082 = verf.f32.pop %v2077
    %v2083 = vadd.f32 %v2078, 1.0
    %v2084 = vadd.f32 %v2079, 1.0
    %v2085 = vadd.f32 %v2080, 1.0
    %v2086 = vadd.f32 %v2081, 1.0
    %v2087 = vadd.f32 %v2082, 1.0
    %v2088 = vmul.f32 %v2068, %v2083
    %v2089 = vmul.f32 %v2069, %v2084
    %v2090 = vmul.f32 %v2070, %v2085
    %v2091 = vmul.f32 %v2071, %v2086
    %v2092 = vmul.f32 %v2072, %v2087
    %v2093 = vpack.c.bf16 %v2089, %v2088
    %v2094 = vpack.c.bf16 %v2091, %v2090
    %v2095 = vpack.c.bf16 %v2092, %v2092
    %v2096 = vld [vmem:[%s13] sm:$0xf]
    %v2097 = vld [vmem:[%s13 + $0x4] sm:$0xf]
    %v2098 = vld [vmem:[%s13 + $0x8] sm:$0xf]
    %v2099 = vld [vmem:[%s13 + $0xc] sm:$0xf]
    %v2100 = vld [vmem:[%s13 + $0x10] sm:$0xf]
    %v2101 = vld [vmem:[%s13 + $0x14] sm:$0xf]
    %v2102 = vld [vmem:[%s13 + $0x18] sm:$0xf]
    %v2103 = vld [vmem:[%s13 + $0x1c] sm:$0xf]
    %v2104 = vld [vmem:[%s13 + $0x20] sm:$0xf]
    %v2105 = vld [vmem:[%s13 + $0x24] sm:$0xf]
    %v2106 = vld [vmem:[%s13 + $0x28] sm:$0xf]
    %v2107 = vld [vmem:[%s13 + $0x2c] sm:$0xf]
    %v2108 = vld [vmem:[%s13 + $0x30] sm:$0xf]
    %v2109 = vld [vmem:[%s13 + $0x34] sm:$0xf]
    %v2110 = vld [vmem:[%s13 + $0x38] sm:$0xf]
    %v2111 = vld [vmem:[%s13 + $0x3c] sm:$0xf]
    %v2128 = vunpack.c.l.b16 %v2096
    %v2129 = vunpack.c.l.b16 %v2097
    %v2130 = vunpack.c.l.b16 %v2098
    %v2131 = vunpack.c.l.b16 %v2099
    %v2132 = vunpack.c.l.b16 %v2100
    %v2133 = vunpack.c.l.b16 %v2101
    %v2134 = vunpack.c.l.b16 %v2102
    %v2135 = vunpack.c.l.b16 %v2103
    %v2136 = vunpack.c.l.b16 %v2104
    %v2137 = vunpack.c.l.b16 %v2105
    %v2138 = vunpack.c.l.b16 %v2106
    %v2139 = vunpack.c.l.b16 %v2107
    %v2140 = vunpack.c.l.b16 %v2108
    %v2141 = vunpack.c.l.b16 %v2109
    %v2142 = vunpack.c.l.b16 %v2110
    %v2143 = vunpack.c.l.b16 %v2111
    %v2144 = vpack.c.b16 %v2129, %v2128
    %v2145 = vpack.c.b16 %v2131, %v2130
    %v2146 = vpack.c.b16 %v2133, %v2132
    %v2147 = vpack.c.b16 %v2135, %v2134
    %v2148 = vpack.c.b16 %v2137, %v2136
    %v2149 = vpack.c.b16 %v2139, %v2138
    %v2150 = vpack.c.b16 %v2141, %v2140
    %v2151 = vpack.c.b16 %v2143, %v2142
    %2160 = vmatprep.subr.bf16.mxu0 0
    %2161 = vmatpush1.bf16.msra.mxu0 %v2144
    %2162 = vmatprep.subr.bf16.mxu0 0
    %2163 = vmatpush1.bf16.msra.mxu0 %v2145
    %2164 = vmatprep.subr.bf16.mxu0 0
    %2165 = vmatpush1.bf16.msra.mxu0 %v2146
    %2166 = vmatprep.subr.bf16.mxu0 0
    %2167 = vmatpush1.bf16.msra.mxu0 %v2147
    %2168 = vmatprep.subr.bf16.mxu0 0
    %2169 = vmatpush1.bf16.msra.mxu0 %v2148
    %2170 = vmatprep.subr.bf16.mxu0 0
    %2171 = vmatpush1.bf16.msra.mxu0 %v2149
    %2172 = vmatprep.subr.bf16.mxu0 0
    %2173 = vmatpush1.bf16.msra.mxu0 %v2150
    %2174 = vmatprep.subr.bf16.mxu0 0
    %2175 = vmatpush1.bf16.msra.mxu0 %v2151
    %2176 = vmatprep.subr.bf16.mxu0 0
    %2177 = vmatpush1.bf16.msra.mxu0 0
    %2178 = vmatprep.subr.bf16.mxu0 0
    %2179 = vmatpush1.bf16.msra.mxu0 0
    %2180 = vmatprep.subr.bf16.mxu0 0
    %2181 = vmatpush1.bf16.msra.mxu0 0
    %2182 = vmatprep.subr.bf16.mxu0 0
    %2183 = vmatpush1.bf16.msra.mxu0 0
    %2184 = vmatprep.subr.bf16.mxu0 0
    %2185 = vmatpush1.bf16.msra.mxu0 0
    %2186 = vmatprep.subr.bf16.mxu0 0
    %2187 = vmatpush1.bf16.msra.mxu0 0
    %2188 = vmatprep.subr.bf16.mxu0 0
    %2189 = vmatpush1.bf16.msra.mxu0 0
    %2190 = vmatprep.subr.bf16.mxu0 0
    %2191 = vmatpush1.bf16.msra.mxu0 0
    %2192 = vmatprep.mubr.bf16.mxu0 0
    %2193 = vmatmul.mubr.bf16.gmra.mrb[0].mxu0 %v2093
    %v2194 = vpop.f32.mrb[0].mxu0
    %v2195 = vadd.f32 0.0, %v2194
    %v2196 = vpop.f32.mrb[0].mxu0
    %v2197 = vpop.f32.mrb[0].mxu0
    %v2198 = vadd.f32 0.0, %v2197
    %v2199 = vpop.f32.mrb[0].mxu0
    %2200 = vmatprep.mubr.bf16.mxu0 0
    %2201 = vmatmul.mubr.bf16.gmra.mrb[0].mxu0 %v2094
    %v2202 = vpop.f32.mrb[0].mxu0
    %v2203 = vadd.f32 0.0, %v2202
    %v2204 = vpop.f32.mrb[0].mxu0
    %v2205 = vpop.f32.mrb[0].mxu0
    %v2206 = vadd.f32 0.0, %v2205
    %v2207 = vpop.f32.mrb[0].mxu0
    %2208 = vmatprep.mubr.bf16.mxu0 0
    %2209 = vmatmul.mubr.bf16.gmra.mrb[0].mxu0 %v2095
    %v2210 = vpop.f32.mrb[0].mxu0
    %v2211 = vadd.f32 0.0, %v2210
    %v2212 = vpop.f32.mrb[0].mxu0
    %v2213 = vpop.f32.mrb[0].mxu0
    %v2214 = vpop.f32.mrb[0].mxu0
    %2215 = vdwg.mxu0
    %v2216 = vadd.f32 %v1883, %v2195
    %v2217 = vadd.f32 %v1884, %v2198
    %v2218 = vadd.f32 %v1885, %v2203
    %v2219 = vadd.f32 %v1886, %v2206
    %v2220 = vadd.f32 %v1887, %v2211
    %v2221 = vld [vmem:[%s14] sm:$0x1]
    %v2223 = vlaneseq
    %v2224 = vshrl.u32 %v2223, 7
    %v2225 = vsub.s32 0, %v2224
    %v2226 = vrot.slane %v2221, %v2225
    %v2228 = vadd.f32 %v2216, %v2226
    %v2229 = vadd.f32 %v2217, %v2226
    %v2230 = vadd.f32 %v2218, %v2226
    %v2231 = vadd.f32 %v2219, %v2226
    %v2232 = vadd.f32 %v2220, %v2226
    %s2233 = scalar_lea.vmem %s3, 1
    %v2234 = vld [vmem:[%s2233] sm:$0x1]
    %s2235 = scalar_lea.vmem %s4, 1
    %v2236 = vld [vmem:[%s2235] sm:$0x1]
    %v2237 = vsel %vm163, %v2228, 0.0
    %2238 = vadd.xlane.f32.xlu0 %v2237
    %v2239 = vpop.xlane.xlu0 %2238
    %v2240 = vsel %vm163, %v2229, 0.0
    %2241 = vadd.xlane.f32.xlu0 %v2240
    %v2242 = vpop.xlane.xlu0 %2241
    %v2243 = vsel %vm163, %v2230, 0.0
    %2244 = vadd.xlane.f32.xlu0 %v2243
    %v2245 = vpop.xlane.xlu0 %2244
    %v2246 = vsel %vm163, %v2231, 0.0
    %2247 = vadd.xlane.f32.xlu0 %v2246
    %v2248 = vpop.xlane.xlu0 %2247
    %v2249 = vsel %vm176, %v2232, 0.0
    %2250 = vadd.xlane.f32.xlu0 %v2249
    %v2251 = vpop.xlane.xlu0 %2250
    %v2252 = vmul.f32 %v2239, %v180
    %v2253 = vmul.f32 %v2242, %v180
    %v2254 = vmul.f32 %v2245, %v180
    %v2255 = vmul.f32 %v2248, %v180
    %v2256 = vmul.f32 %v2251, %v180
    %v2257 = vsub.f32 %v2228, %v2252
    %v2258 = vsub.f32 %v2229, %v2253
    %v2259 = vsub.f32 %v2230, %v2254
    %v2260 = vsub.f32 %v2231, %v2255
    %v2261 = vsub.f32 %v2232, %v2256
    %v2262 = vmul.f32 %v2257, %v2257
    %v2263 = vmul.f32 %v2258, %v2258
    %v2264 = vmul.f32 %v2259, %v2259
    %v2265 = vmul.f32 %v2260, %v2260
    %v2266 = vmul.f32 %v2261, %v2261
    %v2267 = vsel %vm163, %v2262, 0.0
    %2268 = vadd.xlane.f32.xlu0 %v2267
    %v2269 = vpop.xlane.xlu0 %2268
    %v2270 = vsel %vm163, %v2263, 0.0
    %2271 = vadd.xlane.f32.xlu0 %v2270
    %v2272 = vpop.xlane.xlu0 %2271
    %v2273 = vsel %vm163, %v2264, 0.0
    %2274 = vadd.xlane.f32.xlu0 %v2273
    %v2275 = vpop.xlane.xlu0 %2274
    %v2276 = vsel %vm163, %v2265, 0.0
    %2277 = vadd.xlane.f32.xlu0 %v2276
    %v2278 = vpop.xlane.xlu0 %2277
    %v2279 = vsel %vm176, %v2266, 0.0
    %2280 = vadd.xlane.f32.xlu0 %v2279
    %v2281 = vpop.xlane.xlu0 %2280
    %v2282 = vmul.f32 %v2269, %v180
    %v2283 = vmul.f32 %v2272, %v180
    %v2284 = vmul.f32 %v2275, %v180
    %v2285 = vmul.f32 %v2278, %v180
    %v2286 = vmul.f32 %v2281, %v180
    %v2287 = vadd.f32 %v2282, 1e-06
    %v2288 = vadd.f32 %v2283, 1e-06
    %v2289 = vadd.f32 %v2284, 1e-06
    %v2290 = vadd.f32 %v2285, 1e-06
    %v2291 = vadd.f32 %v2286, 1e-06
    %v2292 = vrsqrt.pop %v2287
    %v2293 = vrsqrt.pop %v2288
    %v2294 = vrsqrt.pop %v2289
    %v2295 = vrsqrt.pop %v2290
    %v2296 = vrsqrt.pop %v2291
    %v2297 = vmul.f32 %v2257, %v2292
    %v2298 = vmul.f32 %v2258, %v2293
    %v2299 = vmul.f32 %v2259, %v2294
    %v2300 = vmul.f32 %v2260, %v2295
    %v2301 = vmul.f32 %v2261, %v2296
    %v2303 = vlaneseq
    %v2304 = vshrl.u32 %v2303, 7
    %v2305 = vsub.s32 0, %v2304
    %v2306 = vrot.slane %v2234, %v2305
    %v2308 = vmul.f32 %v2297, %v2306
    %v2309 = vmul.f32 %v2298, %v2306
    %v2310 = vmul.f32 %v2299, %v2306
    %v2311 = vmul.f32 %v2300, %v2306
    %v2312 = vmul.f32 %v2301, %v2306
    %v2314 = vlaneseq
    %v2315 = vshrl.u32 %v2314, 7
    %v2316 = vsub.s32 0, %v2315
    %v2317 = vrot.slane %v2236, %v2316
    %v2319 = vadd.f32 %v2308, %v2317
    %v2320 = vadd.f32 %v2309, %v2317
    %v2321 = vadd.f32 %v2310, %v2317
    %v2322 = vadd.f32 %v2311, %v2317
    %v2323 = vadd.f32 %v2312, %v2317
    %v2324 = vpack.c.bf16 %v2320, %v2319
    %v2325 = vpack.c.bf16 %v2322, %v2321
    %v2326 = vpack.c.bf16 %v2323, %v2323
    %s2327 = scalar_lea.vmem %s5, 16
    %v2328 = vld [vmem:[%s2327] sm:$0xf]
    %v2329 = vld [vmem:[%s2327 + $0x4] sm:$0xf]
    %v2330 = vld [vmem:[%s2327 + $0x8] sm:$0xf]
    %v2331 = vld [vmem:[%s2327 + $0xc] sm:$0xf]
    %s2332 = scalar_lea.vmem %s6, 1
    %v2333 = vld [vmem:[%s2332] sm:$0x1]
    %v2335 = vlaneseq
    %v2336 = vshrl.u32 %v2335, 7
    %v2337 = vsub.s32 0, %v2336
    %v2338 = vrot.slane %v2333, %v2337
    %v2344 = vunpack.c.l.b16 %v2328
    %v2345 = vunpack.c.l.b16 %v2329
    %v2346 = vunpack.c.l.b16 %v2330
    %v2347 = vunpack.c.l.b16 %v2331
    %v2348 = vpack.c.b16 %v2345, %v2344
    %v2349 = vpack.c.b16 %v2347, %v2346
    %v2353 = vsel %vm163, %v2324, 0
    %v2356 = vsel %vm163, %v2325, 0
    %v2359 = vsel %vm163, %v2326, 0
    %2361 = vmatprep.subr.bf16.mxu0 0
    %2362 = vmatpush1.bf16.msra.mxu0 %v2348
    %2363 = vmatprep.subr.bf16.mxu0 0
    %2364 = vmatpush1.bf16.msra.mxu0 %v2349
    %2365 = vmatprep.subr.bf16.mxu0 0
    %2366 = vmatpush1.bf16.msra.mxu0 0
    %2367 = vmatprep.subr.bf16.mxu0 0
    %2368 = vmatpush1.bf16.msra.mxu0 0
    %2369 = vmatprep.subr.bf16.mxu0 0
    %2370 = vmatpush1.bf16.msra.mxu0 0
    %2371 = vmatprep.subr.bf16.mxu0 0
    %2372 = vmatpush1.bf16.msra.mxu0 0
    %2373 = vmatprep.subr.bf16.mxu0 0
    %2374 = vmatpush1.bf16.msra.mxu0 0
    %2375 = vmatprep.subr.bf16.mxu0 0
    %2376 = vmatpush1.bf16.msra.mxu0 0
    %2377 = vmatprep.subr.bf16.mxu0 0
    %2378 = vmatpush1.bf16.msra.mxu0 0
    %2379 = vmatprep.subr.bf16.mxu0 0
    %2380 = vmatpush1.bf16.msra.mxu0 0
    %2381 = vmatprep.subr.bf16.mxu0 0
    %2382 = vmatpush1.bf16.msra.mxu0 0
    %2383 = vmatprep.subr.bf16.mxu0 0
    %2384 = vmatpush1.bf16.msra.mxu0 0
    %2385 = vmatprep.subr.bf16.mxu0 0
    %2386 = vmatpush1.bf16.msra.mxu0 0
    %2387 = vmatprep.subr.bf16.mxu0 0
    %2388 = vmatpush1.bf16.msra.mxu0 0
    %2389 = vmatprep.subr.bf16.mxu0 0
    %2390 = vmatpush1.bf16.msra.mxu0 0
    %2391 = vmatprep.subr.bf16.mxu0 0
    %2392 = vmatpush1.bf16.msra.mxu0 0
    %2393 = vmatprep.mubr.bf16.mxu0 0
    %2394 = vmatmul.mubr.bf16.gmra.mrb[0].mxu0 %v2353
    %v2395 = vpop.f32.mrb[0].mxu0
    %v2396 = vadd.f32 %v2338, %v2395
    %v2397 = vpop.f32.mrb[0].mxu0
    %v2398 = vpop.f32.mrb[0].mxu0
    %v2399 = vadd.f32 %v2338, %v2398
    %v2400 = vpop.f32.mrb[0].mxu0
    %2401 = vmatprep.mubr.bf16.mxu0 0
    %2402 = vmatmul.mubr.bf16.gmra.mrb[0].mxu0 %v2356
    %v2403 = vpop.f32.mrb[0].mxu0
    %v2404 = vadd.f32 %v2338, %v2403
    %v2405 = vpop.f32.mrb[0].mxu0
    %v2406 = vpop.f32.mrb[0].mxu0
    %v2407 = vadd.f32 %v2338, %v2406
    %v2408 = vpop.f32.mrb[0].mxu0
    %2409 = vmatprep.mubr.bf16.mxu0 0
    %2410 = vmatmul.mubr.bf16.gmra.mrb[0].mxu0 %v2359
    %v2411 = vpop.f32.mrb[0].mxu0
    %v2412 = vadd.f32 %v2338, %v2411
    %v2413 = vpop.f32.mrb[0].mxu0
    %v2414 = vpop.f32.mrb[0].mxu0
    %v2415 = vpop.f32.mrb[0].mxu0
    %2416 = vdwg.mxu0
    %v2417 = vpack.c.bf16 %v2399, %v2396
    %v2418 = vpack.c.bf16 %v2404, %v2404
    %2421 = vrot.lane.b32.xlu0 %v2417, 96
    %v2422 = vpop.permute.xlu0 %2421
    %2423 = vrot.lane.b32.xlu0 %v2418, 96
    %v2424 = vpop.permute.xlu0 %2423
    %v2426 = vsel %vm352, %v2417, 0
    %v2429 = vsel %vm352, %v2418, 0
    %v2432 = vsel %vm352, %v2422, 0
    %v2435 = vsel %vm352, %v2424, 0
    %2437 = vmatprep.subr.bf16.mxu0 0
    %2438 = vmatpush1.bf16.xpose.msra.mxu0 %v2432
    %2439 = vmatprep.subr.bf16.mxu0 0
    %2440 = vmatpush1.bf16.xpose.msra.mxu0 %v2435
    %2441 = vmatprep.subr.bf16.mxu0 0
    %2442 = vmatpush1.bf16.xpose.msra.mxu0 0
    %2443 = vmatprep.subr.bf16.mxu0 0
    %2444 = vmatpush1.bf16.xpose.msra.mxu0 0
    %2445 = vmatprep.subr.bf16.mxu0 0
    %2446 = vmatpush1.bf16.xpose.msra.mxu0 0
    %2447 = vmatprep.subr.bf16.mxu0 0
    %2448 = vmatpush1.bf16.xpose.msra.mxu0 0
    %2449 = vmatprep.subr.bf16.mxu0 0
    %2450 = vmatpush1.bf16.xpose.msra.mxu0 0
    %2451 = vmatprep.subr.bf16.mxu0 0
    %2452 = vmatpush1.bf16.xpose.msra.mxu0 0
    %2453 = vmatprep.subr.bf16.mxu0 0
    %2454 = vmatpush1.bf16.xpose.msra.mxu0 0
    %2455 = vmatprep.subr.bf16.mxu0 0
    %2456 = vmatpush1.bf16.xpose.msra.mxu0 0
    %2457 = vmatprep.subr.bf16.mxu0 0
    %2458 = vmatpush1.bf16.xpose.msra.mxu0 0
    %2459 = vmatprep.subr.bf16.mxu0 0
    %2460 = vmatpush1.bf16.xpose.msra.mxu0 0
    %2461 = vmatprep.subr.bf16.mxu0 0
    %2462 = vmatpush1.bf16.xpose.msra.mxu0 0
    %2463 = vmatprep.subr.bf16.mxu0 0
    %2464 = vmatpush1.bf16.xpose.msra.mxu0 0
    %2465 = vmatprep.subr.bf16.mxu0 0
    %2466 = vmatpush1.bf16.xpose.msra.mxu0 0
    %2467 = vmatprep.subr.bf16.mxu0 0
    %2468 = vmatpush1.bf16.xpose.msra.mxu0 0
    %2469 = vmatprep.mubr.bf16.mxu0 0
    %2470 = vmatmul.mubr.bf16.gmra.mrb[0].mxu0 %v2426
    %v2471 = vpop.f32.mrb[0].mxu0
    %v2472 = vadd.f32 0.0, %v2471
    %v2473 = vpop.f32.mrb[0].mxu0
    %v2474 = vpop.f32.mrb[0].mxu0
    %v2475 = vadd.f32 0.0, %v2474
    %v2476 = vpop.f32.mrb[0].mxu0
    %2477 = vmatprep.mubr.bf16.mxu0 0
    %2478 = vmatmul.mubr.bf16.gmra.mrb[0].mxu0 %v2429
    %v2479 = vpop.f32.mrb[0].mxu0
    %v2480 = vadd.f32 0.0, %v2479
    %v2481 = vpop.f32.mrb[0].mxu0
    %v2482 = vpop.f32.mrb[0].mxu0
    %v2483 = vpop.f32.mrb[0].mxu0
    %2484 = vdwg.mxu0
    %v2485 = vsel %vm413, %v2472, -inf
    %2486 = vmax.xlane.f32.xlu0 %v2485
    %v2487 = vpop.xlane.xlu0 %2486
    %v2488 = vsel %vm413, %v2475, -inf
    %2489 = vmax.xlane.f32.xlu0 %v2488
    %v2490 = vpop.xlane.xlu0 %2489
    %v2491 = vsel %vm420, %v2480, -inf
    %2492 = vmax.xlane.f32.xlu0 %v2491
    %v2493 = vpop.xlane.xlu0 %2492
    %v2494 = vsub.f32 %v2472, %v2487
    %v2495 = vsub.f32 %v2475, %v2490
    %v2496 = vsub.f32 %v2480, %v2493
    %v2497 = vmul.f32 %v2494, 1.442695
    %v2498 = vpow.pop %v2497
    %v2499 = vmul.f32 %v2495, 1.442695
    %v2500 = vpow.pop %v2499
    %v2501 = vmul.f32 %v2496, 1.442695
    %v2502 = vpow.pop %v2501
    %v2503 = vsel %vm413, %v2498, 0.0
    %2504 = vadd.xlane.f32.xlu0 %v2503
    %v2505 = vpop.xlane.xlu0 %2504
    %v2506 = vsel %vm413, %v2500, 0.0
    %2507 = vadd.xlane.f32.xlu0 %v2506
    %v2508 = vpop.xlane.xlu0 %2507
    %v2509 = vsel %vm420, %v2502, 0.0
    %2510 = vadd.xlane.f32.xlu0 %v2509
    %v2511 = vpop.xlane.xlu0 %2510
    %v2512 = vrcp.pop %v2505
    %v2513 = vrcp.pop %v2508
    %v2514 = vrcp.pop %v2511
    %v2515 = vmul.f32 %v2498, %v2512
    %v2516 = vmul.f32 %v2500, %v2513
    %v2517 = vmul.f32 %v2502, %v2514
    %v2518 = vpack.c.bf16 %v2516, %v2515
    %v2519 = vpack.c.bf16 %v2517, %v2517
    %2520 = vrot.lane.b32.xlu0 %v2417, 64
    %v2521 = vpop.permute.xlu0 %2520
    %2522 = vrot.lane.b32.xlu0 %v2418, 64
    %v2523 = vpop.permute.xlu0 %2522
    %v2526 = vsel %vm413, %v2518, 0
    %v2529 = vsel %vm413, %v2519, 0
    %v2532 = vand.u32 %v2523, %v463
    %2534 = vmatprep.subr.bf16.mxu0 0
    %2535 = vmatpush1.bf16.msra.mxu0 %v2521
    %2536 = vmatprep.subr.bf16.mxu0 0
    %2537 = vmatpush1.bf16.msra.mxu0 %v2532
    %2538 = vmatprep.subr.bf16.mxu0 0
    %2539 = vmatpush1.bf16.msra.mxu0 0
    %2540 = vmatprep.subr.bf16.mxu0 0
    %2541 = vmatpush1.bf16.msra.mxu0 0
    %2542 = vmatprep.subr.bf16.mxu0 0
    %2543 = vmatpush1.bf16.msra.mxu0 0
    %2544 = vmatprep.subr.bf16.mxu0 0
    %2545 = vmatpush1.bf16.msra.mxu0 0
    %2546 = vmatprep.subr.bf16.mxu0 0
    %2547 = vmatpush1.bf16.msra.mxu0 0
    %2548 = vmatprep.subr.bf16.mxu0 0
    %2549 = vmatpush1.bf16.msra.mxu0 0
    %2550 = vmatprep.subr.bf16.mxu0 0
    %2551 = vmatpush1.bf16.msra.mxu0 0
    %2552 = vmatprep.subr.bf16.mxu0 0
    %2553 = vmatpush1.bf16.msra.mxu0 0
    %2554 = vmatprep.subr.bf16.mxu0 0
    %2555 = vmatpush1.bf16.msra.mxu0 0
    %2556 = vmatprep.subr.bf16.mxu0 0
    %2557 = vmatpush1.bf16.msra.mxu0 0
    %2558 = vmatprep.subr.bf16.mxu0 0
    %2559 = vmatpush1.bf16.msra.mxu0 0
    %2560 = vmatprep.subr.bf16.mxu0 0
    %2561 = vmatpush1.bf16.msra.mxu0 0
    %2562 = vmatprep.subr.bf16.mxu0 0
    %2563 = vmatpush1.bf16.msra.mxu0 0
    %2564 = vmatprep.subr.bf16.mxu0 0
    %2565 = vmatpush1.bf16.msra.mxu0 0
    %2566 = vmatprep.mubr.bf16.mxu0 0
    %2567 = vmatmul.mubr.bf16.gmra.mrb[0].mxu0 %v2526
    %v2568 = vpop.f32.mrb[0].mxu0
    %v2569 = vadd.f32 0.0, %v2568
    %v2570 = vpop.f32.mrb[0].mxu0
    %v2571 = vpop.f32.mrb[0].mxu0
    %v2572 = vadd.f32 0.0, %v2571
    %v2573 = vpop.f32.mrb[0].mxu0
    %2574 = vmatprep.mubr.bf16.mxu0 0
    %2575 = vmatmul.mubr.bf16.gmra.mrb[0].mxu0 %v2529
    %v2576 = vpop.f32.mrb[0].mxu0
    %v2577 = vadd.f32 0.0, %v2576
    %v2578 = vpop.f32.mrb[0].mxu0
    %v2579 = vpop.f32.mrb[0].mxu0
    %v2580 = vpop.f32.mrb[0].mxu0
    %2581 = vdwg.mxu0
    %2582 = vrot.lane.b32.xlu0 %v2417, 120
    %v2583 = vpop.permute.xlu0 %2582
    %2584 = vrot.lane.b32.xlu0 %v2418, 120
    %v2585 = vpop.permute.xlu0 %2584
    %2586 = vrot.lane.b32.xlu0 %v2417, 88
    %v2587 = vpop.permute.xlu0 %2586
    %2588 = vrot.lane.b32.xlu0 %v2418, 88
    %v2589 = vpop.permute.xlu0 %2588
    %v2591 = vsel %vm352, %v2583, 0
    %v2594 = vsel %vm352, %v2585, 0
    %v2597 = vsel %vm352, %v2587, 0
    %v2600 = vsel %vm352, %v2589, 0
    %2602 = vmatprep.subr.bf16.mxu0 0
    %2603 = vmatpush1.bf16.xpose.msra.mxu0 %v2597
    %2604 = vmatprep.subr.bf16.mxu0 0
    %2605 = vmatpush1.bf16.xpose.msra.mxu0 %v2600
    %2606 = vmatprep.subr.bf16.mxu0 0
    %2607 = vmatpush1.bf16.xpose.msra.mxu0 0
    %2608 = vmatprep.subr.bf16.mxu0 0
    %2609 = vmatpush1.bf16.xpose.msra.mxu0 0
    %2610 = vmatprep.subr.bf16.mxu0 0
    %2611 = vmatpush1.bf16.xpose.msra.mxu0 0
    %2612 = vmatprep.subr.bf16.mxu0 0
    %2613 = vmatpush1.bf16.xpose.msra.mxu0 0
    %2614 = vmatprep.subr.bf16.mxu0 0
    %2615 = vmatpush1.bf16.xpose.msra.mxu0 0
    %2616 = vmatprep.subr.bf16.mxu0 0
    %2617 = vmatpush1.bf16.xpose.msra.mxu0 0
    %2618 = vmatprep.subr.bf16.mxu0 0
    %2619 = vmatpush1.bf16.xpose.msra.mxu0 0
    %2620 = vmatprep.subr.bf16.mxu0 0
    %2621 = vmatpush1.bf16.xpose.msra.mxu0 0
    %2622 = vmatprep.subr.bf16.mxu0 0
    %2623 = vmatpush1.bf16.xpose.msra.mxu0 0
    %2624 = vmatprep.subr.bf16.mxu0 0
    %2625 = vmatpush1.bf16.xpose.msra.mxu0 0
    %2626 = vmatprep.subr.bf16.mxu0 0
    %2627 = vmatpush1.bf16.xpose.msra.mxu0 0
    %2628 = vmatprep.subr.bf16.mxu0 0
    %2629 = vmatpush1.bf16.xpose.msra.mxu0 0
    %2630 = vmatprep.subr.bf16.mxu0 0
    %2631 = vmatpush1.bf16.xpose.msra.mxu0 0
    %2632 = vmatprep.subr.bf16.mxu0 0
    %2633 = vmatpush1.bf16.xpose.msra.mxu0 0
    %2634 = vmatprep.mubr.bf16.mxu0 0
    %2635 = vmatmul.mubr.bf16.gmra.mrb[0].mxu0 %v2591
    %v2636 = vpop.f32.mrb[0].mxu0
    %v2637 = vadd.f32 0.0, %v2636
    %v2638 = vpop.f32.mrb[0].mxu0
    %v2639 = vpop.f32.mrb[0].mxu0
    %v2640 = vadd.f32 0.0, %v2639
    %v2641 = vpop.f32.mrb[0].mxu0
    %2642 = vmatprep.mubr.bf16.mxu0 0
    %2643 = vmatmul.mubr.bf16.gmra.mrb[0].mxu0 %v2594
    %v2644 = vpop.f32.mrb[0].mxu0
    %v2645 = vadd.f32 0.0, %v2644
    %v2646 = vpop.f32.mrb[0].mxu0
    %v2647 = vpop.f32.mrb[0].mxu0
    %v2648 = vpop.f32.mrb[0].mxu0
    %2649 = vdwg.mxu0
    %v2650 = vsel %vm413, %v2637, -inf
    %2651 = vmax.xlane.f32.xlu0 %v2650
    %v2652 = vpop.xlane.xlu0 %2651
    %v2653 = vsel %vm413, %v2640, -inf
    %2654 = vmax.xlane.f32.xlu0 %v2653
    %v2655 = vpop.xlane.xlu0 %2654
    %v2656 = vsel %vm420, %v2645, -inf
    %2657 = vmax.xlane.f32.xlu0 %v2656
    %v2658 = vpop.xlane.xlu0 %2657
    %v2659 = vsub.f32 %v2637, %v2652
    %v2660 = vsub.f32 %v2640, %v2655
    %v2661 = vsub.f32 %v2645, %v2658
    %v2662 = vmul.f32 %v2659, 1.442695
    %v2663 = vpow.pop %v2662
    %v2664 = vmul.f32 %v2660, 1.442695
    %v2665 = vpow.pop %v2664
    %v2666 = vmul.f32 %v2661, 1.442695
    %v2667 = vpow.pop %v2666
    %v2668 = vsel %vm413, %v2663, 0.0
    %2669 = vadd.xlane.f32.xlu0 %v2668
    %v2670 = vpop.xlane.xlu0 %2669
    %v2671 = vsel %vm413, %v2665, 0.0
    %2672 = vadd.xlane.f32.xlu0 %v2671
    %v2673 = vpop.xlane.xlu0 %2672
    %v2674 = vsel %vm420, %v2667, 0.0
    %2675 = vadd.xlane.f32.xlu0 %v2674
    %v2676 = vpop.xlane.xlu0 %2675
    %v2677 = vrcp.pop %v2670
    %v2678 = vrcp.pop %v2673
    %v2679 = vrcp.pop %v2676
    %v2680 = vmul.f32 %v2663, %v2677
    %v2681 = vmul.f32 %v2665, %v2678
    %v2682 = vmul.f32 %v2667, %v2679
    %v2683 = vpack.c.bf16 %v2681, %v2680
    %v2684 = vpack.c.bf16 %v2682, %v2682
    %2685 = vrot.lane.b32.xlu0 %v2417, 56
    %v2686 = vpop.permute.xlu0 %2685
    %2687 = vrot.lane.b32.xlu0 %v2418, 56
    %v2688 = vpop.permute.xlu0 %2687
    %v2691 = vsel %vm413, %v2683, 0
    %v2694 = vsel %vm413, %v2684, 0
    %v2697 = vand.u32 %v2688, %v463
    %2699 = vmatprep.subr.bf16.mxu0 0
    %2700 = vmatpush1.bf16.msra.mxu0 %v2686
    %2701 = vmatprep.subr.bf16.mxu0 0
    %2702 = vmatpush1.bf16.msra.mxu0 %v2697
    %2703 = vmatprep.subr.bf16.mxu0 0
    %2704 = vmatpush1.bf16.msra.mxu0 0
    %2705 = vmatprep.subr.bf16.mxu0 0
    %2706 = vmatpush1.bf16.msra.mxu0 0
    %2707 = vmatprep.subr.bf16.mxu0 0
    %2708 = vmatpush1.bf16.msra.mxu0 0
    %2709 = vmatprep.subr.bf16.mxu0 0
    %2710 = vmatpush1.bf16.msra.mxu0 0
    %2711 = vmatprep.subr.bf16.mxu0 0
    %2712 = vmatpush1.bf16.msra.mxu0 0
    %2713 = vmatprep.subr.bf16.mxu0 0
    %2714 = vmatpush1.bf16.msra.mxu0 0
    %2715 = vmatprep.subr.bf16.mxu0 0
    %2716 = vmatpush1.bf16.msra.mxu0 0
    %2717 = vmatprep.subr.bf16.mxu0 0
    %2718 = vmatpush1.bf16.msra.mxu0 0
    %2719 = vmatprep.subr.bf16.mxu0 0
    %2720 = vmatpush1.bf16.msra.mxu0 0
    %2721 = vmatprep.subr.bf16.mxu0 0
    %2722 = vmatpush1.bf16.msra.mxu0 0
    %2723 = vmatprep.subr.bf16.mxu0 0
    %2724 = vmatpush1.bf16.msra.mxu0 0
    %2725 = vmatprep.subr.bf16.mxu0 0
    %2726 = vmatpush1.bf16.msra.mxu0 0
    %2727 = vmatprep.subr.bf16.mxu0 0
    %2728 = vmatpush1.bf16.msra.mxu0 0
    %2729 = vmatprep.subr.bf16.mxu0 0
    %2730 = vmatpush1.bf16.msra.mxu0 0
    %2731 = vmatprep.mubr.bf16.mxu0 0
    %2732 = vmatmul.mubr.bf16.gmra.mrb[0].mxu0 %v2691
    %v2733 = vpop.f32.mrb[0].mxu0
    %v2734 = vadd.f32 0.0, %v2733
    %v2735 = vpop.f32.mrb[0].mxu0
    %v2736 = vpop.f32.mrb[0].mxu0
    %v2737 = vadd.f32 0.0, %v2736
    %v2738 = vpop.f32.mrb[0].mxu0
    %2739 = vmatprep.mubr.bf16.mxu0 0
    %2740 = vmatmul.mubr.bf16.gmra.mrb[0].mxu0 %v2694
    %v2741 = vpop.f32.mrb[0].mxu0
    %v2742 = vadd.f32 0.0, %v2741
    %v2743 = vpop.f32.mrb[0].mxu0
    %v2744 = vpop.f32.mrb[0].mxu0
    %v2745 = vpop.f32.mrb[0].mxu0
    %2746 = vdwg.mxu0
    %2747 = vrot.lane.b32.xlu0 %v2417, 112
    %v2748 = vpop.permute.xlu0 %2747
    %2749 = vrot.lane.b32.xlu0 %v2418, 112
    %v2750 = vpop.permute.xlu0 %2749
    %2751 = vrot.lane.b32.xlu0 %v2417, 80
    %v2752 = vpop.permute.xlu0 %2751
    %2753 = vrot.lane.b32.xlu0 %v2418, 80
    %v2754 = vpop.permute.xlu0 %2753
    %v2756 = vsel %vm352, %v2748, 0
    %v2759 = vsel %vm352, %v2750, 0
    %v2762 = vsel %vm352, %v2752, 0
    %v2765 = vsel %vm352, %v2754, 0
    %2767 = vmatprep.subr.bf16.mxu0 0
    %2768 = vmatpush1.bf16.xpose.msra.mxu0 %v2762
    %2769 = vmatprep.subr.bf16.mxu0 0
    %2770 = vmatpush1.bf16.xpose.msra.mxu0 %v2765
    %2771 = vmatprep.subr.bf16.mxu0 0
    %2772 = vmatpush1.bf16.xpose.msra.mxu0 0
    %2773 = vmatprep.subr.bf16.mxu0 0
    %2774 = vmatpush1.bf16.xpose.msra.mxu0 0
    %2775 = vmatprep.subr.bf16.mxu0 0
    %2776 = vmatpush1.bf16.xpose.msra.mxu0 0
    %2777 = vmatprep.subr.bf16.mxu0 0
    %2778 = vmatpush1.bf16.xpose.msra.mxu0 0
    %2779 = vmatprep.subr.bf16.mxu0 0
    %2780 = vmatpush1.bf16.xpose.msra.mxu0 0
    %2781 = vmatprep.subr.bf16.mxu0 0
    %2782 = vmatpush1.bf16.xpose.msra.mxu0 0
    %2783 = vmatprep.subr.bf16.mxu0 0
    %2784 = vmatpush1.bf16.xpose.msra.mxu0 0
    %2785 = vmatprep.subr.bf16.mxu0 0
    %2786 = vmatpush1.bf16.xpose.msra.mxu0 0
    %2787 = vmatprep.subr.bf16.mxu0 0
    %2788 = vmatpush1.bf16.xpose.msra.mxu0 0
    %2789 = vmatprep.subr.bf16.mxu0 0
    %2790 = vmatpush1.bf16.xpose.msra.mxu0 0
    %2791 = vmatprep.subr.bf16.mxu0 0
    %2792 = vmatpush1.bf16.xpose.msra.mxu0 0
    %2793 = vmatprep.subr.bf16.mxu0 0
    %2794 = vmatpush1.bf16.xpose.msra.mxu0 0
    %2795 = vmatprep.subr.bf16.mxu0 0
    %2796 = vmatpush1.bf16.xpose.msra.mxu0 0
    %2797 = vmatprep.subr.bf16.mxu0 0
    %2798 = vmatpush1.bf16.xpose.msra.mxu0 0
    %2799 = vmatprep.mubr.bf16.mxu0 0
    %2800 = vmatmul.mubr.bf16.gmra.mrb[0].mxu0 %v2756
    %v2801 = vpop.f32.mrb[0].mxu0
    %v2802 = vadd.f32 0.0, %v2801
    %v2803 = vpop.f32.mrb[0].mxu0
    %v2804 = vpop.f32.mrb[0].mxu0
    %v2805 = vadd.f32 0.0, %v2804
    %v2806 = vpop.f32.mrb[0].mxu0
    %2807 = vmatprep.mubr.bf16.mxu0 0
    %2808 = vmatmul.mubr.bf16.gmra.mrb[0].mxu0 %v2759
    %v2809 = vpop.f32.mrb[0].mxu0
    %v2810 = vadd.f32 0.0, %v2809
    %v2811 = vpop.f32.mrb[0].mxu0
    %v2812 = vpop.f32.mrb[0].mxu0
    %v2813 = vpop.f32.mrb[0].mxu0
    %2814 = vdwg.mxu0
    %v2815 = vsel %vm413, %v2802, -inf
    %2816 = vmax.xlane.f32.xlu0 %v2815
    %v2817 = vpop.xlane.xlu0 %2816
    %v2818 = vsel %vm413, %v2805, -inf
    %2819 = vmax.xlane.f32.xlu0 %v2818
    %v2820 = vpop.xlane.xlu0 %2819
    %v2821 = vsel %vm420, %v2810, -inf
    %2822 = vmax.xlane.f32.xlu0 %v2821
    %v2823 = vpop.xlane.xlu0 %2822
    %v2824 = vsub.f32 %v2802, %v2817
    %v2825 = vsub.f32 %v2805, %v2820
    %v2826 = vsub.f32 %v2810, %v2823
    %v2827 = vmul.f32 %v2824, 1.442695
    %v2828 = vpow.pop %v2827
    %v2829 = vmul.f32 %v2825, 1.442695
    %v2830 = vpow.pop %v2829
    %v2831 = vmul.f32 %v2826, 1.442695
    %v2832 = vpow.pop %v2831
    %v2833 = vsel %vm413, %v2828, 0.0
    %2834 = vadd.xlane.f32.xlu0 %v2833
    %v2835 = vpop.xlane.xlu0 %2834
    %v2836 = vsel %vm413, %v2830, 0.0
    %2837 = vadd.xlane.f32.xlu0 %v2836
    %v2838 = vpop.xlane.xlu0 %2837
    %v2839 = vsel %vm420, %v2832, 0.0
    %2840 = vadd.xlane.f32.xlu0 %v2839
    %v2841 = vpop.xlane.xlu0 %2840
    %v2842 = vrcp.pop %v2835
    %v2843 = vrcp.pop %v2838
    %v2844 = vrcp.pop %v2841
    %v2845 = vmul.f32 %v2828, %v2842
    %v2846 = vmul.f32 %v2830, %v2843
    %v2847 = vmul.f32 %v2832, %v2844
    %v2848 = vpack.c.bf16 %v2846, %v2845
    %v2849 = vpack.c.bf16 %v2847, %v2847
    %2850 = vrot.lane.b32.xlu0 %v2417, 48
    %v2851 = vpop.permute.xlu0 %2850
    %2852 = vrot.lane.b32.xlu0 %v2418, 48
    %v2853 = vpop.permute.xlu0 %2852
    %v2856 = vsel %vm413, %v2848, 0
    %v2859 = vsel %vm413, %v2849, 0
    %v2862 = vand.u32 %v2853, %v463
    %2864 = vmatprep.subr.bf16.mxu0 0
    %2865 = vmatpush1.bf16.msra.mxu0 %v2851
    %2866 = vmatprep.subr.bf16.mxu0 0
    %2867 = vmatpush1.bf16.msra.mxu0 %v2862
    %2868 = vmatprep.subr.bf16.mxu0 0
    %2869 = vmatpush1.bf16.msra.mxu0 0
    %2870 = vmatprep.subr.bf16.mxu0 0
    %2871 = vmatpush1.bf16.msra.mxu0 0
    %2872 = vmatprep.subr.bf16.mxu0 0
    %2873 = vmatpush1.bf16.msra.mxu0 0
    %2874 = vmatprep.subr.bf16.mxu0 0
    %2875 = vmatpush1.bf16.msra.mxu0 0
    %2876 = vmatprep.subr.bf16.mxu0 0
    %2877 = vmatpush1.bf16.msra.mxu0 0
    %2878 = vmatprep.subr.bf16.mxu0 0
    %2879 = vmatpush1.bf16.msra.mxu0 0
    %2880 = vmatprep.subr.bf16.mxu0 0
    %2881 = vmatpush1.bf16.msra.mxu0 0
    %2882 = vmatprep.subr.bf16.mxu0 0
    %2883 = vmatpush1.bf16.msra.mxu0 0
    %2884 = vmatprep.subr.bf16.mxu0 0
    %2885 = vmatpush1.bf16.msra.mxu0 0
    %2886 = vmatprep.subr.bf16.mxu0 0
    %2887 = vmatpush1.bf16.msra.mxu0 0
    %2888 = vmatprep.subr.bf16.mxu0 0
    %2889 = vmatpush1.bf16.msra.mxu0 0
    %2890 = vmatprep.subr.bf16.mxu0 0
    %2891 = vmatpush1.bf16.msra.mxu0 0
    %2892 = vmatprep.subr.bf16.mxu0 0
    %2893 = vmatpush1.bf16.msra.mxu0 0
    %2894 = vmatprep.subr.bf16.mxu0 0
    %2895 = vmatpush1.bf16.msra.mxu0 0
    %2896 = vmatprep.mubr.bf16.mxu0 0
    %2897 = vmatmul.mubr.bf16.gmra.mrb[0].mxu0 %v2856
    %v2898 = vpop.f32.mrb[0].mxu0
    %v2899 = vadd.f32 0.0, %v2898
    %v2900 = vpop.f32.mrb[0].mxu0
    %v2901 = vpop.f32.mrb[0].mxu0
    %v2902 = vadd.f32 0.0, %v2901
    %v2903 = vpop.f32.mrb[0].mxu0
    %2904 = vmatprep.mubr.bf16.mxu0 0
    %2905 = vmatmul.mubr.bf16.gmra.mrb[0].mxu0 %v2859
    %v2906 = vpop.f32.mrb[0].mxu0
    %v2907 = vadd.f32 0.0, %v2906
    %v2908 = vpop.f32.mrb[0].mxu0
    %v2909 = vpop.f32.mrb[0].mxu0
    %v2910 = vpop.f32.mrb[0].mxu0
    %2911 = vdwg.mxu0
    %2912 = vrot.lane.b32.xlu0 %v2417, 104
    %v2913 = vpop.permute.xlu0 %2912
    %2914 = vrot.lane.b32.xlu0 %v2418, 104
    %v2915 = vpop.permute.xlu0 %2914
    %2916 = vrot.lane.b32.xlu0 %v2417, 72
    %v2917 = vpop.permute.xlu0 %2916
    %2918 = vrot.lane.b32.xlu0 %v2418, 72
    %v2919 = vpop.permute.xlu0 %2918
    %v2921 = vsel %vm352, %v2913, 0
    %v2924 = vsel %vm352, %v2915, 0
    %v2927 = vsel %vm352, %v2917, 0
    %v2930 = vsel %vm352, %v2919, 0
    %2932 = vmatprep.subr.bf16.mxu0 0
    %2933 = vmatpush1.bf16.xpose.msra.mxu0 %v2927
    %2934 = vmatprep.subr.bf16.mxu0 0
    %2935 = vmatpush1.bf16.xpose.msra.mxu0 %v2930
    %2936 = vmatprep.subr.bf16.mxu0 0
    %2937 = vmatpush1.bf16.xpose.msra.mxu0 0
    %2938 = vmatprep.subr.bf16.mxu0 0
    %2939 = vmatpush1.bf16.xpose.msra.mxu0 0
    %2940 = vmatprep.subr.bf16.mxu0 0
    %2941 = vmatpush1.bf16.xpose.msra.mxu0 0
    %2942 = vmatprep.subr.bf16.mxu0 0
    %2943 = vmatpush1.bf16.xpose.msra.mxu0 0
    %2944 = vmatprep.subr.bf16.mxu0 0
    %2945 = vmatpush1.bf16.xpose.msra.mxu0 0
    %2946 = vmatprep.subr.bf16.mxu0 0
    %2947 = vmatpush1.bf16.xpose.msra.mxu0 0
    %2948 = vmatprep.subr.bf16.mxu0 0
    %2949 = vmatpush1.bf16.xpose.msra.mxu0 0
    %2950 = vmatprep.subr.bf16.mxu0 0
    %2951 = vmatpush1.bf16.xpose.msra.mxu0 0
    %2952 = vmatprep.subr.bf16.mxu0 0
    %2953 = vmatpush1.bf16.xpose.msra.mxu0 0
    %2954 = vmatprep.subr.bf16.mxu0 0
    %2955 = vmatpush1.bf16.xpose.msra.mxu0 0
    %2956 = vmatprep.subr.bf16.mxu0 0
    %2957 = vmatpush1.bf16.xpose.msra.mxu0 0
    %2958 = vmatprep.subr.bf16.mxu0 0
    %2959 = vmatpush1.bf16.xpose.msra.mxu0 0
    %2960 = vmatprep.subr.bf16.mxu0 0
    %2961 = vmatpush1.bf16.xpose.msra.mxu0 0
    %2962 = vmatprep.subr.bf16.mxu0 0
    %2963 = vmatpush1.bf16.xpose.msra.mxu0 0
    %2964 = vmatprep.mubr.bf16.mxu0 0
    %2965 = vmatmul.mubr.bf16.gmra.mrb[0].mxu0 %v2921
    %v2966 = vpop.f32.mrb[0].mxu0
    %v2967 = vadd.f32 0.0, %v2966
    %v2968 = vpop.f32.mrb[0].mxu0
    %v2969 = vpop.f32.mrb[0].mxu0
    %v2970 = vadd.f32 0.0, %v2969
    %v2971 = vpop.f32.mrb[0].mxu0
    %2972 = vmatprep.mubr.bf16.mxu0 0
    %2973 = vmatmul.mubr.bf16.gmra.mrb[0].mxu0 %v2924
    %v2974 = vpop.f32.mrb[0].mxu0
    %v2975 = vadd.f32 0.0, %v2974
    %v2976 = vpop.f32.mrb[0].mxu0
    %v2977 = vpop.f32.mrb[0].mxu0
    %v2978 = vpop.f32.mrb[0].mxu0
    %2979 = vdwg.mxu0
    %v2980 = vsel %vm413, %v2967, -inf
    %2981 = vmax.xlane.f32.xlu0 %v2980
    %v2982 = vpop.xlane.xlu0 %2981
    %v2983 = vsel %vm413, %v2970, -inf
    %2984 = vmax.xlane.f32.xlu0 %v2983
    %v2985 = vpop.xlane.xlu0 %2984
    %v2986 = vsel %vm420, %v2975, -inf
    %2987 = vmax.xlane.f32.xlu0 %v2986
    %v2988 = vpop.xlane.xlu0 %2987
    %v2989 = vsub.f32 %v2967, %v2982
    %v2990 = vsub.f32 %v2970, %v2985
    %v2991 = vsub.f32 %v2975, %v2988
    %v2992 = vmul.f32 %v2989, 1.442695
    %v2993 = vpow.pop %v2992
    %v2994 = vmul.f32 %v2990, 1.442695
    %v2995 = vpow.pop %v2994
    %v2996 = vmul.f32 %v2991, 1.442695
    %v2997 = vpow.pop %v2996
    %v2998 = vsel %vm413, %v2993, 0.0
    %2999 = vadd.xlane.f32.xlu0 %v2998
    %v3000 = vpop.xlane.xlu0 %2999
    %v3001 = vsel %vm413, %v2995, 0.0
    %3002 = vadd.xlane.f32.xlu0 %v3001
    %v3003 = vpop.xlane.xlu0 %3002
    %v3004 = vsel %vm420, %v2997, 0.0
    %3005 = vadd.xlane.f32.xlu0 %v3004
    %v3006 = vpop.xlane.xlu0 %3005
    %v3007 = vrcp.pop %v3000
    %v3008 = vrcp.pop %v3003
    %v3009 = vrcp.pop %v3006
    %v3010 = vmul.f32 %v2993, %v3007
    %v3011 = vmul.f32 %v2995, %v3008
    %v3012 = vmul.f32 %v2997, %v3009
    %v3013 = vpack.c.bf16 %v3011, %v3010
    %v3014 = vpack.c.bf16 %v3012, %v3012
    %3015 = vrot.lane.b32.xlu0 %v2417, 40
    %v3016 = vpop.permute.xlu0 %3015
    %3017 = vrot.lane.b32.xlu0 %v2418, 40
    %v3018 = vpop.permute.xlu0 %3017
    %v3021 = vsel %vm413, %v3013, 0
    %v3024 = vsel %vm413, %v3014, 0
    %v3027 = vand.u32 %v3018, %v463
    %3029 = vmatprep.subr.bf16.mxu0 0
    %3030 = vmatpush1.bf16.msra.mxu0 %v3016
    %3031 = vmatprep.subr.bf16.mxu0 0
    %3032 = vmatpush1.bf16.msra.mxu0 %v3027
    %3033 = vmatprep.subr.bf16.mxu0 0
    %3034 = vmatpush1.bf16.msra.mxu0 0
    %3035 = vmatprep.subr.bf16.mxu0 0
    %3036 = vmatpush1.bf16.msra.mxu0 0
    %3037 = vmatprep.subr.bf16.mxu0 0
    %3038 = vmatpush1.bf16.msra.mxu0 0
    %3039 = vmatprep.subr.bf16.mxu0 0
    %3040 = vmatpush1.bf16.msra.mxu0 0
    %3041 = vmatprep.subr.bf16.mxu0 0
    %3042 = vmatpush1.bf16.msra.mxu0 0
    %3043 = vmatprep.subr.bf16.mxu0 0
    %3044 = vmatpush1.bf16.msra.mxu0 0
    %3045 = vmatprep.subr.bf16.mxu0 0
    %3046 = vmatpush1.bf16.msra.mxu0 0
    %3047 = vmatprep.subr.bf16.mxu0 0
    %3048 = vmatpush1.bf16.msra.mxu0 0
    %3049 = vmatprep.subr.bf16.mxu0 0
    %3050 = vmatpush1.bf16.msra.mxu0 0
    %3051 = vmatprep.subr.bf16.mxu0 0
    %3052 = vmatpush1.bf16.msra.mxu0 0
    %3053 = vmatprep.subr.bf16.mxu0 0
    %3054 = vmatpush1.bf16.msra.mxu0 0
    %3055 = vmatprep.subr.bf16.mxu0 0
    %3056 = vmatpush1.bf16.msra.mxu0 0
    %3057 = vmatprep.subr.bf16.mxu0 0
    %3058 = vmatpush1.bf16.msra.mxu0 0
    %3059 = vmatprep.subr.bf16.mxu0 0
    %3060 = vmatpush1.bf16.msra.mxu0 0
    %3061 = vmatprep.mubr.bf16.mxu0 0
    %3062 = vmatmul.mubr.bf16.gmra.mrb[0].mxu0 %v3021
    %v3063 = vpop.f32.mrb[0].mxu0
    %v3064 = vadd.f32 0.0, %v3063
    %v3065 = vpop.f32.mrb[0].mxu0
    %v3066 = vpop.f32.mrb[0].mxu0
    %v3067 = vadd.f32 0.0, %v3066
    %v3068 = vpop.f32.mrb[0].mxu0
    %3069 = vmatprep.mubr.bf16.mxu0 0
    %3070 = vmatmul.mubr.bf16.gmra.mrb[0].mxu0 %v3024
    %v3071 = vpop.f32.mrb[0].mxu0
    %v3072 = vadd.f32 0.0, %v3071
    %v3073 = vpop.f32.mrb[0].mxu0
    %v3074 = vpop.f32.mrb[0].mxu0
    %v3075 = vpop.f32.mrb[0].mxu0
    %3076 = vdwg.mxu0
    %3080 = vrot.lane.b32.xlu0 %v2734, 8
    %v3081 = vpop.permute.xlu0 %3080
    %3082 = vrot.lane.b32.xlu0 %v2737, 8
    %v3083 = vpop.permute.xlu0 %3082
    %3084 = vrot.lane.b32.xlu0 %v2742, 8
    %v3085 = vpop.permute.xlu0 %3084
    %3092 = vrot.lane.b32.xlu0 %v2899, 16
    %v3093 = vpop.permute.xlu0 %3092
    %3094 = vrot.lane.b32.xlu0 %v2902, 16
    %v3095 = vpop.permute.xlu0 %3094
    %3096 = vrot.lane.b32.xlu0 %v2907, 16
    %v3097 = vpop.permute.xlu0 %3096
    %3104 = vrot.lane.b32.xlu0 %v3064, 24
    %v3105 = vpop.permute.xlu0 %3104
    %3106 = vrot.lane.b32.xlu0 %v3067, 24
    %v3107 = vpop.permute.xlu0 %3106
    %3108 = vrot.lane.b32.xlu0 %v3072, 24
    %v3109 = vpop.permute.xlu0 %3108
    %v3113 = vsel %vm352, %v2569, %v3081
    %v3114 = vsel %vm352, %v2572, %v3083
    %v3115 = vsel %vm352, %v2577, %v3085
    %v3116 = vsel %vm1049, %v3113, %v3093
    %v3117 = vsel %vm1049, %v3114, %v3095
    %v3118 = vsel %vm1049, %v3115, %v3097
    %v3119 = vsel %vm1053, %v3116, %v3105
    %v3120 = vsel %vm1053, %v3117, %v3107
    %v3121 = vsel %vm1053, %v3118, %v3109
    %v3122 = vpack.c.bf16 %v2407, %v2404
    %v3123 = vpack.c.bf16 %v2412, %v2412
    %v3125 = vshrl.u32 %v3122, 16
    %v3127 = vshll.u32 %v3122, 16
    %v3129 = vrot.slane %v3127, 1
    %v3130 = vor.u32 %v3125, %v3129
    %v3132 = vshll.u32 %v3123, 16
    %v3134 = vrot.slane %v3132, 1
    %v3135 = vsel %vm1059, %v3130, %v3134
    %v3136 = vshrl.u32 %v3123, 16
    %3138 = vrot.lane.b32.xlu0 %v3135, 96
    %v3139 = vpop.permute.xlu0 %3138
    %3140 = vrot.lane.b32.xlu0 %v3136, 96
    %v3141 = vpop.permute.xlu0 %3140
    %v3143 = vsel %vm352, %v3135, 0
    %v3146 = vsel %vm352, %v3136, 0
    %v3149 = vsel %vm352, %v3139, 0
    %v3152 = vsel %vm352, %v3141, 0
    %3154 = vmatprep.subr.bf16.mxu0 0
    %3155 = vmatpush1.bf16.xpose.msra.mxu0 %v3149
    %3156 = vmatprep.subr.bf16.mxu0 0
    %3157 = vmatpush1.bf16.xpose.msra.mxu0 %v3152
    %3158 = vmatprep.subr.bf16.mxu0 0
    %3159 = vmatpush1.bf16.xpose.msra.mxu0 0
    %3160 = vmatprep.subr.bf16.mxu0 0
    %3161 = vmatpush1.bf16.xpose.msra.mxu0 0
    %3162 = vmatprep.subr.bf16.mxu0 0
    %3163 = vmatpush1.bf16.xpose.msra.mxu0 0
    %3164 = vmatprep.subr.bf16.mxu0 0
    %3165 = vmatpush1.bf16.xpose.msra.mxu0 0
    %3166 = vmatprep.subr.bf16.mxu0 0
    %3167 = vmatpush1.bf16.xpose.msra.mxu0 0
    %3168 = vmatprep.subr.bf16.mxu0 0
    %3169 = vmatpush1.bf16.xpose.msra.mxu0 0
    %3170 = vmatprep.subr.bf16.mxu0 0
    %3171 = vmatpush1.bf16.xpose.msra.mxu0 0
    %3172 = vmatprep.subr.bf16.mxu0 0
    %3173 = vmatpush1.bf16.xpose.msra.mxu0 0
    %3174 = vmatprep.subr.bf16.mxu0 0
    %3175 = vmatpush1.bf16.xpose.msra.mxu0 0
    %3176 = vmatprep.subr.bf16.mxu0 0
    %3177 = vmatpush1.bf16.xpose.msra.mxu0 0
    %3178 = vmatprep.subr.bf16.mxu0 0
    %3179 = vmatpush1.bf16.xpose.msra.mxu0 0
    %3180 = vmatprep.subr.bf16.mxu0 0
    %3181 = vmatpush1.bf16.xpose.msra.mxu0 0
    %3182 = vmatprep.subr.bf16.mxu0 0
    %3183 = vmatpush1.bf16.xpose.msra.mxu0 0
    %3184 = vmatprep.subr.bf16.mxu0 0
    %3185 = vmatpush1.bf16.xpose.msra.mxu0 0
    %3186 = vmatprep.mubr.bf16.mxu0 0
    %3187 = vmatmul.mubr.bf16.gmra.mrb[0].mxu0 %v3143
    %v3188 = vpop.f32.mrb[0].mxu0
    %v3189 = vadd.f32 0.0, %v3188
    %v3190 = vpop.f32.mrb[0].mxu0
    %v3191 = vpop.f32.mrb[0].mxu0
    %v3192 = vadd.f32 0.0, %v3191
    %v3193 = vpop.f32.mrb[0].mxu0
    %3194 = vmatprep.mubr.bf16.mxu0 0
    %3195 = vmatmul.mubr.bf16.gmra.mrb[0].mxu0 %v3146
    %v3196 = vpop.f32.mrb[0].mxu0
    %v3197 = vadd.f32 0.0, %v3196
    %v3198 = vpop.f32.mrb[0].mxu0
    %v3199 = vpop.f32.mrb[0].mxu0
    %v3200 = vpop.f32.mrb[0].mxu0
    %3201 = vdwg.mxu0
    %v3202 = vsel %vm413, %v3189, -inf
    %3203 = vmax.xlane.f32.xlu0 %v3202
    %v3204 = vpop.xlane.xlu0 %3203
    %v3205 = vsel %vm413, %v3192, -inf
    %3206 = vmax.xlane.f32.xlu0 %v3205
    %v3207 = vpop.xlane.xlu0 %3206
    %v3208 = vsel %vm420, %v3197, -inf
    %3209 = vmax.xlane.f32.xlu0 %v3208
    %v3210 = vpop.xlane.xlu0 %3209
    %v3211 = vsub.f32 %v3189, %v3204
    %v3212 = vsub.f32 %v3192, %v3207
    %v3213 = vsub.f32 %v3197, %v3210
    %v3214 = vmul.f32 %v3211, 1.442695
    %v3215 = vpow.pop %v3214
    %v3216 = vmul.f32 %v3212, 1.442695
    %v3217 = vpow.pop %v3216
    %v3218 = vmul.f32 %v3213, 1.442695
    %v3219 = vpow.pop %v3218
    %v3220 = vsel %vm413, %v3215, 0.0
    %3221 = vadd.xlane.f32.xlu0 %v3220
    %v3222 = vpop.xlane.xlu0 %3221
    %v3223 = vsel %vm413, %v3217, 0.0
    %3224 = vadd.xlane.f32.xlu0 %v3223
    %v3225 = vpop.xlane.xlu0 %3224
    %v3226 = vsel %vm420, %v3219, 0.0
    %3227 = vadd.xlane.f32.xlu0 %v3226
    %v3228 = vpop.xlane.xlu0 %3227
    %v3229 = vrcp.pop %v3222
    %v3230 = vrcp.pop %v3225
    %v3231 = vrcp.pop %v3228
    %v3232 = vmul.f32 %v3215, %v3229
    %v3233 = vmul.f32 %v3217, %v3230
    %v3234 = vmul.f32 %v3219, %v3231
    %v3235 = vpack.c.bf16 %v3233, %v3232
    %v3236 = vpack.c.bf16 %v3234, %v3234
    %3237 = vrot.lane.b32.xlu0 %v3135, 64
    %v3238 = vpop.permute.xlu0 %3237
    %3239 = vrot.lane.b32.xlu0 %v3136, 64
    %v3240 = vpop.permute.xlu0 %3239
    %v3243 = vsel %vm413, %v3235, 0
    %v3246 = vsel %vm413, %v3236, 0
    %v3249 = vand.u32 %v3240, %v463
    %3251 = vmatprep.subr.bf16.mxu0 0
    %3252 = vmatpush1.bf16.msra.mxu0 %v3238
    %3253 = vmatprep.subr.bf16.mxu0 0
    %3254 = vmatpush1.bf16.msra.mxu0 %v3249
    %3255 = vmatprep.subr.bf16.mxu0 0
    %3256 = vmatpush1.bf16.msra.mxu0 0
    %3257 = vmatprep.subr.bf16.mxu0 0
    %3258 = vmatpush1.bf16.msra.mxu0 0
    %3259 = vmatprep.subr.bf16.mxu0 0
    %3260 = vmatpush1.bf16.msra.mxu0 0
    %3261 = vmatprep.subr.bf16.mxu0 0
    %3262 = vmatpush1.bf16.msra.mxu0 0
    %3263 = vmatprep.subr.bf16.mxu0 0
    %3264 = vmatpush1.bf16.msra.mxu0 0
    %3265 = vmatprep.subr.bf16.mxu0 0
    %3266 = vmatpush1.bf16.msra.mxu0 0
    %3267 = vmatprep.subr.bf16.mxu0 0
    %3268 = vmatpush1.bf16.msra.mxu0 0
    %3269 = vmatprep.subr.bf16.mxu0 0
    %3270 = vmatpush1.bf16.msra.mxu0 0
    %3271 = vmatprep.subr.bf16.mxu0 0
    %3272 = vmatpush1.bf16.msra.mxu0 0
    %3273 = vmatprep.subr.bf16.mxu0 0
    %3274 = vmatpush1.bf16.msra.mxu0 0
    %3275 = vmatprep.subr.bf16.mxu0 0
    %3276 = vmatpush1.bf16.msra.mxu0 0
    %3277 = vmatprep.subr.bf16.mxu0 0
    %3278 = vmatpush1.bf16.msra.mxu0 0
    %3279 = vmatprep.subr.bf16.mxu0 0
    %3280 = vmatpush1.bf16.msra.mxu0 0
    %3281 = vmatprep.subr.bf16.mxu0 0
    %3282 = vmatpush1.bf16.msra.mxu0 0
    %3283 = vmatprep.mubr.bf16.mxu0 0
    %3284 = vmatmul.mubr.bf16.gmra.mrb[0].mxu0 %v3243
    %v3285 = vpop.f32.mrb[0].mxu0
    %v3286 = vadd.f32 0.0, %v3285
    %v3287 = vpop.f32.mrb[0].mxu0
    %v3288 = vpop.f32.mrb[0].mxu0
    %v3289 = vadd.f32 0.0, %v3288
    %v3290 = vpop.f32.mrb[0].mxu0
    %3291 = vmatprep.mubr.bf16.mxu0 0
    %3292 = vmatmul.mubr.bf16.gmra.mrb[0].mxu0 %v3246
    %v3293 = vpop.f32.mrb[0].mxu0
    %v3294 = vadd.f32 0.0, %v3293
    %v3295 = vpop.f32.mrb[0].mxu0
    %v3296 = vpop.f32.mrb[0].mxu0
    %v3297 = vpop.f32.mrb[0].mxu0
    %3298 = vdwg.mxu0
    %3299 = vrot.lane.b32.xlu0 %v3135, 120
    %v3300 = vpop.permute.xlu0 %3299
    %3301 = vrot.lane.b32.xlu0 %v3136, 120
    %v3302 = vpop.permute.xlu0 %3301
    %3303 = vrot.lane.b32.xlu0 %v3135, 88
    %v3304 = vpop.permute.xlu0 %3303
    %3305 = vrot.lane.b32.xlu0 %v3136, 88
    %v3306 = vpop.permute.xlu0 %3305
    %v3308 = vsel %vm352, %v3300, 0
    %v3311 = vsel %vm352, %v3302, 0
    %v3314 = vsel %vm352, %v3304, 0
    %v3317 = vsel %vm352, %v3306, 0
    %3319 = vmatprep.subr.bf16.mxu0 0
    %3320 = vmatpush1.bf16.xpose.msra.mxu0 %v3314
    %3321 = vmatprep.subr.bf16.mxu0 0
    %3322 = vmatpush1.bf16.xpose.msra.mxu0 %v3317
    %3323 = vmatprep.subr.bf16.mxu0 0
    %3324 = vmatpush1.bf16.xpose.msra.mxu0 0
    %3325 = vmatprep.subr.bf16.mxu0 0
    %3326 = vmatpush1.bf16.xpose.msra.mxu0 0
    %3327 = vmatprep.subr.bf16.mxu0 0
    %3328 = vmatpush1.bf16.xpose.msra.mxu0 0
    %3329 = vmatprep.subr.bf16.mxu0 0
    %3330 = vmatpush1.bf16.xpose.msra.mxu0 0
    %3331 = vmatprep.subr.bf16.mxu0 0
    %3332 = vmatpush1.bf16.xpose.msra.mxu0 0
    %3333 = vmatprep.subr.bf16.mxu0 0
    %3334 = vmatpush1.bf16.xpose.msra.mxu0 0
    %3335 = vmatprep.subr.bf16.mxu0 0
    %3336 = vmatpush1.bf16.xpose.msra.mxu0 0
    %3337 = vmatprep.subr.bf16.mxu0 0
    %3338 = vmatpush1.bf16.xpose.msra.mxu0 0
    %3339 = vmatprep.subr.bf16.mxu0 0
    %3340 = vmatpush1.bf16.xpose.msra.mxu0 0
    %3341 = vmatprep.subr.bf16.mxu0 0
    %3342 = vmatpush1.bf16.xpose.msra.mxu0 0
    %3343 = vmatprep.subr.bf16.mxu0 0
    %3344 = vmatpush1.bf16.xpose.msra.mxu0 0
    %3345 = vmatprep.subr.bf16.mxu0 0
    %3346 = vmatpush1.bf16.xpose.msra.mxu0 0
    %3347 = vmatprep.subr.bf16.mxu0 0
    %3348 = vmatpush1.bf16.xpose.msra.mxu0 0
    %3349 = vmatprep.subr.bf16.mxu0 0
    %3350 = vmatpush1.bf16.xpose.msra.mxu0 0
    %3351 = vmatprep.mubr.bf16.mxu0 0
    %3352 = vmatmul.mubr.bf16.gmra.mrb[0].mxu0 %v3308
    %v3353 = vpop.f32.mrb[0].mxu0
    %v3354 = vadd.f32 0.0, %v3353
    %v3355 = vpop.f32.mrb[0].mxu0
    %v3356 = vpop.f32.mrb[0].mxu0
    %v3357 = vadd.f32 0.0, %v3356
    %v3358 = vpop.f32.mrb[0].mxu0
    %3359 = vmatprep.mubr.bf16.mxu0 0
    %3360 = vmatmul.mubr.bf16.gmra.mrb[0].mxu0 %v3311
    %v3361 = vpop.f32.mrb[0].mxu0
    %v3362 = vadd.f32 0.0, %v3361
    %v3363 = vpop.f32.mrb[0].mxu0
    %v3364 = vpop.f32.mrb[0].mxu0
    %v3365 = vpop.f32.mrb[0].mxu0
    %3366 = vdwg.mxu0
    %v3367 = vsel %vm413, %v3354, -inf
    %3368 = vmax.xlane.f32.xlu0 %v3367
    %v3369 = vpop.xlane.xlu0 %3368
    %v3370 = vsel %vm413, %v3357, -inf
    %3371 = vmax.xlane.f32.xlu0 %v3370
    %v3372 = vpop.xlane.xlu0 %3371
    %v3373 = vsel %vm420, %v3362, -inf
    %3374 = vmax.xlane.f32.xlu0 %v3373
    %v3375 = vpop.xlane.xlu0 %3374
    %v3376 = vsub.f32 %v3354, %v3369
    %v3377 = vsub.f32 %v3357, %v3372
    %v3378 = vsub.f32 %v3362, %v3375
    %v3379 = vmul.f32 %v3376, 1.442695
    %v3380 = vpow.pop %v3379
    %v3381 = vmul.f32 %v3377, 1.442695
    %v3382 = vpow.pop %v3381
    %v3383 = vmul.f32 %v3378, 1.442695
    %v3384 = vpow.pop %v3383
    %v3385 = vsel %vm413, %v3380, 0.0
    %3386 = vadd.xlane.f32.xlu0 %v3385
    %v3387 = vpop.xlane.xlu0 %3386
    %v3388 = vsel %vm413, %v3382, 0.0
    %3389 = vadd.xlane.f32.xlu0 %v3388
    %v3390 = vpop.xlane.xlu0 %3389
    %v3391 = vsel %vm420, %v3384, 0.0
    %3392 = vadd.xlane.f32.xlu0 %v3391
    %v3393 = vpop.xlane.xlu0 %3392
    %v3394 = vrcp.pop %v3387
    %v3395 = vrcp.pop %v3390
    %v3396 = vrcp.pop %v3393
    %v3397 = vmul.f32 %v3380, %v3394
    %v3398 = vmul.f32 %v3382, %v3395
    %v3399 = vmul.f32 %v3384, %v3396
    %v3400 = vpack.c.bf16 %v3398, %v3397
    %v3401 = vpack.c.bf16 %v3399, %v3399
    %3402 = vrot.lane.b32.xlu0 %v3135, 56
    %v3403 = vpop.permute.xlu0 %3402
    %3404 = vrot.lane.b32.xlu0 %v3136, 56
    %v3405 = vpop.permute.xlu0 %3404
    %v3408 = vsel %vm413, %v3400, 0
    %v3411 = vsel %vm413, %v3401, 0
    %v3414 = vand.u32 %v3405, %v463
    %3416 = vmatprep.subr.bf16.mxu0 0
    %3417 = vmatpush1.bf16.msra.mxu0 %v3403
    %3418 = vmatprep.subr.bf16.mxu0 0
    %3419 = vmatpush1.bf16.msra.mxu0 %v3414
    %3420 = vmatprep.subr.bf16.mxu0 0
    %3421 = vmatpush1.bf16.msra.mxu0 0
    %3422 = vmatprep.subr.bf16.mxu0 0
    %3423 = vmatpush1.bf16.msra.mxu0 0
    %3424 = vmatprep.subr.bf16.mxu0 0
    %3425 = vmatpush1.bf16.msra.mxu0 0
    %3426 = vmatprep.subr.bf16.mxu0 0
    %3427 = vmatpush1.bf16.msra.mxu0 0
    %3428 = vmatprep.subr.bf16.mxu0 0
    %3429 = vmatpush1.bf16.msra.mxu0 0
    %3430 = vmatprep.subr.bf16.mxu0 0
    %3431 = vmatpush1.bf16.msra.mxu0 0
    %3432 = vmatprep.subr.bf16.mxu0 0
    %3433 = vmatpush1.bf16.msra.mxu0 0
    %3434 = vmatprep.subr.bf16.mxu0 0
    %3435 = vmatpush1.bf16.msra.mxu0 0
    %3436 = vmatprep.subr.bf16.mxu0 0
    %3437 = vmatpush1.bf16.msra.mxu0 0
    %3438 = vmatprep.subr.bf16.mxu0 0
    %3439 = vmatpush1.bf16.msra.mxu0 0
    %3440 = vmatprep.subr.bf16.mxu0 0
    %3441 = vmatpush1.bf16.msra.mxu0 0
    %3442 = vmatprep.subr.bf16.mxu0 0
    %3443 = vmatpush1.bf16.msra.mxu0 0
    %3444 = vmatprep.subr.bf16.mxu0 0
    %3445 = vmatpush1.bf16.msra.mxu0 0
    %3446 = vmatprep.subr.bf16.mxu0 0
    %3447 = vmatpush1.bf16.msra.mxu0 0
    %3448 = vmatprep.mubr.bf16.mxu0 0
    %3449 = vmatmul.mubr.bf16.gmra.mrb[0].mxu0 %v3408
    %v3450 = vpop.f32.mrb[0].mxu0
    %v3451 = vadd.f32 0.0, %v3450
    %v3452 = vpop.f32.mrb[0].mxu0
    %v3453 = vpop.f32.mrb[0].mxu0
    %v3454 = vadd.f32 0.0, %v3453
    %v3455 = vpop.f32.mrb[0].mxu0
    %3456 = vmatprep.mubr.bf16.mxu0 0
    %3457 = vmatmul.mubr.bf16.gmra.mrb[0].mxu0 %v3411
    %v3458 = vpop.f32.mrb[0].mxu0
    %v3459 = vadd.f32 0.0, %v3458
    %v3460 = vpop.f32.mrb[0].mxu0
    %v3461 = vpop.f32.mrb[0].mxu0
    %v3462 = vpop.f32.mrb[0].mxu0
    %3463 = vdwg.mxu0
    %3464 = vrot.lane.b32.xlu0 %v3135, 112
    %v3465 = vpop.permute.xlu0 %3464
    %3466 = vrot.lane.b32.xlu0 %v3136, 112
    %v3467 = vpop.permute.xlu0 %3466
    %3468 = vrot.lane.b32.xlu0 %v3135, 80
    %v3469 = vpop.permute.xlu0 %3468
    %3470 = vrot.lane.b32.xlu0 %v3136, 80
    %v3471 = vpop.permute.xlu0 %3470
    %v3473 = vsel %vm352, %v3465, 0
    %v3476 = vsel %vm352, %v3467, 0
    %v3479 = vsel %vm352, %v3469, 0
    %v3482 = vsel %vm352, %v3471, 0
    %3484 = vmatprep.subr.bf16.mxu0 0
    %3485 = vmatpush1.bf16.xpose.msra.mxu0 %v3479
    %3486 = vmatprep.subr.bf16.mxu0 0
    %3487 = vmatpush1.bf16.xpose.msra.mxu0 %v3482
    %3488 = vmatprep.subr.bf16.mxu0 0
    %3489 = vmatpush1.bf16.xpose.msra.mxu0 0
    %3490 = vmatprep.subr.bf16.mxu0 0
    %3491 = vmatpush1.bf16.xpose.msra.mxu0 0
    %3492 = vmatprep.subr.bf16.mxu0 0
    %3493 = vmatpush1.bf16.xpose.msra.mxu0 0
    %3494 = vmatprep.subr.bf16.mxu0 0
    %3495 = vmatpush1.bf16.xpose.msra.mxu0 0
    %3496 = vmatprep.subr.bf16.mxu0 0
    %3497 = vmatpush1.bf16.xpose.msra.mxu0 0
    %3498 = vmatprep.subr.bf16.mxu0 0
    %3499 = vmatpush1.bf16.xpose.msra.mxu0 0
    %3500 = vmatprep.subr.bf16.mxu0 0
    %3501 = vmatpush1.bf16.xpose.msra.mxu0 0
    %3502 = vmatprep.subr.bf16.mxu0 0
    %3503 = vmatpush1.bf16.xpose.msra.mxu0 0
    %3504 = vmatprep.subr.bf16.mxu0 0
    %3505 = vmatpush1.bf16.xpose.msra.mxu0 0
    %3506 = vmatprep.subr.bf16.mxu0 0
    %3507 = vmatpush1.bf16.xpose.msra.mxu0 0
    %3508 = vmatprep.subr.bf16.mxu0 0
    %3509 = vmatpush1.bf16.xpose.msra.mxu0 0
    %3510 = vmatprep.subr.bf16.mxu0 0
    %3511 = vmatpush1.bf16.xpose.msra.mxu0 0
    %3512 = vmatprep.subr.bf16.mxu0 0
    %3513 = vmatpush1.bf16.xpose.msra.mxu0 0
    %3514 = vmatprep.subr.bf16.mxu0 0
    %3515 = vmatpush1.bf16.xpose.msra.mxu0 0
    %3516 = vmatprep.mubr.bf16.mxu0 0
    %3517 = vmatmul.mubr.bf16.gmra.mrb[0].mxu0 %v3473
    %v3518 = vpop.f32.mrb[0].mxu0
    %v3519 = vadd.f32 0.0, %v3518
    %v3520 = vpop.f32.mrb[0].mxu0
    %v3521 = vpop.f32.mrb[0].mxu0
    %v3522 = vadd.f32 0.0, %v3521
    %v3523 = vpop.f32.mrb[0].mxu0
    %3524 = vmatprep.mubr.bf16.mxu0 0
    %3525 = vmatmul.mubr.bf16.gmra.mrb[0].mxu0 %v3476
    %v3526 = vpop.f32.mrb[0].mxu0
    %v3527 = vadd.f32 0.0, %v3526
    %v3528 = vpop.f32.mrb[0].mxu0
    %v3529 = vpop.f32.mrb[0].mxu0
    %v3530 = vpop.f32.mrb[0].mxu0
    %3531 = vdwg.mxu0
    %v3532 = vsel %vm413, %v3519, -inf
    %3533 = vmax.xlane.f32.xlu0 %v3532
    %v3534 = vpop.xlane.xlu0 %3533
    %v3535 = vsel %vm413, %v3522, -inf
    %3536 = vmax.xlane.f32.xlu0 %v3535
    %v3537 = vpop.xlane.xlu0 %3536
    %v3538 = vsel %vm420, %v3527, -inf
    %3539 = vmax.xlane.f32.xlu0 %v3538
    %v3540 = vpop.xlane.xlu0 %3539
    %v3541 = vsub.f32 %v3519, %v3534
    %v3542 = vsub.f32 %v3522, %v3537
    %v3543 = vsub.f32 %v3527, %v3540
    %v3544 = vmul.f32 %v3541, 1.442695
    %v3545 = vpow.pop %v3544
    %v3546 = vmul.f32 %v3542, 1.442695
    %v3547 = vpow.pop %v3546
    %v3548 = vmul.f32 %v3543, 1.442695
    %v3549 = vpow.pop %v3548
    %v3550 = vsel %vm413, %v3545, 0.0
    %3551 = vadd.xlane.f32.xlu0 %v3550
    %v3552 = vpop.xlane.xlu0 %3551
    %v3553 = vsel %vm413, %v3547, 0.0
    %3554 = vadd.xlane.f32.xlu0 %v3553
    %v3555 = vpop.xlane.xlu0 %3554
    %v3556 = vsel %vm420, %v3549, 0.0
    %3557 = vadd.xlane.f32.xlu0 %v3556
    %v3558 = vpop.xlane.xlu0 %3557
    %v3559 = vrcp.pop %v3552
    %v3560 = vrcp.pop %v3555
    %v3561 = vrcp.pop %v3558
    %v3562 = vmul.f32 %v3545, %v3559
    %v3563 = vmul.f32 %v3547, %v3560
    %v3564 = vmul.f32 %v3549, %v3561
    %v3565 = vpack.c.bf16 %v3563, %v3562
    %v3566 = vpack.c.bf16 %v3564, %v3564
    %3567 = vrot.lane.b32.xlu0 %v3135, 48
    %v3568 = vpop.permute.xlu0 %3567
    %3569 = vrot.lane.b32.xlu0 %v3136, 48
    %v3570 = vpop.permute.xlu0 %3569
    %v3573 = vsel %vm413, %v3565, 0
    %v3576 = vsel %vm413, %v3566, 0
    %v3579 = vand.u32 %v3570, %v463
    %3581 = vmatprep.subr.bf16.mxu0 0
    %3582 = vmatpush1.bf16.msra.mxu0 %v3568
    %3583 = vmatprep.subr.bf16.mxu0 0
    %3584 = vmatpush1.bf16.msra.mxu0 %v3579
    %3585 = vmatprep.subr.bf16.mxu0 0
    %3586 = vmatpush1.bf16.msra.mxu0 0
    %3587 = vmatprep.subr.bf16.mxu0 0
    %3588 = vmatpush1.bf16.msra.mxu0 0
    %3589 = vmatprep.subr.bf16.mxu0 0
    %3590 = vmatpush1.bf16.msra.mxu0 0
    %3591 = vmatprep.subr.bf16.mxu0 0
    %3592 = vmatpush1.bf16.msra.mxu0 0
    %3593 = vmatprep.subr.bf16.mxu0 0
    %3594 = vmatpush1.bf16.msra.mxu0 0
    %3595 = vmatprep.subr.bf16.mxu0 0
    %3596 = vmatpush1.bf16.msra.mxu0 0
    %3597 = vmatprep.subr.bf16.mxu0 0
    %3598 = vmatpush1.bf16.msra.mxu0 0
    %3599 = vmatprep.subr.bf16.mxu0 0
    %3600 = vmatpush1.bf16.msra.mxu0 0
    %3601 = vmatprep.subr.bf16.mxu0 0
    %3602 = vmatpush1.bf16.msra.mxu0 0
    %3603 = vmatprep.subr.bf16.mxu0 0
    %3604 = vmatpush1.bf16.msra.mxu0 0
    %3605 = vmatprep.subr.bf16.mxu0 0
    %3606 = vmatpush1.bf16.msra.mxu0 0
    %3607 = vmatprep.subr.bf16.mxu0 0
    %3608 = vmatpush1.bf16.msra.mxu0 0
    %3609 = vmatprep.subr.bf16.mxu0 0
    %3610 = vmatpush1.bf16.msra.mxu0 0
    %3611 = vmatprep.subr.bf16.mxu0 0
    %3612 = vmatpush1.bf16.msra.mxu0 0
    %3613 = vmatprep.mubr.bf16.mxu0 0
    %3614 = vmatmul.mubr.bf16.gmra.mrb[0].mxu0 %v3573
    %v3615 = vpop.f32.mrb[0].mxu0
    %v3616 = vadd.f32 0.0, %v3615
    %v3617 = vpop.f32.mrb[0].mxu0
    %v3618 = vpop.f32.mrb[0].mxu0
    %v3619 = vadd.f32 0.0, %v3618
    %v3620 = vpop.f32.mrb[0].mxu0
    %3621 = vmatprep.mubr.bf16.mxu0 0
    %3622 = vmatmul.mubr.bf16.gmra.mrb[0].mxu0 %v3576
    %v3623 = vpop.f32.mrb[0].mxu0
    %v3624 = vadd.f32 0.0, %v3623
    %v3625 = vpop.f32.mrb[0].mxu0
    %v3626 = vpop.f32.mrb[0].mxu0
    %v3627 = vpop.f32.mrb[0].mxu0
    %3628 = vdwg.mxu0
    %3629 = vrot.lane.b32.xlu0 %v3135, 104
    %v3630 = vpop.permute.xlu0 %3629
    %3631 = vrot.lane.b32.xlu0 %v3136, 104
    %v3632 = vpop.permute.xlu0 %3631
    %3633 = vrot.lane.b32.xlu0 %v3135, 72
    %v3634 = vpop.permute.xlu0 %3633
    %3635 = vrot.lane.b32.xlu0 %v3136, 72
    %v3636 = vpop.permute.xlu0 %3635
    %v3638 = vsel %vm352, %v3630, 0
    %v3641 = vsel %vm352, %v3632, 0
    %v3644 = vsel %vm352, %v3634, 0
    %v3647 = vsel %vm352, %v3636, 0
    %3649 = vmatprep.subr.bf16.mxu0 0
    %3650 = vmatpush1.bf16.xpose.msra.mxu0 %v3644
    %3651 = vmatprep.subr.bf16.mxu0 0
    %3652 = vmatpush1.bf16.xpose.msra.mxu0 %v3647
    %3653 = vmatprep.subr.bf16.mxu0 0
    %3654 = vmatpush1.bf16.xpose.msra.mxu0 0
    %3655 = vmatprep.subr.bf16.mxu0 0
    %3656 = vmatpush1.bf16.xpose.msra.mxu0 0
    %3657 = vmatprep.subr.bf16.mxu0 0
    %3658 = vmatpush1.bf16.xpose.msra.mxu0 0
    %3659 = vmatprep.subr.bf16.mxu0 0
    %3660 = vmatpush1.bf16.xpose.msra.mxu0 0
    %3661 = vmatprep.subr.bf16.mxu0 0
    %3662 = vmatpush1.bf16.xpose.msra.mxu0 0
    %3663 = vmatprep.subr.bf16.mxu0 0
    %3664 = vmatpush1.bf16.xpose.msra.mxu0 0
    %3665 = vmatprep.subr.bf16.mxu0 0
    %3666 = vmatpush1.bf16.xpose.msra.mxu0 0
    %3667 = vmatprep.subr.bf16.mxu0 0
    %3668 = vmatpush1.bf16.xpose.msra.mxu0 0
    %3669 = vmatprep.subr.bf16.mxu0 0
    %3670 = vmatpush1.bf16.xpose.msra.mxu0 0
    %3671 = vmatprep.subr.bf16.mxu0 0
    %3672 = vmatpush1.bf16.xpose.msra.mxu0 0
    %3673 = vmatprep.subr.bf16.mxu0 0
    %3674 = vmatpush1.bf16.xpose.msra.mxu0 0
    %3675 = vmatprep.subr.bf16.mxu0 0
    %3676 = vmatpush1.bf16.xpose.msra.mxu0 0
    %3677 = vmatprep.subr.bf16.mxu0 0
    %3678 = vmatpush1.bf16.xpose.msra.mxu0 0
    %3679 = vmatprep.subr.bf16.mxu0 0
    %3680 = vmatpush1.bf16.xpose.msra.mxu0 0
    %3681 = vmatprep.mubr.bf16.mxu0 0
    %3682 = vmatmul.mubr.bf16.gmra.mrb[0].mxu0 %v3638
    %v3683 = vpop.f32.mrb[0].mxu0
    %v3684 = vadd.f32 0.0, %v3683
    %v3685 = vpop.f32.mrb[0].mxu0
    %v3686 = vpop.f32.mrb[0].mxu0
    %v3687 = vadd.f32 0.0, %v3686
    %v3688 = vpop.f32.mrb[0].mxu0
    %3689 = vmatprep.mubr.bf16.mxu0 0
    %3690 = vmatmul.mubr.bf16.gmra.mrb[0].mxu0 %v3641
    %v3691 = vpop.f32.mrb[0].mxu0
    %v3692 = vadd.f32 0.0, %v3691
    %v3693 = vpop.f32.mrb[0].mxu0
    %v3694 = vpop.f32.mrb[0].mxu0
    %v3695 = vpop.f32.mrb[0].mxu0
    %3696 = vdwg.mxu0
    %v3697 = vsel %vm413, %v3684, -inf
    %3698 = vmax.xlane.f32.xlu0 %v3697
    %v3699 = vpop.xlane.xlu0 %3698
    %v3700 = vsel %vm413, %v3687, -inf
    %3701 = vmax.xlane.f32.xlu0 %v3700
    %v3702 = vpop.xlane.xlu0 %3701
    %v3703 = vsel %vm420, %v3692, -inf
    %3704 = vmax.xlane.f32.xlu0 %v3703
    %v3705 = vpop.xlane.xlu0 %3704
    %v3706 = vsub.f32 %v3684, %v3699
    %v3707 = vsub.f32 %v3687, %v3702
    %v3708 = vsub.f32 %v3692, %v3705
    %v3709 = vmul.f32 %v3706, 1.442695
    %v3710 = vpow.pop %v3709
    %v3711 = vmul.f32 %v3707, 1.442695
    %v3712 = vpow.pop %v3711
    %v3713 = vmul.f32 %v3708, 1.442695
    %v3714 = vpow.pop %v3713
    %v3715 = vsel %vm413, %v3710, 0.0
    %3716 = vadd.xlane.f32.xlu0 %v3715
    %v3717 = vpop.xlane.xlu0 %3716
    %v3718 = vsel %vm413, %v3712, 0.0
    %3719 = vadd.xlane.f32.xlu0 %v3718
    %v3720 = vpop.xlane.xlu0 %3719
    %v3721 = vsel %vm420, %v3714, 0.0
    %3722 = vadd.xlane.f32.xlu0 %v3721
    %v3723 = vpop.xlane.xlu0 %3722
    %v3724 = vrcp.pop %v3717
    %v3725 = vrcp.pop %v3720
    %v3726 = vrcp.pop %v3723
    %v3727 = vmul.f32 %v3710, %v3724
    %v3728 = vmul.f32 %v3712, %v3725
    %v3729 = vmul.f32 %v3714, %v3726
    %v3730 = vpack.c.bf16 %v3728, %v3727
    %v3731 = vpack.c.bf16 %v3729, %v3729
    %3732 = vrot.lane.b32.xlu0 %v3135, 40
    %v3733 = vpop.permute.xlu0 %3732
    %3734 = vrot.lane.b32.xlu0 %v3136, 40
    %v3735 = vpop.permute.xlu0 %3734
    %v3738 = vsel %vm413, %v3730, 0
    %v3741 = vsel %vm413, %v3731, 0
    %v3744 = vand.u32 %v3735, %v463
    %3746 = vmatprep.subr.bf16.mxu0 0
    %3747 = vmatpush1.bf16.msra.mxu0 %v3733
    %3748 = vmatprep.subr.bf16.mxu0 0
    %3749 = vmatpush1.bf16.msra.mxu0 %v3744
    %3750 = vmatprep.subr.bf16.mxu0 0
    %3751 = vmatpush1.bf16.msra.mxu0 0
    %3752 = vmatprep.subr.bf16.mxu0 0
    %3753 = vmatpush1.bf16.msra.mxu0 0
    %3754 = vmatprep.subr.bf16.mxu0 0
    %3755 = vmatpush1.bf16.msra.mxu0 0
    %3756 = vmatprep.subr.bf16.mxu0 0
    %3757 = vmatpush1.bf16.msra.mxu0 0
    %3758 = vmatprep.subr.bf16.mxu0 0
    %3759 = vmatpush1.bf16.msra.mxu0 0
    %3760 = vmatprep.subr.bf16.mxu0 0
    %3761 = vmatpush1.bf16.msra.mxu0 0
    %3762 = vmatprep.subr.bf16.mxu0 0
    %3763 = vmatpush1.bf16.msra.mxu0 0
    %3764 = vmatprep.subr.bf16.mxu0 0
    %3765 = vmatpush1.bf16.msra.mxu0 0
    %3766 = vmatprep.subr.bf16.mxu0 0
    %3767 = vmatpush1.bf16.msra.mxu0 0
    %3768 = vmatprep.subr.bf16.mxu0 0
    %3769 = vmatpush1.bf16.msra.mxu0 0
    %3770 = vmatprep.subr.bf16.mxu0 0
    %3771 = vmatpush1.bf16.msra.mxu0 0
    %3772 = vmatprep.subr.bf16.mxu0 0
    %3773 = vmatpush1.bf16.msra.mxu0 0
    %3774 = vmatprep.subr.bf16.mxu0 0
    %3775 = vmatpush1.bf16.msra.mxu0 0
    %3776 = vmatprep.subr.bf16.mxu0 0
    %3777 = vmatpush1.bf16.msra.mxu0 0
    %3778 = vmatprep.mubr.bf16.mxu0 0
    %3779 = vmatmul.mubr.bf16.gmra.mrb[0].mxu0 %v3738
    %v3780 = vpop.f32.mrb[0].mxu0
    %v3781 = vadd.f32 0.0, %v3780
    %v3782 = vpop.f32.mrb[0].mxu0
    %v3783 = vpop.f32.mrb[0].mxu0
    %v3784 = vadd.f32 0.0, %v3783
    %v3785 = vpop.f32.mrb[0].mxu0
    %3786 = vmatprep.mubr.bf16.mxu0 0
    %3787 = vmatmul.mubr.bf16.gmra.mrb[0].mxu0 %v3741
    %v3788 = vpop.f32.mrb[0].mxu0
    %v3789 = vadd.f32 0.0, %v3788
    %v3790 = vpop.f32.mrb[0].mxu0
    %v3791 = vpop.f32.mrb[0].mxu0
    %v3792 = vpop.f32.mrb[0].mxu0
    %3793 = vdwg.mxu0
    %3797 = vrot.lane.b32.xlu0 %v3451, 8
    %v3798 = vpop.permute.xlu0 %3797
    %3799 = vrot.lane.b32.xlu0 %v3454, 8
    %v3800 = vpop.permute.xlu0 %3799
    %3801 = vrot.lane.b32.xlu0 %v3459, 8
    %v3802 = vpop.permute.xlu0 %3801
    %3809 = vrot.lane.b32.xlu0 %v3616, 16
    %v3810 = vpop.permute.xlu0 %3809
    %3811 = vrot.lane.b32.xlu0 %v3619, 16
    %v3812 = vpop.permute.xlu0 %3811
    %3813 = vrot.lane.b32.xlu0 %v3624, 16
    %v3814 = vpop.permute.xlu0 %3813
    %3821 = vrot.lane.b32.xlu0 %v3781, 24
    %v3822 = vpop.permute.xlu0 %3821
    %3823 = vrot.lane.b32.xlu0 %v3784, 24
    %v3824 = vpop.permute.xlu0 %3823
    %3825 = vrot.lane.b32.xlu0 %v3789, 24
    %v3826 = vpop.permute.xlu0 %3825
    %v3830 = vsel %vm352, %v3286, %v3798
    %v3831 = vsel %vm352, %v3289, %v3800
    %v3832 = vsel %vm352, %v3294, %v3802
    %v3833 = vsel %vm1049, %v3830, %v3810
    %v3834 = vsel %vm1049, %v3831, %v3812
    %v3835 = vsel %vm1049, %v3832, %v3814
    %v3836 = vsel %vm1053, %v3833, %v3822
    %v3837 = vsel %vm1053, %v3834, %v3824
    %v3838 = vsel %vm1053, %v3835, %v3826
    %v3842 = vrot.slane %v3836, 7
    %v3843 = vrot.slane %v3837, 7
    %v3844 = vsel %vm461, %v3842, %v3843
    %v3845 = vrot.slane %v3838, 7
    %v3846 = vsel %vm461, %v3843, %v3845
    %v3850 = vsel %vm461, %v3121, %v3842
    %s3851 = scalar_lea.vmem %s8, 1
    %v3852 = vld [vmem:[%s3851] sm:$0x1]
    %v3854 = vlaneseq
    %v3855 = vshrl.u32 %v3854, 7
    %v3856 = vsub.s32 0, %v3855
    %v3857 = vrot.slane %v3852, %v3856
    %v3859 = vadd.f32 %v2228, %v3857
    %v3860 = vadd.f32 %v2229, %v3857
    %v3861 = vadd.f32 %v2230, %v3857
    %v3862 = vadd.f32 %v2231, %v3857
    %v3863 = vadd.f32 %v2232, %v3857
    %v3864 = vpack.c.bf16 %v3120, %v3119
    %v3865 = vpack.c.bf16 %v3844, %v3850
    %v3866 = vpack.c.bf16 %v3846, %v3846
    %s3867 = scalar_lea.vmem %s7, 16
    %v3868 = vld [vmem:[%s3867] sm:$0xf]
    %v3869 = vld [vmem:[%s3867 + $0x4] sm:$0xf]
    %v3870 = vld [vmem:[%s3867 + $0x8] sm:$0xf]
    %v3871 = vld [vmem:[%s3867 + $0xc] sm:$0xf]
    %v3876 = vunpack.c.l.b16 %v3868
    %v3877 = vunpack.c.l.b16 %v3869
    %v3878 = vunpack.c.l.b16 %v3870
    %v3879 = vunpack.c.l.b16 %v3871
    %v3880 = vpack.c.b16 %v3877, %v3876
    %v3881 = vpack.c.b16 %v3879, %v3878
    %v3885 = vsel %vm163, %v3864, 0
    %v3888 = vsel %vm163, %v3865, 0
    %v3891 = vsel %vm163, %v3866, 0
    %3893 = vmatprep.subr.bf16.mxu0 0
    %3894 = vmatpush1.bf16.msra.mxu0 %v3880
    %3895 = vmatprep.subr.bf16.mxu0 0
    %3896 = vmatpush1.bf16.msra.mxu0 %v3881
    %3897 = vmatprep.subr.bf16.mxu0 0
    %3898 = vmatpush1.bf16.msra.mxu0 0
    %3899 = vmatprep.subr.bf16.mxu0 0
    %3900 = vmatpush1.bf16.msra.mxu0 0
    %3901 = vmatprep.subr.bf16.mxu0 0
    %3902 = vmatpush1.bf16.msra.mxu0 0
    %3903 = vmatprep.subr.bf16.mxu0 0
    %3904 = vmatpush1.bf16.msra.mxu0 0
    %3905 = vmatprep.subr.bf16.mxu0 0
    %3906 = vmatpush1.bf16.msra.mxu0 0
    %3907 = vmatprep.subr.bf16.mxu0 0
    %3908 = vmatpush1.bf16.msra.mxu0 0
    %3909 = vmatprep.subr.bf16.mxu0 0
    %3910 = vmatpush1.bf16.msra.mxu0 0
    %3911 = vmatprep.subr.bf16.mxu0 0
    %3912 = vmatpush1.bf16.msra.mxu0 0
    %3913 = vmatprep.subr.bf16.mxu0 0
    %3914 = vmatpush1.bf16.msra.mxu0 0
    %3915 = vmatprep.subr.bf16.mxu0 0
    %3916 = vmatpush1.bf16.msra.mxu0 0
    %3917 = vmatprep.subr.bf16.mxu0 0
    %3918 = vmatpush1.bf16.msra.mxu0 0
    %3919 = vmatprep.subr.bf16.mxu0 0
    %3920 = vmatpush1.bf16.msra.mxu0 0
    %3921 = vmatprep.subr.bf16.mxu0 0
    %3922 = vmatpush1.bf16.msra.mxu0 0
    %3923 = vmatprep.subr.bf16.mxu0 0
    %3924 = vmatpush1.bf16.msra.mxu0 0
    %3925 = vmatprep.mubr.bf16.mxu0 0
    %3926 = vmatmul.mubr.bf16.gmra.mrb[0].mxu0 %v3885
    %v3927 = vpop.f32.mrb[0].mxu0
    %v3928 = vadd.f32 0.0, %v3927
    %v3929 = vpop.f32.mrb[0].mxu0
    %v3930 = vpop.f32.mrb[0].mxu0
    %v3931 = vadd.f32 0.0, %v3930
    %v3932 = vpop.f32.mrb[0].mxu0
    %3933 = vmatprep.mubr.bf16.mxu0 0
    %3934 = vmatmul.mubr.bf16.gmra.mrb[0].mxu0 %v3888
    %v3935 = vpop.f32.mrb[0].mxu0
    %v3936 = vadd.f32 0.0, %v3935
    %v3937 = vpop.f32.mrb[0].mxu0
    %v3938 = vpop.f32.mrb[0].mxu0
    %v3939 = vadd.f32 0.0, %v3938
    %v3940 = vpop.f32.mrb[0].mxu0
    %3941 = vmatprep.mubr.bf16.mxu0 0
    %3942 = vmatmul.mubr.bf16.gmra.mrb[0].mxu0 %v3891
    %v3943 = vpop.f32.mrb[0].mxu0
    %v3944 = vadd.f32 0.0, %v3943
    %v3945 = vpop.f32.mrb[0].mxu0
    %v3946 = vpop.f32.mrb[0].mxu0
    %v3947 = vpop.f32.mrb[0].mxu0
    %3948 = vdwg.mxu0
    %v3949 = vadd.f32 %v3859, %v3928
    %v3950 = vadd.f32 %v3860, %v3931
    %v3951 = vadd.f32 %v3861, %v3936
    %v3952 = vadd.f32 %v3862, %v3939
    %v3953 = vadd.f32 %v3863, %v3944
    %s3954 = scalar_lea.vmem %s9, 1
    %v3955 = vld [vmem:[%s3954] sm:$0x1]
    %s3956 = scalar_lea.vmem %s10, 1
    %v3957 = vld [vmem:[%s3956] sm:$0x1]
    %v3958 = vsel %vm163, %v3949, 0.0
    %3959 = vadd.xlane.f32.xlu0 %v3958
    %v3960 = vpop.xlane.xlu0 %3959
    %v3961 = vsel %vm163, %v3950, 0.0
    %3962 = vadd.xlane.f32.xlu0 %v3961
    %v3963 = vpop.xlane.xlu0 %3962
    %v3964 = vsel %vm163, %v3951, 0.0
    %3965 = vadd.xlane.f32.xlu0 %v3964
    %v3966 = vpop.xlane.xlu0 %3965
    %v3967 = vsel %vm163, %v3952, 0.0
    %3968 = vadd.xlane.f32.xlu0 %v3967
    %v3969 = vpop.xlane.xlu0 %3968
    %v3970 = vsel %vm176, %v3953, 0.0
    %3971 = vadd.xlane.f32.xlu0 %v3970
    %v3972 = vpop.xlane.xlu0 %3971
    %v3973 = vmul.f32 %v3960, %v180
    %v3974 = vmul.f32 %v3963, %v180
    %v3975 = vmul.f32 %v3966, %v180
    %v3976 = vmul.f32 %v3969, %v180
    %v3977 = vmul.f32 %v3972, %v180
    %v3978 = vsub.f32 %v3949, %v3973
    %v3979 = vsub.f32 %v3950, %v3974
    %v3980 = vsub.f32 %v3951, %v3975
    %v3981 = vsub.f32 %v3952, %v3976
    %v3982 = vsub.f32 %v3953, %v3977
    %v3983 = vmul.f32 %v3978, %v3978
    %v3984 = vmul.f32 %v3979, %v3979
    %v3985 = vmul.f32 %v3980, %v3980
    %v3986 = vmul.f32 %v3981, %v3981
    %v3987 = vmul.f32 %v3982, %v3982
    %v3988 = vsel %vm163, %v3983, 0.0
    %3989 = vadd.xlane.f32.xlu0 %v3988
    %v3990 = vpop.xlane.xlu0 %3989
    %v3991 = vsel %vm163, %v3984, 0.0
    %3992 = vadd.xlane.f32.xlu0 %v3991
    %v3993 = vpop.xlane.xlu0 %3992
    %v3994 = vsel %vm163, %v3985, 0.0
    %3995 = vadd.xlane.f32.xlu0 %v3994
    %v3996 = vpop.xlane.xlu0 %3995
    %v3997 = vsel %vm163, %v3986, 0.0
    %3998 = vadd.xlane.f32.xlu0 %v3997
    %v3999 = vpop.xlane.xlu0 %3998
    %v4000 = vsel %vm176, %v3987, 0.0
    %4001 = vadd.xlane.f32.xlu0 %v4000
    %v4002 = vpop.xlane.xlu0 %4001
    %v4003 = vmul.f32 %v3990, %v180
    %v4004 = vmul.f32 %v3993, %v180
    %v4005 = vmul.f32 %v3996, %v180
    %v4006 = vmul.f32 %v3999, %v180
    %v4007 = vmul.f32 %v4002, %v180
    %v4008 = vadd.f32 %v4003, 1e-06
    %v4009 = vadd.f32 %v4004, 1e-06
    %v4010 = vadd.f32 %v4005, 1e-06
    %v4011 = vadd.f32 %v4006, 1e-06
    %v4012 = vadd.f32 %v4007, 1e-06
    %v4013 = vrsqrt.pop %v4008
    %v4014 = vrsqrt.pop %v4009
    %v4015 = vrsqrt.pop %v4010
    %v4016 = vrsqrt.pop %v4011
    %v4017 = vrsqrt.pop %v4012
    %v4018 = vmul.f32 %v3978, %v4013
    %v4019 = vmul.f32 %v3979, %v4014
    %v4020 = vmul.f32 %v3980, %v4015
    %v4021 = vmul.f32 %v3981, %v4016
    %v4022 = vmul.f32 %v3982, %v4017
    %v4024 = vlaneseq
    %v4025 = vshrl.u32 %v4024, 7
    %v4026 = vsub.s32 0, %v4025
    %v4027 = vrot.slane %v3955, %v4026
    %v4029 = vmul.f32 %v4018, %v4027
    %v4030 = vmul.f32 %v4019, %v4027
    %v4031 = vmul.f32 %v4020, %v4027
    %v4032 = vmul.f32 %v4021, %v4027
    %v4033 = vmul.f32 %v4022, %v4027
    %v4035 = vlaneseq
    %v4036 = vshrl.u32 %v4035, 7
    %v4037 = vsub.s32 0, %v4036
    %v4038 = vrot.slane %v3957, %v4037
    %v4040 = vadd.f32 %v4029, %v4038
    %v4041 = vadd.f32 %v4030, %v4038
    %v4042 = vadd.f32 %v4031, %v4038
    %v4043 = vadd.f32 %v4032, %v4038
    %v4044 = vadd.f32 %v4033, %v4038
    %v4045 = vpack.c.bf16 %v4041, %v4040
    %v4046 = vpack.c.bf16 %v4043, %v4042
    %v4047 = vpack.c.bf16 %v4044, %v4044
    %s4048 = scalar_lea.vmem %s11, 16
    %v4049 = vld [vmem:[%s4048] sm:$0xf]
    %v4050 = vld [vmem:[%s4048 + $0x4] sm:$0xf]
    %v4051 = vld [vmem:[%s4048 + $0x8] sm:$0xf]
    %v4052 = vld [vmem:[%s4048 + $0xc] sm:$0xf]
    %s4053 = scalar_lea.vmem %s12, 1
    %v4054 = vld [vmem:[%s4053] sm:$0x1]
    %v4056 = vlaneseq
    %v4057 = vshrl.u32 %v4056, 7
    %v4058 = vsub.s32 0, %v4057
    %v4059 = vrot.slane %v4054, %v4058
    %v4065 = vunpack.c.l.b16 %v4049
    %v4066 = vunpack.c.l.b16 %v4050
    %v4067 = vunpack.c.l.b16 %v4051
    %v4068 = vunpack.c.l.b16 %v4052
    %v4069 = vpack.c.b16 %v4066, %v4065
    %v4070 = vpack.c.b16 %v4068, %v4067
    %v4074 = vsel %vm163, %v4045, 0
    %v4077 = vsel %vm163, %v4046, 0
    %v4080 = vsel %vm163, %v4047, 0
    %4082 = vmatprep.subr.bf16.mxu0 0
    %4083 = vmatpush1.bf16.msra.mxu0 %v4069
    %4084 = vmatprep.subr.bf16.mxu0 0
    %4085 = vmatpush1.bf16.msra.mxu0 %v4070
    %4086 = vmatprep.subr.bf16.mxu0 0
    %4087 = vmatpush1.bf16.msra.mxu0 0
    %4088 = vmatprep.subr.bf16.mxu0 0
    %4089 = vmatpush1.bf16.msra.mxu0 0
    %4090 = vmatprep.subr.bf16.mxu0 0
    %4091 = vmatpush1.bf16.msra.mxu0 0
    %4092 = vmatprep.subr.bf16.mxu0 0
    %4093 = vmatpush1.bf16.msra.mxu0 0
    %4094 = vmatprep.subr.bf16.mxu0 0
    %4095 = vmatpush1.bf16.msra.mxu0 0
    %4096 = vmatprep.subr.bf16.mxu0 0
    %4097 = vmatpush1.bf16.msra.mxu0 0
    %4098 = vmatprep.subr.bf16.mxu0 0
    %4099 = vmatpush1.bf16.msra.mxu0 0
    %4100 = vmatprep.subr.bf16.mxu0 0
    %4101 = vmatpush1.bf16.msra.mxu0 0
    %4102 = vmatprep.subr.bf16.mxu0 0
    %4103 = vmatpush1.bf16.msra.mxu0 0
    %4104 = vmatprep.subr.bf16.mxu0 0
    %4105 = vmatpush1.bf16.msra.mxu0 0
    %4106 = vmatprep.subr.bf16.mxu0 0
    %4107 = vmatpush1.bf16.msra.mxu0 0
    %4108 = vmatprep.subr.bf16.mxu0 0
    %4109 = vmatpush1.bf16.msra.mxu0 0
    %4110 = vmatprep.subr.bf16.mxu0 0
    %4111 = vmatpush1.bf16.msra.mxu0 0
    %4112 = vmatprep.subr.bf16.mxu0 0
    %4113 = vmatpush1.bf16.msra.mxu0 0
    %4114 = vmatprep.mubr.bf16.mxu0 0
    %4115 = vmatmul.mubr.bf16.gmra.mrb[0].mxu0 %v4074
    %v4116 = vpop.f32.mrb[0].mxu0
    %v4117 = vadd.f32 %v4059, %v4116
    %v4118 = vpop.f32.mrb[0].mxu0
    %v4119 = vpop.f32.mrb[0].mxu0
    %v4120 = vadd.f32 %v4059, %v4119
    %v4121 = vpop.f32.mrb[0].mxu0
    %4122 = vmatprep.mubr.bf16.mxu0 0
    %4123 = vmatmul.mubr.bf16.gmra.mrb[0].mxu0 %v4077
    %v4124 = vpop.f32.mrb[0].mxu0
    %v4125 = vadd.f32 %v4059, %v4124
    %v4126 = vpop.f32.mrb[0].mxu0
    %v4127 = vpop.f32.mrb[0].mxu0
    %v4128 = vadd.f32 %v4059, %v4127
    %v4129 = vpop.f32.mrb[0].mxu0
    %4130 = vmatprep.mubr.bf16.mxu0 0
    %4131 = vmatmul.mubr.bf16.gmra.mrb[0].mxu0 %v4080
    %v4132 = vpop.f32.mrb[0].mxu0
    %v4133 = vadd.f32 %v4059, %v4132
    %v4134 = vpop.f32.mrb[0].mxu0
    %v4135 = vpop.f32.mrb[0].mxu0
    %v4136 = vpop.f32.mrb[0].mxu0
    %4137 = vdwg.mxu0
    %v4138 = vmul.f32 %v4117, 0.5
    %v4139 = vmul.f32 %v4120, 0.5
    %v4140 = vmul.f32 %v4125, 0.5
    %v4141 = vmul.f32 %v4128, 0.5
    %v4142 = vmul.f32 %v4133, 0.5
    %v4143 = vmul.f32 %v4117, 0.70710677
    %v4144 = vmul.f32 %v4120, 0.70710677
    %v4145 = vmul.f32 %v4125, 0.70710677
    %v4146 = vmul.f32 %v4128, 0.70710677
    %v4147 = vmul.f32 %v4133, 0.70710677
    %v4148 = verf.f32.pop %v4143
    %v4149 = verf.f32.pop %v4144
    %v4150 = verf.f32.pop %v4145
    %v4151 = verf.f32.pop %v4146
    %v4152 = verf.f32.pop %v4147
    %v4153 = vadd.f32 %v4148, 1.0
    %v4154 = vadd.f32 %v4149, 1.0
    %v4155 = vadd.f32 %v4150, 1.0
    %v4156 = vadd.f32 %v4151, 1.0
    %v4157 = vadd.f32 %v4152, 1.0
    %v4158 = vmul.f32 %v4138, %v4153
    %v4159 = vmul.f32 %v4139, %v4154
    %v4160 = vmul.f32 %v4140, %v4155
    %v4161 = vmul.f32 %v4141, %v4156
    %v4162 = vmul.f32 %v4142, %v4157
    %v4163 = vpack.c.bf16 %v4159, %v4158
    %v4164 = vpack.c.bf16 %v4161, %v4160
    %v4165 = vpack.c.bf16 %v4162, %v4162
    %s4166 = scalar_lea.vmem %s13, 64
    %v4167 = vld [vmem:[%s4166] sm:$0xf]
    %v4168 = vld [vmem:[%s4166 + $0x4] sm:$0xf]
    %v4169 = vld [vmem:[%s4166 + $0x8] sm:$0xf]
    %v4170 = vld [vmem:[%s4166 + $0xc] sm:$0xf]
    %v4171 = vld [vmem:[%s4166 + $0x10] sm:$0xf]
    %v4172 = vld [vmem:[%s4166 + $0x14] sm:$0xf]
    %v4173 = vld [vmem:[%s4166 + $0x18] sm:$0xf]
    %v4174 = vld [vmem:[%s4166 + $0x1c] sm:$0xf]
    %v4175 = vld [vmem:[%s4166 + $0x20] sm:$0xf]
    %v4176 = vld [vmem:[%s4166 + $0x24] sm:$0xf]
    %v4177 = vld [vmem:[%s4166 + $0x28] sm:$0xf]
    %v4178 = vld [vmem:[%s4166 + $0x2c] sm:$0xf]
    %v4179 = vld [vmem:[%s4166 + $0x30] sm:$0xf]
    %v4180 = vld [vmem:[%s4166 + $0x34] sm:$0xf]
    %v4181 = vld [vmem:[%s4166 + $0x38] sm:$0xf]
    %v4182 = vld [vmem:[%s4166 + $0x3c] sm:$0xf]
    %v4199 = vunpack.c.l.b16 %v4167
    %v4200 = vunpack.c.l.b16 %v4168
    %v4201 = vunpack.c.l.b16 %v4169
    %v4202 = vunpack.c.l.b16 %v4170
    %v4203 = vunpack.c.l.b16 %v4171
    %v4204 = vunpack.c.l.b16 %v4172
    %v4205 = vunpack.c.l.b16 %v4173
    %v4206 = vunpack.c.l.b16 %v4174
    %v4207 = vunpack.c.l.b16 %v4175
    %v4208 = vunpack.c.l.b16 %v4176
    %v4209 = vunpack.c.l.b16 %v4177
    %v4210 = vunpack.c.l.b16 %v4178
    %v4211 = vunpack.c.l.b16 %v4179
    %v4212 = vunpack.c.l.b16 %v4180
    %v4213 = vunpack.c.l.b16 %v4181
    %v4214 = vunpack.c.l.b16 %v4182
    %v4215 = vpack.c.b16 %v4200, %v4199
    %v4216 = vpack.c.b16 %v4202, %v4201
    %v4217 = vpack.c.b16 %v4204, %v4203
    %v4218 = vpack.c.b16 %v4206, %v4205
    %v4219 = vpack.c.b16 %v4208, %v4207
    %v4220 = vpack.c.b16 %v4210, %v4209
    %v4221 = vpack.c.b16 %v4212, %v4211
    %v4222 = vpack.c.b16 %v4214, %v4213
    %4231 = vmatprep.subr.bf16.mxu0 0
    %4232 = vmatpush1.bf16.msra.mxu0 %v4215
    %4233 = vmatprep.subr.bf16.mxu0 0
    %4234 = vmatpush1.bf16.msra.mxu0 %v4216
    %4235 = vmatprep.subr.bf16.mxu0 0
    %4236 = vmatpush1.bf16.msra.mxu0 %v4217
    %4237 = vmatprep.subr.bf16.mxu0 0
    %4238 = vmatpush1.bf16.msra.mxu0 %v4218
    %4239 = vmatprep.subr.bf16.mxu0 0
    %4240 = vmatpush1.bf16.msra.mxu0 %v4219
    %4241 = vmatprep.subr.bf16.mxu0 0
    %4242 = vmatpush1.bf16.msra.mxu0 %v4220
    %4243 = vmatprep.subr.bf16.mxu0 0
    %4244 = vmatpush1.bf16.msra.mxu0 %v4221
    %4245 = vmatprep.subr.bf16.mxu0 0
    %4246 = vmatpush1.bf16.msra.mxu0 %v4222
    %4247 = vmatprep.subr.bf16.mxu0 0
    %4248 = vmatpush1.bf16.msra.mxu0 0
    %4249 = vmatprep.subr.bf16.mxu0 0
    %4250 = vmatpush1.bf16.msra.mxu0 0
    %4251 = vmatprep.subr.bf16.mxu0 0
    %4252 = vmatpush1.bf16.msra.mxu0 0
    %4253 = vmatprep.subr.bf16.mxu0 0
    %4254 = vmatpush1.bf16.msra.mxu0 0
    %4255 = vmatprep.subr.bf16.mxu0 0
    %4256 = vmatpush1.bf16.msra.mxu0 0
    %4257 = vmatprep.subr.bf16.mxu0 0
    %4258 = vmatpush1.bf16.msra.mxu0 0
    %4259 = vmatprep.subr.bf16.mxu0 0
    %4260 = vmatpush1.bf16.msra.mxu0 0
    %4261 = vmatprep.subr.bf16.mxu0 0
    %4262 = vmatpush1.bf16.msra.mxu0 0
    %4263 = vmatprep.mubr.bf16.mxu0 0
    %4264 = vmatmul.mubr.bf16.gmra.mrb[0].mxu0 %v4163
    %v4265 = vpop.f32.mrb[0].mxu0
    %v4266 = vadd.f32 0.0, %v4265
    %v4267 = vpop.f32.mrb[0].mxu0
    %v4268 = vpop.f32.mrb[0].mxu0
    %v4269 = vadd.f32 0.0, %v4268
    %v4270 = vpop.f32.mrb[0].mxu0
    %4271 = vmatprep.mubr.bf16.mxu0 0
    %4272 = vmatmul.mubr.bf16.gmra.mrb[0].mxu0 %v4164
    %v4273 = vpop.f32.mrb[0].mxu0
    %v4274 = vadd.f32 0.0, %v4273
    %v4275 = vpop.f32.mrb[0].mxu0
    %v4276 = vpop.f32.mrb[0].mxu0
    %v4277 = vadd.f32 0.0, %v4276
    %v4278 = vpop.f32.mrb[0].mxu0
    %4279 = vmatprep.mubr.bf16.mxu0 0
    %4280 = vmatmul.mubr.bf16.gmra.mrb[0].mxu0 %v4165
    %v4281 = vpop.f32.mrb[0].mxu0
    %v4282 = vadd.f32 0.0, %v4281
    %v4283 = vpop.f32.mrb[0].mxu0
    %v4284 = vpop.f32.mrb[0].mxu0
    %v4285 = vpop.f32.mrb[0].mxu0
    %4286 = vdwg.mxu0
    %v4287 = vadd.f32 %v3949, %v4266
    %v4288 = vadd.f32 %v3950, %v4269
    %v4289 = vadd.f32 %v3951, %v4274
    %v4290 = vadd.f32 %v3952, %v4277
    %v4291 = vadd.f32 %v3953, %v4282
    %s4292 = scalar_lea.vmem %s14, 1
    %v4293 = vld [vmem:[%s4292] sm:$0x1]
    %v4295 = vlaneseq
    %v4296 = vshrl.u32 %v4295, 7
    %v4297 = vsub.s32 0, %v4296
    %v4298 = vrot.slane %v4293, %v4297
    %v4300 = vadd.f32 %v4287, %v4298
    %v4301 = vadd.f32 %v4288, %v4298
    %v4302 = vadd.f32 %v4289, %v4298
    %v4303 = vadd.f32 %v4290, %v4298
    %v4304 = vadd.f32 %v4291, %v4298
    %v4305 = vld [vmem:[%s15] sm:$0x1]
    %v4306 = vld [vmem:[%s16] sm:$0x1]
    %v4307 = vsel %vm163, %v4300, 0.0
    %4308 = vadd.xlane.f32.xlu0 %v4307
    %v4309 = vpop.xlane.xlu0 %4308
    %v4310 = vsel %vm163, %v4301, 0.0
    %4311 = vadd.xlane.f32.xlu0 %v4310
    %v4312 = vpop.xlane.xlu0 %4311
    %v4313 = vsel %vm163, %v4302, 0.0
    %4314 = vadd.xlane.f32.xlu0 %v4313
    %v4315 = vpop.xlane.xlu0 %4314
    %v4316 = vsel %vm163, %v4303, 0.0
    %4317 = vadd.xlane.f32.xlu0 %v4316
    %v4318 = vpop.xlane.xlu0 %4317
    %v4319 = vsel %vm176, %v4304, 0.0
    %4320 = vadd.xlane.f32.xlu0 %v4319
    %v4321 = vpop.xlane.xlu0 %4320
    %v4322 = vmul.f32 %v4309, %v180
    %v4323 = vmul.f32 %v4312, %v180
    %v4324 = vmul.f32 %v4315, %v180
    %v4325 = vmul.f32 %v4318, %v180
    %v4326 = vmul.f32 %v4321, %v180
    %v4327 = vsub.f32 %v4300, %v4322
    %v4328 = vsub.f32 %v4301, %v4323
    %v4329 = vsub.f32 %v4302, %v4324
    %v4330 = vsub.f32 %v4303, %v4325
    %v4331 = vsub.f32 %v4304, %v4326
    %v4332 = vmul.f32 %v4327, %v4327
    %v4333 = vmul.f32 %v4328, %v4328
    %v4334 = vmul.f32 %v4329, %v4329
    %v4335 = vmul.f32 %v4330, %v4330
    %v4336 = vmul.f32 %v4331, %v4331
    %v4337 = vsel %vm163, %v4332, 0.0
    %4338 = vadd.xlane.f32.xlu0 %v4337
    %v4339 = vpop.xlane.xlu0 %4338
    %v4340 = vsel %vm163, %v4333, 0.0
    %4341 = vadd.xlane.f32.xlu0 %v4340
    %v4342 = vpop.xlane.xlu0 %4341
    %v4343 = vsel %vm163, %v4334, 0.0
    %4344 = vadd.xlane.f32.xlu0 %v4343
    %v4345 = vpop.xlane.xlu0 %4344
    %v4346 = vsel %vm163, %v4335, 0.0
    %4347 = vadd.xlane.f32.xlu0 %v4346
    %v4348 = vpop.xlane.xlu0 %4347
    %v4349 = vsel %vm176, %v4336, 0.0
    %4350 = vadd.xlane.f32.xlu0 %v4349
    %v4351 = vpop.xlane.xlu0 %4350
    %v4352 = vmul.f32 %v4339, %v180
    %v4353 = vmul.f32 %v4342, %v180
    %v4354 = vmul.f32 %v4345, %v180
    %v4355 = vmul.f32 %v4348, %v180
    %v4356 = vmul.f32 %v4351, %v180
    %v4357 = vadd.f32 %v4352, 1e-06
    %v4358 = vadd.f32 %v4353, 1e-06
    %v4359 = vadd.f32 %v4354, 1e-06
    %v4360 = vadd.f32 %v4355, 1e-06
    %v4361 = vadd.f32 %v4356, 1e-06
    %v4362 = vrsqrt.pop %v4357
    %v4363 = vrsqrt.pop %v4358
    %v4364 = vrsqrt.pop %v4359
    %v4365 = vrsqrt.pop %v4360
    %v4366 = vrsqrt.pop %v4361
    %v4367 = vmul.f32 %v4327, %v4362
    %v4368 = vmul.f32 %v4328, %v4363
    %v4369 = vmul.f32 %v4329, %v4364
    %v4370 = vmul.f32 %v4330, %v4365
    %v4371 = vmul.f32 %v4331, %v4366
    %v4373 = vlaneseq
    %v4374 = vshrl.u32 %v4373, 7
    %v4375 = vsub.s32 0, %v4374
    %v4376 = vrot.slane %v4305, %v4375
    %v4378 = vmul.f32 %v4367, %v4376
    %v4379 = vmul.f32 %v4368, %v4376
    %v4380 = vmul.f32 %v4369, %v4376
    %v4381 = vmul.f32 %v4370, %v4376
    %v4382 = vmul.f32 %v4371, %v4376
    %v4384 = vlaneseq
    %v4385 = vshrl.u32 %v4384, 7
    %v4386 = vsub.s32 0, %v4385
    %v4387 = vrot.slane %v4306, %v4386
    %v4389 = vadd.f32 %v4378, %v4387
    %v4390 = vadd.f32 %v4379, %v4387
    %v4391 = vadd.f32 %v4380, %v4387
    %v4392 = vadd.f32 %v4381, %v4387
    %v4393 = vadd.f32 %v4382, %v4387
    %vm4394 = vcmask 261121
    %4395 = vst.msk [vmem:[#allocation2 - $0x1] sm:$0xfe] %vm4394, %v4389
    %4396 = vst.msk [vmem:[#allocation2 + $0x7] sm:$0xff] %vm163, %v4390
    %vm4397 = vcmask 253952
    %4398 = vst.msk [vmem:[#allocation2 + $0xf] sm:$0x1] %vm4397, %v4391
    %s4399 = scalar_lea.vmem [#allocation2], 16
    %vm4400 = vcmask 261122
    %4401 = vst.msk [vmem:[%s4399 - $0x2] sm:$0xfc] %vm4400, %v4391
    %4402 = vst.msk [vmem:[%s4399 + $0x6] sm:$0xff] %vm163, %v4392
    %4403 = vst.msk [vmem:[%s4399 + $0xe] sm:$0x3] %vm176, %v4393
    // Predicated region
    $region70: #{vit_embedder_forward.1} parent=1 // pred_check
      _
    $region71: #{vit_embedder_forward.1} parent=1 // pred_check_branch
      %4405 = sbr.rel (0) target = $region73
    $region72: #{vit_embedder_forward.1} parent=1 // pred_region
      %s4407 = ssub.s32 512, 512
      %4408 = vsyncadd [#allocation3], %s4407
      %s4409 = sshll.u32 [#allocation2], 4
      %s4410 = int_to_ptr.vmem [resolvable:$true] %s4409
      %4415 = dma.vmem_to_hbm [thread:$0]  %s4410, 512, %s17, [#allocation3], 128, 128, 8
    $region73: #{vit_embedder_forward.1} parent=1 // pred_fallthru
      _
    // Predicated region
    $region74: #{vit_embedder_forward.1} parent=1 // pred_check
      _
    $region75: #{vit_embedder_forward.1} parent=1 // pred_check_branch
      %4417 = sbr.rel (0) target = $region77
    $region76: #{vit_embedder_forward.1} parent=1 // pred_region
      %4418 = dma.done [#allocation3], 512
    $region77: #{vit_embedder_forward.1} parent=1 // pred_fallthru
      _
    %4419 = vsyncpa [#allocation3], 1

</llo_original>
